<compile_context>
chip_gen: v6e
topology: v6e:2x2x1
jax: 0.10.0
libtpu: 0.0.40
codegen_flags: <defaults>
</compile_context>

<pallas_src>
import functools
import math

import jax
import jax.numpy as jnp
from jax import lax
from jax.experimental import pallas as pl
from jax.experimental.pallas import tpu as pltpu


P_MAX = 3   # largest conv padding (7x7 -> pad 3); defines the shared spatial layout
FPAD = 8    # flow channels zero-padded 2 -> 8 so its im2col blocks are sublane-aligned


def _encoder_kernel(corr_ref, flow_ref, mask_ref,
                    wc1_ref, bc1_ref, wc2_ref, bc2_ref,
                    wf1_ref, bf1_ref, wf2_ref, bf2_ref,
                    wo_ref, bo_ref,
                    out_ref, *, H, W):
    P = P_MAX
    Wq = W + 2 * P
    NT = H * Wq                     # computed lane window (contains masked junk cols)
    LQ = out_ref.shape[-1]          # (H + 2P + 1) * Wq  (extra zero row = tap slack)
    BASE = P * (Wq + 1)             # flat offset of image pixel (0, 0)
    f32, bf16 = jnp.float32, jnp.bfloat16

    mask = mask_ref[...]            # (1, NT) f32: 1.0 on valid columns, 0.0 on junk

    def im2col(x_buf, K):
        """Stack the K*K tap windows of a padded-layout buffer (Cin, LQ) along the
        channel axis -> (K*K*Cin, NT).  Tap-major / channel-minor order, matching
        the weight slab column order produced by _prep_weight."""
        p = K // 2
        if K == 1:
            return x_buf[:, BASE:BASE + NT]
        taps = []
        for ky in range(K):
            for kx in range(K):
                s = BASE + (ky - p) * Wq + (kx - p)   # static lane offset of this tap
                taps.append(x_buf[:, s:s + NT])
        return jnp.concatenate(taps, axis=0)

    def mm_bias_relu(w_ref, rhs, b_ref, apply_mask=True):
        """One MXU matmul [Cout, K*K*Cin] @ [K*K*Cin, NT] + bias + ReLU (f32)."""
        acc = jnp.dot(w_ref[...], rhs, preferred_element_type=f32)
        acc = jnp.maximum(acc + b_ref[...], 0.0)
        return acc * mask if apply_mask else acc

    def to_buf(y, dtype):
        """Embed a (Cout, NT) window into the universal zero-padded layout (Cout, LQ)."""
        cout = y.shape[0]
        left = jnp.zeros((cout, BASE), dtype)
        right = jnp.zeros((cout, LQ - BASE - NT), dtype)
        return jnp.concatenate([left, y.astype(dtype), right], axis=1)

    corr_q = corr_ref[0]            # (Cc, LQ) bf16, padded layout
    flow_f32 = flow_ref[0]          # (8, LQ) f32, padded layout (channels 2..7 zero)

    # convc1 1x1 + relu: direct matmul on the interior window
    cor = to_buf(mm_bias_relu(wc1_ref, im2col(corr_q, 1), bc1_ref), bf16)
    # convc2 3x3 + relu: one 9-tap stacked matmul (contraction = 9*Cin)
    cor = to_buf(mm_bias_relu(wc2_ref, im2col(cor, 3), bc2_ref), bf16)
    # convf1 7x7 + relu: aligned f32 49-tap stack (8-row blocks), one cast to bf16
    flo = to_buf(mm_bias_relu(wf1_ref, im2col(flow_f32, 7).astype(bf16), bf1_ref), bf16)
    # convf2 3x3 + relu
    flo = to_buf(mm_bias_relu(wf2_ref, im2col(flo, 3), bf2_ref), bf16)

    # final 3x3 conv over cat([cor, flo]): aligned sublane concat + one matmul
    cat = jnp.concatenate([cor, flo], axis=0)            # (dim*2, LQ) bf16
    fin = mm_bias_relu(wo_ref, im2col(cat, 3), bo_ref, apply_mask=False)  # (dim-2, NT)

    n_out = fin.shape[0]                                  # dim - 2
    # Lane-dense window stores: the wrapper only reads flat positions [BASE, BASE+NT).
    out_ref[0, 0:n_out, BASE:BASE + NT] = fin
    out_ref[0, n_out:n_out + 2, BASE:BASE + NT] = flow_f32[0:2, BASE:BASE + NT]


def _prep_weight(w):
    """torch layout (Cout, Cin, Kh, Kw) -> lane-dense 2D slab (Cout, Kh*Kw*Cin), bf16.
    Column order: (ky*Kw + kx)*Cin + ci  (matches the kernel's im2col stacking)."""
    cout, cin, kh, kw = w.shape
    return (jnp.transpose(w, (0, 2, 3, 1))
            .reshape(cout, kh * kw * cin)
            .astype(jnp.bfloat16))


def _prep_bias(b):
    return b.reshape(-1, 1).astype(jnp.float32)


def _pad_flatten(x):
    """(B, C, H, W) -> (B, C, LQ): zero-pad spatially by P_MAX (+1 slack row), flatten."""
    B, C, H, W = x.shape
    xp = jnp.pad(x, ((0, 0), (0, 0), (P_MAX, P_MAX + 1), (P_MAX, P_MAX)))
    return xp.reshape(B, C, (H + 2 * P_MAX + 1) * (W + 2 * P_MAX))


@jax.jit
def basic_motion_encoder(params, flow, corr):
    """Matches BasicMotionEncoder.forward.  flow: (B,2,H,W) f32, corr: (B,Cc,H,W) f32.
    Returns (B, dim, H, W) f32."""
    B, _, H, W = flow.shape
    Cc = corr.shape[1]
    n_out = params["conv"][0].shape[0]          # dim - 2
    dim = n_out + 2

    Hq, Wq = H + 2 * P_MAX, W + 2 * P_MAX
    LQ = (Hq + 1) * Wq
    NT = H * Wq

    corr_q = _pad_flatten(corr).astype(jnp.bfloat16)
    # flow: pad channels 2 -> FPAD with zeros (aligned im2col), stays f32 (exact passthrough)
    flow_q = _pad_flatten(jnp.pad(flow, ((0, 0), (0, FPAD - 2), (0, 0), (0, 0))))

    # valid-column mask over the computed window: lane t is valid iff (t mod Wq) < W
    cols = jnp.arange(NT, dtype=jnp.int32) % Wq
    mask = (cols < W).astype(jnp.float32).reshape(1, NT)

    wc1, bc1 = _prep_weight(params["convc1"][0]), _prep_bias(params["convc1"][1])
    wc2, bc2 = _prep_weight(params["convc2"][0]), _prep_bias(params["convc2"][1])
    wf1_raw = jnp.pad(params["convf1"][0], ((0, 0), (0, FPAD - 2), (0, 0), (0, 0)))
    wf1, bf1 = _prep_weight(wf1_raw), _prep_bias(params["convf1"][1])
    wf2, bf2 = _prep_weight(params["convf2"][0]), _prep_bias(params["convf2"][1])
    wo, bo = _prep_weight(params["conv"][0]), _prep_bias(params["conv"][1])

    def full(a):
        return pl.BlockSpec(a.shape, lambda b: (0,) * a.ndim)

    kernel = functools.partial(_encoder_kernel, H=H, W=W)

    out_q = pl.pallas_call(
        kernel,
        out_shape=jax.ShapeDtypeStruct((B, dim, LQ), jnp.float32),
        grid_spec=pltpu.PrefetchScalarGridSpec(
            num_scalar_prefetch=0,
            grid=(B,),
            in_specs=[
                pl.BlockSpec((1, Cc, LQ), lambda b: (b, 0, 0)),
                pl.BlockSpec((1, FPAD, LQ), lambda b: (b, 0, 0)),
                full(mask),
                full(wc1), full(bc1), full(wc2), full(bc2),
                full(wf1), full(bf1), full(wf2), full(bf2),
                full(wo), full(bo),
            ],
            out_specs=pl.BlockSpec((1, dim, LQ), lambda b: (b, 0, 0)),
        ),
        compiler_params=pltpu.CompilerParams(
            dimension_semantics=("parallel",),
            vmem_limit_bytes=48 * 1024 * 1024),
    )(corr_q, flow_q, mask,
      wc1, bc1, wc2, bc2, wf1, bf1, wf2, bf2, wo, bo)

    # Drop the shared spatial padding: (B, dim, LQ) -> (B, dim, H, W).
    out = out_q.reshape(B, dim, Hq + 1, Wq)[:, :, P_MAX:P_MAX + H, P_MAX:P_MAX + W]
    return out


def init_params(key, corr_channel, dim):
    """Deterministic synthetic parameters, PyTorch layout (Cout, Cin, K, K) + (Cout,)."""
    ks = jax.random.split(key, 10)

    def conv_p(kw, kb, cout, cin, K):
        scale = 1.0 / math.sqrt(K * K * cin)
        w = jax.random.uniform(kw, (cout, cin, K, K), jnp.float32, -scale, scale)
        b = jax.random.uniform(kb, (cout,), jnp.float32, -scale, scale)
        return w, b

    return {
        "convc1": conv_p(ks[0], ks[1], dim * 2, corr_channel, 1),
        "convc2": conv_p(ks[2], ks[3], dim + dim // 2, dim * 2, 3),
        "convf1": conv_p(ks[4], ks[5], dim, 2, 7),
        "convf2": conv_p(ks[6], ks[7], dim // 2, dim, 3),
        "conv":   conv_p(ks[8], ks[9], dim - 2, dim * 2, 3),
    }


# ---- pure-JAX reference (bf16 operands, f32 accumulation -- same quantization points) ----
def _conv2d_relu_ref(x, w, b):
    K = w.shape[-1]
    pad = K // 2
    y = lax.conv_general_dilated(
        x.astype(jnp.bfloat16), w.astype(jnp.bfloat16),
        (1, 1), ((pad, pad), (pad, pad)),
        dimension_numbers=("NCHW", "OIHW", "NCHW"),
        preferred_element_type=jnp.float32)
    return jnp.maximum(y + b[None, :, None, None], 0.0)


def basic_motion_encoder_ref(params, flow, corr):
    cor = _conv2d_relu_ref(corr, *params["convc1"])
    cor = _conv2d_relu_ref(cor, *params["convc2"])
    flo = _conv2d_relu_ref(flow, *params["convf1"])
    flo = _conv2d_relu_ref(flo, *params["convf2"])
    out = _conv2d_relu_ref(jnp.concatenate([cor, flo], axis=1), *params["conv"])
    return jnp.concatenate([out, flow], axis=1)


if __name__ == "__main__":
    # Small shapes consistent with the module: dim=32, corr_channel=8
    B, H, W = 2, 16, 16
    dim = 32
    corr_channel = 8

    key = jax.random.PRNGKey(0)
    k_flow, k_corr, k_params = jax.random.split(key, 3)
    flow = jax.random.normal(k_flow, (B, 2, H, W), jnp.float32)
    corr = jax.random.normal(k_corr, (B, corr_channel, H, W), jnp.float32)
    params = init_params(k_params, corr_channel, dim)

    out = jax.block_until_ready(basic_motion_encoder(params, flow, corr))
    assert out.shape == (B, dim, H, W), out.shape

    ref = jax.block_until_ready(basic_motion_encoder_ref(params, flow, corr))
    max_err = float(jnp.max(jnp.abs(out - ref)))
    assert jnp.allclose(out, ref, rtol=2e-3, atol=2e-3), max_err
    # raw-flow passthrough channels must be bit-exact
    assert bool(jnp.array_equal(out[:, dim - 2:], flow))

    print("KERNEL_OK")
</pallas_src>

<mosaic_0001>
module attributes {stable_mosaic.version = 11 : i64} {
  func.func @_encoder_kernel(%arg0: i32, %arg1: memref<1x8x506xbf16, #tpu.memory_space<vmem>>, %arg2: memref<1x8x506xf32, #tpu.memory_space<vmem>>, %arg3: memref<1x352xf32, #tpu.memory_space<vmem>>, %arg4: memref<64x8xbf16, #tpu.memory_space<vmem>>, %arg5: memref<64x1xf32, #tpu.memory_space<vmem>>, %arg6: memref<48x576xbf16, #tpu.memory_space<vmem>>, %arg7: memref<48x1xf32, #tpu.memory_space<vmem>>, %arg8: memref<32x392xbf16, #tpu.memory_space<vmem>>, %arg9: memref<32x1xf32, #tpu.memory_space<vmem>>, %arg10: memref<16x288xbf16, #tpu.memory_space<vmem>>, %arg11: memref<16x1xf32, #tpu.memory_space<vmem>>, %arg12: memref<30x576xbf16, #tpu.memory_space<vmem>>, %arg13: memref<30x1xf32, #tpu.memory_space<vmem>>, %arg14: memref<1x32x506xf32, #tpu.memory_space<vmem>>) attributes {dimension_semantics = [#tpu.dimension_semantics<parallel>], iteration_bounds = array<i64: 2>, scalar_prefetch = 0 : i64, scratch_operands = 0 : i64, tpu.core_type = #tpu.core_type<tc>, window_params = [{transform_indices = @transform_0, window_bounds = array<i64: 1, 8, 506>}, {transform_indices = @transform_1, window_bounds = array<i64: 1, 8, 506>}, {pipeline_mode = #tpu.pipeline_mode<synchronous>, transform_indices = @transform_2, window_bounds = array<i64: 1, 352>}, {pipeline_mode = #tpu.pipeline_mode<synchronous>, transform_indices = @transform_3, window_bounds = array<i64: 64, 8>}, {pipeline_mode = #tpu.pipeline_mode<synchronous>, transform_indices = @transform_4, window_bounds = array<i64: 64, 1>}, {pipeline_mode = #tpu.pipeline_mode<synchronous>, transform_indices = @transform_5, window_bounds = array<i64: 48, 576>}, {pipeline_mode = #tpu.pipeline_mode<synchronous>, transform_indices = @transform_6, window_bounds = array<i64: 48, 1>}, {pipeline_mode = #tpu.pipeline_mode<synchronous>, transform_indices = @transform_7, window_bounds = array<i64: 32, 392>}, {pipeline_mode = #tpu.pipeline_mode<synchronous>, transform_indices = @transform_8, window_bounds = array<i64: 32, 1>}, {pipeline_mode = #tpu.pipeline_mode<synchronous>, transform_indices = @transform_9, window_bounds = array<i64: 16, 288>}, {pipeline_mode = #tpu.pipeline_mode<synchronous>, transform_indices = @transform_10, window_bounds = array<i64: 16, 1>}, {pipeline_mode = #tpu.pipeline_mode<synchronous>, transform_indices = @transform_11, window_bounds = array<i64: 30, 576>}, {pipeline_mode = #tpu.pipeline_mode<synchronous>, transform_indices = @transform_12, window_bounds = array<i64: 30, 1>}, {transform_indices = @transform_13, window_bounds = array<i64: 1, 32, 506>}]} {
    %c0 = arith.constant 0 : index
    %c0_0 = arith.constant 0 : index
    %0 = vector.load %arg3[%c0, %c0_0] : memref<1x352xf32, #tpu.memory_space<vmem>>, vector<1x352xf32>
    %c0_1 = arith.constant 0 : index
    %c0_2 = arith.constant 0 : index
    %c0_3 = arith.constant 0 : index
    %1 = vector.load %arg1[%c0_1, %c0_2, %c0_3] : memref<1x8x506xbf16, #tpu.memory_space<vmem>>, vector<1x8x506xbf16>
    %2 = vector.shape_cast %1 : vector<1x8x506xbf16> to vector<8x506xbf16>
    %c0_4 = arith.constant 0 : index
    %c0_5 = arith.constant 0 : index
    %c0_6 = arith.constant 0 : index
    %3 = vector.load %arg2[%c0_4, %c0_5, %c0_6] : memref<1x8x506xf32, #tpu.memory_space<vmem>>, vector<1x8x506xf32>
    %4 = vector.shape_cast %3 : vector<1x8x506xf32> to vector<8x506xf32>
    %5 = vector.extract_strided_slice %2 {offsets = [0, 69], sizes = [8, 352], strides = [1, 1]} : vector<8x506xbf16> to vector<8x352xbf16>
    %c0_7 = arith.constant 0 : index
    %c0_8 = arith.constant 0 : index
    %6 = vector.load %arg4[%c0_7, %c0_8] : memref<64x8xbf16, #tpu.memory_space<vmem>>, vector<64x8xbf16>
    %cst = arith.constant dense<0.000000e+00> : vector<64x352xf32>
    %7 = tpu.matmul %6, %5, %cst {dimension_numbers = #tpu.dot_dimension_numbers<[1], [0], [0], [1], [0, 0, 1, 1], [], []>} : vector<64x8xbf16>, vector<8x352xbf16>, vector<64x352xf32> -> vector<64x352xf32>
    %c0_9 = arith.constant 0 : index
    %c0_10 = arith.constant 0 : index
    %8 = vector.load %arg5[%c0_9, %c0_10] : memref<64x1xf32, #tpu.memory_space<vmem>>, vector<64x1xf32>
    %9 = vector.broadcast %8 : vector<64x1xf32> to vector<64x352xf32>
    %10 = arith.addf %7, %9 : vector<64x352xf32>
    %cst_11 = arith.constant 0.000000e+00 : f32
    %11 = vector.broadcast %cst_11 : f32 to vector<64x352xf32>
    %12 = arith.maximumf %10, %11 : vector<64x352xf32>
    %13 = vector.broadcast %0 : vector<1x352xf32> to vector<64x352xf32>
    %14 = arith.mulf %12, %13 : vector<64x352xf32>
    %cst_12 = arith.constant 0.000000e+00 : bf16
    %15 = vector.broadcast %cst_12 : bf16 to vector<64x69xbf16>
    %cst_13 = arith.constant 0.000000e+00 : bf16
    %16 = vector.broadcast %cst_13 : bf16 to vector<64x85xbf16>
    %17 = arith.truncf %14 : vector<64x352xf32> to vector<64x352xbf16>
    %18 = tpu.concatenate %15, %17, %16 in 1 : vector<64x69xbf16>, vector<64x352xbf16>, vector<64x85xbf16> -> vector<64x506xbf16>
    %19 = vector.extract_strided_slice %18 {offsets = [0, 46], sizes = [64, 352], strides = [1, 1]} : vector<64x506xbf16> to vector<64x352xbf16>
    %20 = vector.extract_strided_slice %18 {offsets = [0, 47], sizes = [64, 352], strides = [1, 1]} : vector<64x506xbf16> to vector<64x352xbf16>
    %21 = vector.extract_strided_slice %18 {offsets = [0, 48], sizes = [64, 352], strides = [1, 1]} : vector<64x506xbf16> to vector<64x352xbf16>
    %22 = vector.extract_strided_slice %18 {offsets = [0, 68], sizes = [64, 352], strides = [1, 1]} : vector<64x506xbf16> to vector<64x352xbf16>
    %23 = vector.extract_strided_slice %18 {offsets = [0, 69], sizes = [64, 352], strides = [1, 1]} : vector<64x506xbf16> to vector<64x352xbf16>
    %24 = vector.extract_strided_slice %18 {offsets = [0, 70], sizes = [64, 352], strides = [1, 1]} : vector<64x506xbf16> to vector<64x352xbf16>
    %25 = vector.extract_strided_slice %18 {offsets = [0, 90], sizes = [64, 352], strides = [1, 1]} : vector<64x506xbf16> to vector<64x352xbf16>
    %26 = vector.extract_strided_slice %18 {offsets = [0, 91], sizes = [64, 352], strides = [1, 1]} : vector<64x506xbf16> to vector<64x352xbf16>
    %27 = vector.extract_strided_slice %18 {offsets = [0, 92], sizes = [64, 352], strides = [1, 1]} : vector<64x506xbf16> to vector<64x352xbf16>
    %28 = tpu.concatenate %19, %20, %21, %22, %23, %24, %25, %26, %27 in 0 : vector<64x352xbf16>, vector<64x352xbf16>, vector<64x352xbf16>, vector<64x352xbf16>, vector<64x352xbf16>, vector<64x352xbf16>, vector<64x352xbf16>, vector<64x352xbf16>, vector<64x352xbf16> -> vector<576x352xbf16>
    %c0_14 = arith.constant 0 : index
    %c0_15 = arith.constant 0 : index
    %29 = vector.load %arg6[%c0_14, %c0_15] : memref<48x576xbf16, #tpu.memory_space<vmem>>, vector<48x576xbf16>
    %cst_16 = arith.constant dense<0.000000e+00> : vector<48x352xf32>
    %30 = tpu.matmul %29, %28, %cst_16 {dimension_numbers = #tpu.dot_dimension_numbers<[1], [0], [0], [1], [0, 0, 1, 1], [], []>} : vector<48x576xbf16>, vector<576x352xbf16>, vector<48x352xf32> -> vector<48x352xf32>
    %c0_17 = arith.constant 0 : index
    %c0_18 = arith.constant 0 : index
    %31 = vector.load %arg7[%c0_17, %c0_18] : memref<48x1xf32, #tpu.memory_space<vmem>>, vector<48x1xf32>
    %32 = vector.broadcast %31 : vector<48x1xf32> to vector<48x352xf32>
    %33 = arith.addf %30, %32 : vector<48x352xf32>
    %cst_19 = arith.constant 0.000000e+00 : f32
    %34 = vector.broadcast %cst_19 : f32 to vector<48x352xf32>
    %35 = arith.maximumf %33, %34 : vector<48x352xf32>
    %36 = vector.broadcast %0 : vector<1x352xf32> to vector<48x352xf32>
    %37 = arith.mulf %35, %36 : vector<48x352xf32>
    %cst_20 = arith.constant 0.000000e+00 : bf16
    %38 = vector.broadcast %cst_20 : bf16 to vector<48x69xbf16>
    %cst_21 = arith.constant 0.000000e+00 : bf16
    %39 = vector.broadcast %cst_21 : bf16 to vector<48x85xbf16>
    %40 = arith.truncf %37 : vector<48x352xf32> to vector<48x352xbf16>
    %41 = tpu.concatenate %38, %40, %39 in 1 : vector<48x69xbf16>, vector<48x352xbf16>, vector<48x85xbf16> -> vector<48x506xbf16>
    %42 = vector.extract_strided_slice %4 {offsets = [0, 0], sizes = [8, 352], strides = [1, 1]} : vector<8x506xf32> to vector<8x352xf32>
    %43 = vector.extract_strided_slice %4 {offsets = [0, 1], sizes = [8, 352], strides = [1, 1]} : vector<8x506xf32> to vector<8x352xf32>
    %44 = vector.extract_strided_slice %4 {offsets = [0, 2], sizes = [8, 352], strides = [1, 1]} : vector<8x506xf32> to vector<8x352xf32>
    %45 = vector.extract_strided_slice %4 {offsets = [0, 3], sizes = [8, 352], strides = [1, 1]} : vector<8x506xf32> to vector<8x352xf32>
    %46 = vector.extract_strided_slice %4 {offsets = [0, 4], sizes = [8, 352], strides = [1, 1]} : vector<8x506xf32> to vector<8x352xf32>
    %47 = vector.extract_strided_slice %4 {offsets = [0, 5], sizes = [8, 352], strides = [1, 1]} : vector<8x506xf32> to vector<8x352xf32>
    %48 = vector.extract_strided_slice %4 {offsets = [0, 6], sizes = [8, 352], strides = [1, 1]} : vector<8x506xf32> to vector<8x352xf32>
    %49 = vector.extract_strided_slice %4 {offsets = [0, 22], sizes = [8, 352], strides = [1, 1]} : vector<8x506xf32> to vector<8x352xf32>
    %50 = vector.extract_strided_slice %4 {offsets = [0, 23], sizes = [8, 352], strides = [1, 1]} : vector<8x506xf32> to vector<8x352xf32>
    %51 = vector.extract_strided_slice %4 {offsets = [0, 24], sizes = [8, 352], strides = [1, 1]} : vector<8x506xf32> to vector<8x352xf32>
    %52 = vector.extract_strided_slice %4 {offsets = [0, 25], sizes = [8, 352], strides = [1, 1]} : vector<8x506xf32> to vector<8x352xf32>
    %53 = vector.extract_strided_slice %4 {offsets = [0, 26], sizes = [8, 352], strides = [1, 1]} : vector<8x506xf32> to vector<8x352xf32>
    %54 = vector.extract_strided_slice %4 {offsets = [0, 27], sizes = [8, 352], strides = [1, 1]} : vector<8x506xf32> to vector<8x352xf32>
    %55 = vector.extract_strided_slice %4 {offsets = [0, 28], sizes = [8, 352], strides = [1, 1]} : vector<8x506xf32> to vector<8x352xf32>
    %56 = vector.extract_strided_slice %4 {offsets = [0, 44], sizes = [8, 352], strides = [1, 1]} : vector<8x506xf32> to vector<8x352xf32>
    %57 = vector.extract_strided_slice %4 {offsets = [0, 45], sizes = [8, 352], strides = [1, 1]} : vector<8x506xf32> to vector<8x352xf32>
    %58 = vector.extract_strided_slice %4 {offsets = [0, 46], sizes = [8, 352], strides = [1, 1]} : vector<8x506xf32> to vector<8x352xf32>
    %59 = vector.extract_strided_slice %4 {offsets = [0, 47], sizes = [8, 352], strides = [1, 1]} : vector<8x506xf32> to vector<8x352xf32>
    %60 = vector.extract_strided_slice %4 {offsets = [0, 48], sizes = [8, 352], strides = [1, 1]} : vector<8x506xf32> to vector<8x352xf32>
    %61 = vector.extract_strided_slice %4 {offsets = [0, 49], sizes = [8, 352], strides = [1, 1]} : vector<8x506xf32> to vector<8x352xf32>
    %62 = vector.extract_strided_slice %4 {offsets = [0, 50], sizes = [8, 352], strides = [1, 1]} : vector<8x506xf32> to vector<8x352xf32>
    %63 = vector.extract_strided_slice %4 {offsets = [0, 66], sizes = [8, 352], strides = [1, 1]} : vector<8x506xf32> to vector<8x352xf32>
    %64 = vector.extract_strided_slice %4 {offsets = [0, 67], sizes = [8, 352], strides = [1, 1]} : vector<8x506xf32> to vector<8x352xf32>
    %65 = vector.extract_strided_slice %4 {offsets = [0, 68], sizes = [8, 352], strides = [1, 1]} : vector<8x506xf32> to vector<8x352xf32>
    %66 = vector.extract_strided_slice %4 {offsets = [0, 69], sizes = [8, 352], strides = [1, 1]} : vector<8x506xf32> to vector<8x352xf32>
    %67 = vector.extract_strided_slice %4 {offsets = [0, 70], sizes = [8, 352], strides = [1, 1]} : vector<8x506xf32> to vector<8x352xf32>
    %68 = vector.extract_strided_slice %4 {offsets = [0, 71], sizes = [8, 352], strides = [1, 1]} : vector<8x506xf32> to vector<8x352xf32>
    %69 = vector.extract_strided_slice %4 {offsets = [0, 72], sizes = [8, 352], strides = [1, 1]} : vector<8x506xf32> to vector<8x352xf32>
    %70 = vector.extract_strided_slice %4 {offsets = [0, 88], sizes = [8, 352], strides = [1, 1]} : vector<8x506xf32> to vector<8x352xf32>
    %71 = vector.extract_strided_slice %4 {offsets = [0, 89], sizes = [8, 352], strides = [1, 1]} : vector<8x506xf32> to vector<8x352xf32>
    %72 = vector.extract_strided_slice %4 {offsets = [0, 90], sizes = [8, 352], strides = [1, 1]} : vector<8x506xf32> to vector<8x352xf32>
    %73 = vector.extract_strided_slice %4 {offsets = [0, 91], sizes = [8, 352], strides = [1, 1]} : vector<8x506xf32> to vector<8x352xf32>
    %74 = vector.extract_strided_slice %4 {offsets = [0, 92], sizes = [8, 352], strides = [1, 1]} : vector<8x506xf32> to vector<8x352xf32>
    %75 = vector.extract_strided_slice %4 {offsets = [0, 93], sizes = [8, 352], strides = [1, 1]} : vector<8x506xf32> to vector<8x352xf32>
    %76 = vector.extract_strided_slice %4 {offsets = [0, 94], sizes = [8, 352], strides = [1, 1]} : vector<8x506xf32> to vector<8x352xf32>
    %77 = vector.extract_strided_slice %4 {offsets = [0, 110], sizes = [8, 352], strides = [1, 1]} : vector<8x506xf32> to vector<8x352xf32>
    %78 = vector.extract_strided_slice %4 {offsets = [0, 111], sizes = [8, 352], strides = [1, 1]} : vector<8x506xf32> to vector<8x352xf32>
    %79 = vector.extract_strided_slice %4 {offsets = [0, 112], sizes = [8, 352], strides = [1, 1]} : vector<8x506xf32> to vector<8x352xf32>
    %80 = vector.extract_strided_slice %4 {offsets = [0, 113], sizes = [8, 352], strides = [1, 1]} : vector<8x506xf32> to vector<8x352xf32>
    %81 = vector.extract_strided_slice %4 {offsets = [0, 114], sizes = [8, 352], strides = [1, 1]} : vector<8x506xf32> to vector<8x352xf32>
    %82 = vector.extract_strided_slice %4 {offsets = [0, 115], sizes = [8, 352], strides = [1, 1]} : vector<8x506xf32> to vector<8x352xf32>
    %83 = vector.extract_strided_slice %4 {offsets = [0, 116], sizes = [8, 352], strides = [1, 1]} : vector<8x506xf32> to vector<8x352xf32>
    %84 = vector.extract_strided_slice %4 {offsets = [0, 132], sizes = [8, 352], strides = [1, 1]} : vector<8x506xf32> to vector<8x352xf32>
    %85 = vector.extract_strided_slice %4 {offsets = [0, 133], sizes = [8, 352], strides = [1, 1]} : vector<8x506xf32> to vector<8x352xf32>
    %86 = vector.extract_strided_slice %4 {offsets = [0, 134], sizes = [8, 352], strides = [1, 1]} : vector<8x506xf32> to vector<8x352xf32>
    %87 = vector.extract_strided_slice %4 {offsets = [0, 135], sizes = [8, 352], strides = [1, 1]} : vector<8x506xf32> to vector<8x352xf32>
    %88 = vector.extract_strided_slice %4 {offsets = [0, 136], sizes = [8, 352], strides = [1, 1]} : vector<8x506xf32> to vector<8x352xf32>
    %89 = vector.extract_strided_slice %4 {offsets = [0, 137], sizes = [8, 352], strides = [1, 1]} : vector<8x506xf32> to vector<8x352xf32>
    %90 = vector.extract_strided_slice %4 {offsets = [0, 138], sizes = [8, 352], strides = [1, 1]} : vector<8x506xf32> to vector<8x352xf32>
    %91 = tpu.concatenate %42, %43, %44, %45, %46, %47, %48, %49, %50, %51, %52, %53, %54, %55, %56, %57 in 0 : vector<8x352xf32>, vector<8x352xf32>, vector<8x352xf32>, vector<8x352xf32>, vector<8x352xf32>, vector<8x352xf32>, vector<8x352xf32>, vector<8x352xf32>, vector<8x352xf32>, vector<8x352xf32>, vector<8x352xf32>, vector<8x352xf32>, vector<8x352xf32>, vector<8x352xf32>, vector<8x352xf32>, vector<8x352xf32> -> vector<128x352xf32>
    %92 = tpu.concatenate %58, %59, %60, %61, %62, %63, %64, %65, %66, %67, %68, %69, %70, %71, %72, %73 in 0 : vector<8x352xf32>, vector<8x352xf32>, vector<8x352xf32>, vector<8x352xf32>, vector<8x352xf32>, vector<8x352xf32>, vector<8x352xf32>, vector<8x352xf32>, vector<8x352xf32>, vector<8x352xf32>, vector<8x352xf32>, vector<8x352xf32>, vector<8x352xf32>, vector<8x352xf32>, vector<8x352xf32>, vector<8x352xf32> -> vector<128x352xf32>
    %93 = tpu.concatenate %74, %75, %76, %77, %78, %79, %80, %81, %82, %83, %84, %85, %86, %87, %88, %89 in 0 : vector<8x352xf32>, vector<8x352xf32>, vector<8x352xf32>, vector<8x352xf32>, vector<8x352xf32>, vector<8x352xf32>, vector<8x352xf32>, vector<8x352xf32>, vector<8x352xf32>, vector<8x352xf32>, vector<8x352xf32>, vector<8x352xf32>, vector<8x352xf32>, vector<8x352xf32>, vector<8x352xf32>, vector<8x352xf32> -> vector<128x352xf32>
    %94 = tpu.concatenate %91, %92, %93, %90 in 0 : vector<128x352xf32>, vector<128x352xf32>, vector<128x352xf32>, vector<8x352xf32> -> vector<392x352xf32>
    %95 = arith.truncf %94 : vector<392x352xf32> to vector<392x352xbf16>
    %c0_22 = arith.constant 0 : index
    %c0_23 = arith.constant 0 : index
    %96 = vector.load %arg8[%c0_22, %c0_23] : memref<32x392xbf16, #tpu.memory_space<vmem>>, vector<32x392xbf16>
    %cst_24 = arith.constant dense<0.000000e+00> : vector<32x352xf32>
    %97 = tpu.matmul %96, %95, %cst_24 {dimension_numbers = #tpu.dot_dimension_numbers<[1], [0], [0], [1], [0, 0, 1, 1], [], []>} : vector<32x392xbf16>, vector<392x352xbf16>, vector<32x352xf32> -> vector<32x352xf32>
    %c0_25 = arith.constant 0 : index
    %c0_26 = arith.constant 0 : index
    %98 = vector.load %arg9[%c0_25, %c0_26] : memref<32x1xf32, #tpu.memory_space<vmem>>, vector<32x1xf32>
    %99 = vector.broadcast %98 : vector<32x1xf32> to vector<32x352xf32>
    %100 = arith.addf %97, %99 : vector<32x352xf32>
    %cst_27 = arith.constant 0.000000e+00 : f32
    %101 = vector.broadcast %cst_27 : f32 to vector<32x352xf32>
    %102 = arith.maximumf %100, %101 : vector<32x352xf32>
    %103 = vector.broadcast %0 : vector<1x352xf32> to vector<32x352xf32>
    %104 = arith.mulf %102, %103 : vector<32x352xf32>
    %cst_28 = arith.constant 0.000000e+00 : bf16
    %105 = vector.broadcast %cst_28 : bf16 to vector<32x69xbf16>
    %cst_29 = arith.constant 0.000000e+00 : bf16
    %106 = vector.broadcast %cst_29 : bf16 to vector<32x85xbf16>
    %107 = arith.truncf %104 : vector<32x352xf32> to vector<32x352xbf16>
    %108 = tpu.concatenate %105, %107, %106 in 1 : vector<32x69xbf16>, vector<32x352xbf16>, vector<32x85xbf16> -> vector<32x506xbf16>
    %109 = vector.extract_strided_slice %108 {offsets = [0, 46], sizes = [32, 352], strides = [1, 1]} : vector<32x506xbf16> to vector<32x352xbf16>
    %110 = vector.extract_strided_slice %108 {offsets = [0, 47], sizes = [32, 352], strides = [1, 1]} : vector<32x506xbf16> to vector<32x352xbf16>
    %111 = vector.extract_strided_slice %108 {offsets = [0, 48], sizes = [32, 352], strides = [1, 1]} : vector<32x506xbf16> to vector<32x352xbf16>
    %112 = vector.extract_strided_slice %108 {offsets = [0, 68], sizes = [32, 352], strides = [1, 1]} : vector<32x506xbf16> to vector<32x352xbf16>
    %113 = vector.extract_strided_slice %108 {offsets = [0, 69], sizes = [32, 352], strides = [1, 1]} : vector<32x506xbf16> to vector<32x352xbf16>
    %114 = vector.extract_strided_slice %108 {offsets = [0, 70], sizes = [32, 352], strides = [1, 1]} : vector<32x506xbf16> to vector<32x352xbf16>
    %115 = vector.extract_strided_slice %108 {offsets = [0, 90], sizes = [32, 352], strides = [1, 1]} : vector<32x506xbf16> to vector<32x352xbf16>
    %116 = vector.extract_strided_slice %108 {offsets = [0, 91], sizes = [32, 352], strides = [1, 1]} : vector<32x506xbf16> to vector<32x352xbf16>
    %117 = vector.extract_strided_slice %108 {offsets = [0, 92], sizes = [32, 352], strides = [1, 1]} : vector<32x506xbf16> to vector<32x352xbf16>
    %118 = tpu.concatenate %109, %110, %111, %112, %113, %114, %115, %116, %117 in 0 : vector<32x352xbf16>, vector<32x352xbf16>, vector<32x352xbf16>, vector<32x352xbf16>, vector<32x352xbf16>, vector<32x352xbf16>, vector<32x352xbf16>, vector<32x352xbf16>, vector<32x352xbf16> -> vector<288x352xbf16>
    %c0_30 = arith.constant 0 : index
    %c0_31 = arith.constant 0 : index
    %119 = vector.load %arg10[%c0_30, %c0_31] : memref<16x288xbf16, #tpu.memory_space<vmem>>, vector<16x288xbf16>
    %cst_32 = arith.constant dense<0.000000e+00> : vector<16x352xf32>
    %120 = tpu.matmul %119, %118, %cst_32 {dimension_numbers = #tpu.dot_dimension_numbers<[1], [0], [0], [1], [0, 0, 1, 1], [], []>} : vector<16x288xbf16>, vector<288x352xbf16>, vector<16x352xf32> -> vector<16x352xf32>
    %c0_33 = arith.constant 0 : index
    %c0_34 = arith.constant 0 : index
    %121 = vector.load %arg11[%c0_33, %c0_34] : memref<16x1xf32, #tpu.memory_space<vmem>>, vector<16x1xf32>
    %122 = vector.broadcast %121 : vector<16x1xf32> to vector<16x352xf32>
    %123 = arith.addf %120, %122 : vector<16x352xf32>
    %cst_35 = arith.constant 0.000000e+00 : f32
    %124 = vector.broadcast %cst_35 : f32 to vector<16x352xf32>
    %125 = arith.maximumf %123, %124 : vector<16x352xf32>
    %126 = vector.broadcast %0 : vector<1x352xf32> to vector<16x352xf32>
    %127 = arith.mulf %125, %126 : vector<16x352xf32>
    %cst_36 = arith.constant 0.000000e+00 : bf16
    %128 = vector.broadcast %cst_36 : bf16 to vector<16x69xbf16>
    %cst_37 = arith.constant 0.000000e+00 : bf16
    %129 = vector.broadcast %cst_37 : bf16 to vector<16x85xbf16>
    %130 = arith.truncf %127 : vector<16x352xf32> to vector<16x352xbf16>
    %131 = tpu.concatenate %128, %130, %129 in 1 : vector<16x69xbf16>, vector<16x352xbf16>, vector<16x85xbf16> -> vector<16x506xbf16>
    %132 = tpu.concatenate %41, %131 in 0 : vector<48x506xbf16>, vector<16x506xbf16> -> vector<64x506xbf16>
    %133 = vector.extract_strided_slice %132 {offsets = [0, 46], sizes = [64, 352], strides = [1, 1]} : vector<64x506xbf16> to vector<64x352xbf16>
    %134 = vector.extract_strided_slice %132 {offsets = [0, 47], sizes = [64, 352], strides = [1, 1]} : vector<64x506xbf16> to vector<64x352xbf16>
    %135 = vector.extract_strided_slice %132 {offsets = [0, 48], sizes = [64, 352], strides = [1, 1]} : vector<64x506xbf16> to vector<64x352xbf16>
    %136 = vector.extract_strided_slice %132 {offsets = [0, 68], sizes = [64, 352], strides = [1, 1]} : vector<64x506xbf16> to vector<64x352xbf16>
    %137 = vector.extract_strided_slice %132 {offsets = [0, 69], sizes = [64, 352], strides = [1, 1]} : vector<64x506xbf16> to vector<64x352xbf16>
    %138 = vector.extract_strided_slice %132 {offsets = [0, 70], sizes = [64, 352], strides = [1, 1]} : vector<64x506xbf16> to vector<64x352xbf16>
    %139 = vector.extract_strided_slice %132 {offsets = [0, 90], sizes = [64, 352], strides = [1, 1]} : vector<64x506xbf16> to vector<64x352xbf16>
    %140 = vector.extract_strided_slice %132 {offsets = [0, 91], sizes = [64, 352], strides = [1, 1]} : vector<64x506xbf16> to vector<64x352xbf16>
    %141 = vector.extract_strided_slice %132 {offsets = [0, 92], sizes = [64, 352], strides = [1, 1]} : vector<64x506xbf16> to vector<64x352xbf16>
    %142 = tpu.concatenate %133, %134, %135, %136, %137, %138, %139, %140, %141 in 0 : vector<64x352xbf16>, vector<64x352xbf16>, vector<64x352xbf16>, vector<64x352xbf16>, vector<64x352xbf16>, vector<64x352xbf16>, vector<64x352xbf16>, vector<64x352xbf16>, vector<64x352xbf16> -> vector<576x352xbf16>
    %c0_38 = arith.constant 0 : index
    %c0_39 = arith.constant 0 : index
    %143 = vector.load %arg12[%c0_38, %c0_39] : memref<30x576xbf16, #tpu.memory_space<vmem>>, vector<30x576xbf16>
    %cst_40 = arith.constant dense<0.000000e+00> : vector<30x352xf32>
    %144 = tpu.matmul %143, %142, %cst_40 {dimension_numbers = #tpu.dot_dimension_numbers<[1], [0], [0], [1], [0, 0, 1, 1], [], []>} : vector<30x576xbf16>, vector<576x352xbf16>, vector<30x352xf32> -> vector<30x352xf32>
    %c0_41 = arith.constant 0 : index
    %c0_42 = arith.constant 0 : index
    %145 = vector.load %arg13[%c0_41, %c0_42] : memref<30x1xf32, #tpu.memory_space<vmem>>, vector<30x1xf32>
    %146 = vector.broadcast %145 : vector<30x1xf32> to vector<30x352xf32>
    %147 = arith.addf %144, %146 : vector<30x352xf32>
    %cst_43 = arith.constant 0.000000e+00 : f32
    %148 = vector.broadcast %cst_43 : f32 to vector<30x352xf32>
    %149 = arith.maximumf %147, %148 : vector<30x352xf32>
    %c0_44 = arith.constant 0 : index
    %c0_45 = arith.constant 0 : index
    %c69 = arith.constant 69 : index
    %150 = vector.load %arg14[%c0_44, %c0_45, %c69] : memref<1x32x506xf32, #tpu.memory_space<vmem>>, vector<1x30x352xf32>
    %151 = vector.shape_cast %150 : vector<1x30x352xf32> to vector<30x352xf32>
    %152 = vector.shape_cast %149 : vector<30x352xf32> to vector<1x30x352xf32>
    tpu.vector_store %arg14[%c0_44, %c0_45, %c69], %152 {strides = array<i32>} : memref<1x32x506xf32, #tpu.memory_space<vmem>>, vector<1x30x352xf32>,
    %153 = vector.extract_strided_slice %4 {offsets = [0, 69], sizes = [2, 352], strides = [1, 1]} : vector<8x506xf32> to vector<2x352xf32>
    %c0_46 = arith.constant 0 : index
    %c30 = arith.constant 30 : index
    %c69_47 = arith.constant 69 : index
    %154 = vector.load %arg14[%c0_46, %c30, %c69_47] : memref<1x32x506xf32, #tpu.memory_space<vmem>>, vector<1x2x352xf32>
    %155 = vector.shape_cast %154 : vector<1x2x352xf32> to vector<2x352xf32>
    %156 = vector.shape_cast %153 : vector<2x352xf32> to vector<1x2x352xf32>
    tpu.vector_store %arg14[%c0_46, %c30, %c69_47], %156 {strides = array<i32>} : memref<1x32x506xf32, #tpu.memory_space<vmem>>, vector<1x2x352xf32>,
    return
  }
  func.func @transform_0(%arg0: i32) -> (i32, i32, i32) {
    %c0_i32 = arith.constant 0 : i32
    %c0_i32_0 = arith.constant 0 : i32
    %c0_i32_1 = arith.constant 0 : i32
    return %arg0, %c0_i32, %c0_i32_0 : i32, i32, i32
  }
  func.func @transform_1(%arg0: i32) -> (i32, i32, i32) {
    %c0_i32 = arith.constant 0 : i32
    %c0_i32_0 = arith.constant 0 : i32
    %c0_i32_1 = arith.constant 0 : i32
    return %arg0, %c0_i32, %c0_i32_0 : i32, i32, i32
  }
  func.func @transform_2(%arg0: i32) -> (i32, i32) {
    %c0_i32 = arith.constant 0 : i32
    %c0_i32_0 = arith.constant 0 : i32
    %c0_i32_1 = arith.constant 0 : i32
    return %c0_i32, %c0_i32_0 : i32, i32
  }
  func.func @transform_3(%arg0: i32) -> (i32, i32) {
    %c0_i32 = arith.constant 0 : i32
    %c0_i32_0 = arith.constant 0 : i32
    %c0_i32_1 = arith.constant 0 : i32
    return %c0_i32, %c0_i32_0 : i32, i32
  }
  func.func @transform_4(%arg0: i32) -> (i32, i32) {
    %c0_i32 = arith.constant 0 : i32
    %c0_i32_0 = arith.constant 0 : i32
    %c0_i32_1 = arith.constant 0 : i32
    return %c0_i32, %c0_i32_0 : i32, i32
  }
  func.func @transform_5(%arg0: i32) -> (i32, i32) {
    %c0_i32 = arith.constant 0 : i32
    %c0_i32_0 = arith.constant 0 : i32
    %c0_i32_1 = arith.constant 0 : i32
    return %c0_i32, %c0_i32_0 : i32, i32
  }
  func.func @transform_6(%arg0: i32) -> (i32, i32) {
    %c0_i32 = arith.constant 0 : i32
    %c0_i32_0 = arith.constant 0 : i32
    %c0_i32_1 = arith.constant 0 : i32
    return %c0_i32, %c0_i32_0 : i32, i32
  }
  func.func @transform_7(%arg0: i32) -> (i32, i32) {
    %c0_i32 = arith.constant 0 : i32
    %c0_i32_0 = arith.constant 0 : i32
    %c0_i32_1 = arith.constant 0 : i32
    return %c0_i32, %c0_i32_0 : i32, i32
  }
  func.func @transform_8(%arg0: i32) -> (i32, i32) {
    %c0_i32 = arith.constant 0 : i32
    %c0_i32_0 = arith.constant 0 : i32
    %c0_i32_1 = arith.constant 0 : i32
    return %c0_i32, %c0_i32_0 : i32, i32
  }
  func.func @transform_9(%arg0: i32) -> (i32, i32) {
    %c0_i32 = arith.constant 0 : i32
    %c0_i32_0 = arith.constant 0 : i32
    %c0_i32_1 = arith.constant 0 : i32
    return %c0_i32, %c0_i32_0 : i32, i32
  }
  func.func @transform_10(%arg0: i32) -> (i32, i32) {
    %c0_i32 = arith.constant 0 : i32
    %c0_i32_0 = arith.constant 0 : i32
    %c0_i32_1 = arith.constant 0 : i32
    return %c0_i32, %c0_i32_0 : i32, i32
  }
  func.func @transform_11(%arg0: i32) -> (i32, i32) {
    %c0_i32 = arith.constant 0 : i32
    %c0_i32_0 = arith.constant 0 : i32
    %c0_i32_1 = arith.constant 0 : i32
    return %c0_i32, %c0_i32_0 : i32, i32
  }
  func.func @transform_12(%arg0: i32) -> (i32, i32) {
    %c0_i32 = arith.constant 0 : i32
    %c0_i32_0 = arith.constant 0 : i32
    %c0_i32_1 = arith.constant 0 : i32
    return %c0_i32, %c0_i32_0 : i32, i32
  }
  func.func @transform_13(%arg0: i32) -> (i32, i32, i32) {
    %c0_i32 = arith.constant 0 : i32
    %c0_i32_0 = arith.constant 0 : i32
    %c0_i32_1 = arith.constant 0 : i32
    return %arg0, %c0_i32, %c0_i32_0 : i32, i32, i32
  }
}

</mosaic_0001>

<llo_original>
// kernel: basic_motion_encoder.1
$region0: #{basic_motion_encoder.1}
  #allocation0 [shape = 'u32[]', space=smem, size = 0x4, offset = 0x4, fixed_abs, tag = 'smem constant byte address 0x4 - core index']
  #allocation1 [shape = 'u32[144,128]{1,0:T(1,128)}', space=vmem, size = 0x12000, scoped, tag = 'internal scratch']
  %s0 = inlined_call_operand.vmem [shape: bf16[2,8,506], index: 0, kind: input, shape index: {}]
  %s1 = inlined_call_operand.vmem [shape: f32[2,8,506], index: 1, kind: input, shape index: {}]
  %s2 = inlined_call_operand.vmem [shape: f32[1,352], index: 2, kind: input, shape index: {}]
  %s3 = inlined_call_operand.vmem [shape: bf16[64,8], index: 3, kind: input, shape index: {}]
  %s4 = inlined_call_operand.vmem [shape: f32[64,1], index: 4, kind: input, shape index: {}]
  %s5 = inlined_call_operand.vmem [shape: bf16[48,576], index: 5, kind: input, shape index: {}]
  %s6 = inlined_call_operand.vmem [shape: f32[48,1], index: 6, kind: input, shape index: {}]
  %s7 = inlined_call_operand.vmem [shape: bf16[32,392], index: 7, kind: input, shape index: {}]
  %s8 = inlined_call_operand.vmem [shape: f32[32,1], index: 8, kind: input, shape index: {}]
  %s9 = inlined_call_operand.vmem [shape: bf16[16,288], index: 9, kind: input, shape index: {}]
  %s10 = inlined_call_operand.vmem [shape: f32[16,1], index: 10, kind: input, shape index: {}]
  %s11 = inlined_call_operand.vmem [shape: bf16[30,576], index: 11, kind: input, shape index: {}]
  %s12 = inlined_call_operand.vmem [shape: f32[30,1], index: 12, kind: input, shape index: {}]
  %s13 = inlined_call_operand.vmem [shape: f32[2,32,506], index: 13, kind: output, shape index: {}]
  %s14 = sld [smem:[#allocation0]]
  $region85: #{basic_motion_encoder.1} parent=0
    _
  %s16 = ssub.s32 1, %s14
  %s17 = scalar_select 0, %s16, %s14
  loop: start=0, step=1, limit=4
  $region2: #{basic_motion_encoder.1} parent=0 // loop_pre_header
    _
  $region3: #{basic_motion_encoder.1} parent=0 // loop_header
    %s19 = sphi 0, %s23
    %p20 = scmp.ge.s32.totalorder %s19, 4
    %s29 = sphi 0, %s31
    %s32 = sphi 0, %s29
    %s33 = sphi 0, %s32
    %s49 = sphi 0, %s33
    %s55 = sphi 0, %s57
    %s58 = sphi 0, %s55
    %s59 = sphi 0, %s58
    %s75 = sphi 0, %s59
    %s79 = sphi 0, %s79
    %s81 = sphi 0, %s79
    %s82 = sphi 0, %s81
    %s96 = sphi 0, %s82
    %s100 = sphi 0, %s100
    %s102 = sphi 0, %s100
    %s103 = sphi 0, %s102
    %s117 = sphi 0, %s103
    %s121 = sphi 0, %s121
    %s123 = sphi 0, %s121
    %s124 = sphi 0, %s123
    %s138 = sphi 0, %s124
    %s142 = sphi 0, %s142
    %s144 = sphi 0, %s142
    %s145 = sphi 0, %s144
    %s159 = sphi 0, %s145
    %s163 = sphi 0, %s163
    %s165 = sphi 0, %s163
    %s166 = sphi 0, %s165
    %s180 = sphi 0, %s166
    %s184 = sphi 0, %s184
    %s186 = sphi 0, %s184
    %s187 = sphi 0, %s186
    %s201 = sphi 0, %s187
    %s205 = sphi 0, %s205
    %s207 = sphi 0, %s205
    %s208 = sphi 0, %s207
    %s222 = sphi 0, %s208
    %s226 = sphi 0, %s226
    %s228 = sphi 0, %s226
    %s229 = sphi 0, %s228
    %s243 = sphi 0, %s229
    %s247 = sphi 0, %s247
    %s249 = sphi 0, %s247
    %s250 = sphi 0, %s249
    %s264 = sphi 0, %s250
    %s268 = sphi 0, %s268
    %s270 = sphi 0, %s268
    %s271 = sphi 0, %s270
    %s285 = sphi 0, %s271
    %s289 = sphi 0, %s289
    %s291 = sphi 0, %s289
    %s292 = sphi 0, %s291
    %s306 = sphi 0, %s292
    %s312 = sphi 0, %s314
    %s315 = sphi 0, %s312
    %s316 = sphi 0, %s315
    %s332 = sphi 0, %s316
  $region4: #{basic_motion_encoder.1} parent=0 // loop_header_branch
    %22 = sbr.rel (%p20) target = $region8
  $region5: #{basic_motion_encoder.1} parent=0 // loop_body
    %s24 = ssub.s32 %s19, 1
    %s25 = ssub.s32 %s19, 2
    %s26 = sadd.s32 %s19, 1
    %s27 = ssub.s32 %s19, %s26
    %p28 = scmp.eq.s32.totalorder %s27, 0
    %s30 = sadd.s32 %s29, 1
    %s31 = scalar_select %p28, %s29, %s30
    %p34 = pneg %p28
    %p35 = scmp.eq.s32.totalorder %s19, 1
    %p36 = por %p34, %p35
    %p37 = scmp.ne.s32.totalorder %s29, %s32
    %p38 = scmp.eq.s32.totalorder %s19, 0
    %p39 = por %p37, %p38
    %p40 = scmp.ne.s32.totalorder %s29, %s32
    %p41 = scmp.eq.s32.totalorder %s24, 1
    %p42 = por %p40, %p41
    %p43 = scmp.ne.s32.totalorder %s32, %s33
    %p44 = scmp.eq.s32.totalorder %s24, 0
    %p45 = por %p43, %p44
    %p46 = scmp.ne.s32.totalorder %s32, %s33
    %p47 = scmp.eq.s32.totalorder %s25, 1
    %p48 = por %p46, %p47
    %p50 = scmp.ne.s32.totalorder %s33, %s49
    %p51 = scmp.eq.s32.totalorder %s25, 0
    %p52 = por %p50, %p51
    %s53 = ssub.s32 %s19, %s26
    %p54 = scmp.eq.s32.totalorder %s53, 0
    %s56 = sadd.s32 %s55, 1
    %s57 = scalar_select %p54, %s55, %s56
    %p60 = pneg %p54
    %p61 = scmp.eq.s32.totalorder %s19, 1
    %p62 = por %p60, %p61
    %p63 = scmp.ne.s32.totalorder %s55, %s58
    %p64 = scmp.eq.s32.totalorder %s19, 0
    %p65 = por %p63, %p64
    %p66 = scmp.ne.s32.totalorder %s55, %s58
    %p67 = scmp.eq.s32.totalorder %s24, 1
    %p68 = por %p66, %p67
    %p69 = scmp.ne.s32.totalorder %s58, %s59
    %p70 = scmp.eq.s32.totalorder %s24, 0
    %p71 = por %p69, %p70
    %p72 = scmp.ne.s32.totalorder %s58, %s59
    %p73 = scmp.eq.s32.totalorder %s25, 1
    %p74 = por %p72, %p73
    %p76 = scmp.ne.s32.totalorder %s59, %s75
    %p77 = scmp.eq.s32.totalorder %s25, 0
    %p78 = por %p76, %p77
    %s80 = sadd.s32 %s79, 1
    %p83 = scmp.eq.s32.totalorder %s19, 1
    %p84 = scmp.ne.s32.totalorder %s79, %s81
    %p85 = scmp.eq.s32.totalorder %s19, 0
    %p86 = por %p84, %p85
    %p87 = scmp.ne.s32.totalorder %s79, %s81
    %p88 = scmp.eq.s32.totalorder %s24, 1
    %p89 = por %p87, %p88
    %p90 = scmp.ne.s32.totalorder %s81, %s82
    %p91 = scmp.eq.s32.totalorder %s24, 0
    %p92 = por %p90, %p91
    %p93 = scmp.ne.s32.totalorder %s81, %s82
    %p94 = scmp.eq.s32.totalorder %s25, 1
    %p95 = por %p93, %p94
    %p97 = scmp.ne.s32.totalorder %s82, %s96
    %p98 = scmp.eq.s32.totalorder %s25, 0
    %p99 = por %p97, %p98
    %s101 = sadd.s32 %s100, 1
    %p104 = scmp.eq.s32.totalorder %s19, 1
    %p105 = scmp.ne.s32.totalorder %s100, %s102
    %p106 = scmp.eq.s32.totalorder %s19, 0
    %p107 = por %p105, %p106
    %p108 = scmp.ne.s32.totalorder %s100, %s102
    %p109 = scmp.eq.s32.totalorder %s24, 1
    %p110 = por %p108, %p109
    %p111 = scmp.ne.s32.totalorder %s102, %s103
    %p112 = scmp.eq.s32.totalorder %s24, 0
    %p113 = por %p111, %p112
    %p114 = scmp.ne.s32.totalorder %s102, %s103
    %p115 = scmp.eq.s32.totalorder %s25, 1
    %p116 = por %p114, %p115
    %p118 = scmp.ne.s32.totalorder %s103, %s117
    %p119 = scmp.eq.s32.totalorder %s25, 0
    %p120 = por %p118, %p119
    %s122 = sadd.s32 %s121, 1
    %p125 = scmp.eq.s32.totalorder %s19, 1
    %p126 = scmp.ne.s32.totalorder %s121, %s123
    %p127 = scmp.eq.s32.totalorder %s19, 0
    %p128 = por %p126, %p127
    %p129 = scmp.ne.s32.totalorder %s121, %s123
    %p130 = scmp.eq.s32.totalorder %s24, 1
    %p131 = por %p129, %p130
    %p132 = scmp.ne.s32.totalorder %s123, %s124
    %p133 = scmp.eq.s32.totalorder %s24, 0
    %p134 = por %p132, %p133
    %p135 = scmp.ne.s32.totalorder %s123, %s124
    %p136 = scmp.eq.s32.totalorder %s25, 1
    %p137 = por %p135, %p136
    %p139 = scmp.ne.s32.totalorder %s124, %s138
    %p140 = scmp.eq.s32.totalorder %s25, 0
    %p141 = por %p139, %p140
    %s143 = sadd.s32 %s142, 1
    %p146 = scmp.eq.s32.totalorder %s19, 1
    %p147 = scmp.ne.s32.totalorder %s142, %s144
    %p148 = scmp.eq.s32.totalorder %s19, 0
    %p149 = por %p147, %p148
    %p150 = scmp.ne.s32.totalorder %s142, %s144
    %p151 = scmp.eq.s32.totalorder %s24, 1
    %p152 = por %p150, %p151
    %p153 = scmp.ne.s32.totalorder %s144, %s145
    %p154 = scmp.eq.s32.totalorder %s24, 0
    %p155 = por %p153, %p154
    %p156 = scmp.ne.s32.totalorder %s144, %s145
    %p157 = scmp.eq.s32.totalorder %s25, 1
    %p158 = por %p156, %p157
    %p160 = scmp.ne.s32.totalorder %s145, %s159
    %p161 = scmp.eq.s32.totalorder %s25, 0
    %p162 = por %p160, %p161
    %s164 = sadd.s32 %s163, 1
    %p167 = scmp.eq.s32.totalorder %s19, 1
    %p168 = scmp.ne.s32.totalorder %s163, %s165
    %p169 = scmp.eq.s32.totalorder %s19, 0
    %p170 = por %p168, %p169
    %p171 = scmp.ne.s32.totalorder %s163, %s165
    %p172 = scmp.eq.s32.totalorder %s24, 1
    %p173 = por %p171, %p172
    %p174 = scmp.ne.s32.totalorder %s165, %s166
    %p175 = scmp.eq.s32.totalorder %s24, 0
    %p176 = por %p174, %p175
    %p177 = scmp.ne.s32.totalorder %s165, %s166
    %p178 = scmp.eq.s32.totalorder %s25, 1
    %p179 = por %p177, %p178
    %p181 = scmp.ne.s32.totalorder %s166, %s180
    %p182 = scmp.eq.s32.totalorder %s25, 0
    %p183 = por %p181, %p182
    %s185 = sadd.s32 %s184, 1
    %p188 = scmp.eq.s32.totalorder %s19, 1
    %p189 = scmp.ne.s32.totalorder %s184, %s186
    %p190 = scmp.eq.s32.totalorder %s19, 0
    %p191 = por %p189, %p190
    %p192 = scmp.ne.s32.totalorder %s184, %s186
    %p193 = scmp.eq.s32.totalorder %s24, 1
    %p194 = por %p192, %p193
    %p195 = scmp.ne.s32.totalorder %s186, %s187
    %p196 = scmp.eq.s32.totalorder %s24, 0
    %p197 = por %p195, %p196
    %p198 = scmp.ne.s32.totalorder %s186, %s187
    %p199 = scmp.eq.s32.totalorder %s25, 1
    %p200 = por %p198, %p199
    %p202 = scmp.ne.s32.totalorder %s187, %s201
    %p203 = scmp.eq.s32.totalorder %s25, 0
    %p204 = por %p202, %p203
    %s206 = sadd.s32 %s205, 1
    %p209 = scmp.eq.s32.totalorder %s19, 1
    %p210 = scmp.ne.s32.totalorder %s205, %s207
    %p211 = scmp.eq.s32.totalorder %s19, 0
    %p212 = por %p210, %p211
    %p213 = scmp.ne.s32.totalorder %s205, %s207
    %p214 = scmp.eq.s32.totalorder %s24, 1
    %p215 = por %p213, %p214
    %p216 = scmp.ne.s32.totalorder %s207, %s208
    %p217 = scmp.eq.s32.totalorder %s24, 0
    %p218 = por %p216, %p217
    %p219 = scmp.ne.s32.totalorder %s207, %s208
    %p220 = scmp.eq.s32.totalorder %s25, 1
    %p221 = por %p219, %p220
    %p223 = scmp.ne.s32.totalorder %s208, %s222
    %p224 = scmp.eq.s32.totalorder %s25, 0
    %p225 = por %p223, %p224
    %s227 = sadd.s32 %s226, 1
    %p230 = scmp.eq.s32.totalorder %s19, 1
    %p231 = scmp.ne.s32.totalorder %s226, %s228
    %p232 = scmp.eq.s32.totalorder %s19, 0
    %p233 = por %p231, %p232
    %p234 = scmp.ne.s32.totalorder %s226, %s228
    %p235 = scmp.eq.s32.totalorder %s24, 1
    %p236 = por %p234, %p235
    %p237 = scmp.ne.s32.totalorder %s228, %s229
    %p238 = scmp.eq.s32.totalorder %s24, 0
    %p239 = por %p237, %p238
    %p240 = scmp.ne.s32.totalorder %s228, %s229
    %p241 = scmp.eq.s32.totalorder %s25, 1
    %p242 = por %p240, %p241
    %p244 = scmp.ne.s32.totalorder %s229, %s243
    %p245 = scmp.eq.s32.totalorder %s25, 0
    %p246 = por %p244, %p245
    %s248 = sadd.s32 %s247, 1
    %p251 = scmp.eq.s32.totalorder %s19, 1
    %p252 = scmp.ne.s32.totalorder %s247, %s249
    %p253 = scmp.eq.s32.totalorder %s19, 0
    %p254 = por %p252, %p253
    %p255 = scmp.ne.s32.totalorder %s247, %s249
    %p256 = scmp.eq.s32.totalorder %s24, 1
    %p257 = por %p255, %p256
    %p258 = scmp.ne.s32.totalorder %s249, %s250
    %p259 = scmp.eq.s32.totalorder %s24, 0
    %p260 = por %p258, %p259
    %p261 = scmp.ne.s32.totalorder %s249, %s250
    %p262 = scmp.eq.s32.totalorder %s25, 1
    %p263 = por %p261, %p262
    %p265 = scmp.ne.s32.totalorder %s250, %s264
    %p266 = scmp.eq.s32.totalorder %s25, 0
    %p267 = por %p265, %p266
    %s269 = sadd.s32 %s268, 1
    %p272 = scmp.eq.s32.totalorder %s19, 1
    %p273 = scmp.ne.s32.totalorder %s268, %s270
    %p274 = scmp.eq.s32.totalorder %s19, 0
    %p275 = por %p273, %p274
    %p276 = scmp.ne.s32.totalorder %s268, %s270
    %p277 = scmp.eq.s32.totalorder %s24, 1
    %p278 = por %p276, %p277
    %p279 = scmp.ne.s32.totalorder %s270, %s271
    %p280 = scmp.eq.s32.totalorder %s24, 0
    %p281 = por %p279, %p280
    %p282 = scmp.ne.s32.totalorder %s270, %s271
    %p283 = scmp.eq.s32.totalorder %s25, 1
    %p284 = por %p282, %p283
    %p286 = scmp.ne.s32.totalorder %s271, %s285
    %p287 = scmp.eq.s32.totalorder %s25, 0
    %p288 = por %p286, %p287
    %s290 = sadd.s32 %s289, 1
    %p293 = scmp.eq.s32.totalorder %s19, 1
    %p294 = scmp.ne.s32.totalorder %s289, %s291
    %p295 = scmp.eq.s32.totalorder %s19, 0
    %p296 = por %p294, %p295
    %p297 = scmp.ne.s32.totalorder %s289, %s291
    %p298 = scmp.eq.s32.totalorder %s24, 1
    %p299 = por %p297, %p298
    %p300 = scmp.ne.s32.totalorder %s291, %s292
    %p301 = scmp.eq.s32.totalorder %s24, 0
    %p302 = por %p300, %p301
    %p303 = scmp.ne.s32.totalorder %s291, %s292
    %p304 = scmp.eq.s32.totalorder %s25, 1
    %p305 = por %p303, %p304
    %p307 = scmp.ne.s32.totalorder %s292, %s306
    %p308 = scmp.eq.s32.totalorder %s25, 0
    %p309 = por %p307, %p308
    %s310 = ssub.s32 %s19, %s26
    %p311 = scmp.eq.s32.totalorder %s310, 0
    %s313 = sadd.s32 %s312, 1
    %s314 = scalar_select %p311, %s312, %s313
    %p317 = pneg %p311
    %p318 = scmp.eq.s32.totalorder %s19, 1
    %p319 = por %p317, %p318
    %p320 = scmp.ne.s32.totalorder %s312, %s315
    %p321 = scmp.eq.s32.totalorder %s19, 0
    %p322 = por %p320, %p321
    %p323 = scmp.ne.s32.totalorder %s312, %s315
    %p324 = scmp.eq.s32.totalorder %s24, 1
    %p325 = por %p323, %p324
    %p326 = scmp.ne.s32.totalorder %s315, %s316
    %p327 = scmp.eq.s32.totalorder %s24, 0
    %p328 = por %p326, %p327
    %p329 = scmp.ne.s32.totalorder %s315, %s316
    %p330 = scmp.eq.s32.totalorder %s25, 1
    %p331 = por %p329, %p330
    %p333 = scmp.ne.s32.totalorder %s316, %s332
    %p334 = scmp.eq.s32.totalorder %s25, 0
    %p335 = por %p333, %p334
    %p336 = scmp.le.s32.totalorder 1, %s19
    %p337 = scmp.lt.s32.totalorder %s19, 3
    %p338 = pnand %p336, %p337
    %p339 = pneg %p338
    // Predicated region
    $region9: #{basic_motion_encoder.1} parent=5 // pred_check
      _
    $region10: #{basic_motion_encoder.1} parent=5 // pred_check_branch
      %341 = sbr.rel (%p338) target = $region12
    $region11: #{basic_motion_encoder.1} parent=5 // pred_region
      %s342 = ssub.s32 %s19, 1
      // Predicated region
      $region13: #{basic_motion_encoder.1} parent=11 // pred_check
        %p343 = pneg %p92
      $region14: #{basic_motion_encoder.1} parent=11 // pred_check_branch
        %345 = sbr.rel (%p343) target = $region16
      $region15: #{basic_motion_encoder.1} parent=11 // pred_region
        _
      $region16: #{basic_motion_encoder.1} parent=11 // pred_fallthru
        _
      // Predicated region
      $region17: #{basic_motion_encoder.1} parent=11 // pred_check
        %p346 = pneg %p113
      $region18: #{basic_motion_encoder.1} parent=11 // pred_check_branch
        %348 = sbr.rel (%p346) target = $region20
      $region19: #{basic_motion_encoder.1} parent=11 // pred_region
        _
      $region20: #{basic_motion_encoder.1} parent=11 // pred_fallthru
        _
      // Predicated region
      $region21: #{basic_motion_encoder.1} parent=11 // pred_check
        %p349 = pneg %p134
      $region22: #{basic_motion_encoder.1} parent=11 // pred_check_branch
        %351 = sbr.rel (%p349) target = $region24
      $region23: #{basic_motion_encoder.1} parent=11 // pred_region
        _
      $region24: #{basic_motion_encoder.1} parent=11 // pred_fallthru
        _
      // Predicated region
      $region25: #{basic_motion_encoder.1} parent=11 // pred_check
        %p352 = pneg %p155
      $region26: #{basic_motion_encoder.1} parent=11 // pred_check_branch
        %354 = sbr.rel (%p352) target = $region28
      $region27: #{basic_motion_encoder.1} parent=11 // pred_region
        _
      $region28: #{basic_motion_encoder.1} parent=11 // pred_fallthru
        _
      // Predicated region
      $region29: #{basic_motion_encoder.1} parent=11 // pred_check
        %p355 = pneg %p176
      $region30: #{basic_motion_encoder.1} parent=11 // pred_check_branch
        %357 = sbr.rel (%p355) target = $region32
      $region31: #{basic_motion_encoder.1} parent=11 // pred_region
        _
      $region32: #{basic_motion_encoder.1} parent=11 // pred_fallthru
        _
      // Predicated region
      $region33: #{basic_motion_encoder.1} parent=11 // pred_check
        %p358 = pneg %p197
      $region34: #{basic_motion_encoder.1} parent=11 // pred_check_branch
        %360 = sbr.rel (%p358) target = $region36
      $region35: #{basic_motion_encoder.1} parent=11 // pred_region
        _
      $region36: #{basic_motion_encoder.1} parent=11 // pred_fallthru
        _
      // Predicated region
      $region37: #{basic_motion_encoder.1} parent=11 // pred_check
        %p361 = pneg %p218
      $region38: #{basic_motion_encoder.1} parent=11 // pred_check_branch
        %363 = sbr.rel (%p361) target = $region40
      $region39: #{basic_motion_encoder.1} parent=11 // pred_region
        _
      $region40: #{basic_motion_encoder.1} parent=11 // pred_fallthru
        _
      // Predicated region
      $region41: #{basic_motion_encoder.1} parent=11 // pred_check
        %p364 = pneg %p239
      $region42: #{basic_motion_encoder.1} parent=11 // pred_check_branch
        %366 = sbr.rel (%p364) target = $region44
      $region43: #{basic_motion_encoder.1} parent=11 // pred_region
        _
      $region44: #{basic_motion_encoder.1} parent=11 // pred_fallthru
        _
      // Predicated region
      $region45: #{basic_motion_encoder.1} parent=11 // pred_check
        %p367 = pneg %p260
      $region46: #{basic_motion_encoder.1} parent=11 // pred_check_branch
        %369 = sbr.rel (%p367) target = $region48
      $region47: #{basic_motion_encoder.1} parent=11 // pred_region
        _
      $region48: #{basic_motion_encoder.1} parent=11 // pred_fallthru
        _
      // Predicated region
      $region49: #{basic_motion_encoder.1} parent=11 // pred_check
        %p370 = pneg %p281
      $region50: #{basic_motion_encoder.1} parent=11 // pred_check_branch
        %372 = sbr.rel (%p370) target = $region52
      $region51: #{basic_motion_encoder.1} parent=11 // pred_region
        _
      $region52: #{basic_motion_encoder.1} parent=11 // pred_fallthru
        _
      // Predicated region
      $region53: #{basic_motion_encoder.1} parent=11 // pred_check
        %p373 = pneg %p302
      $region54: #{basic_motion_encoder.1} parent=11 // pred_check_branch
        %375 = sbr.rel (%p373) target = $region56
      $region55: #{basic_motion_encoder.1} parent=11 // pred_region
        _
      $region56: #{basic_motion_encoder.1} parent=11 // pred_fallthru
        _
    $region12: #{basic_motion_encoder.1} parent=5 // pred_fallthru
      _
    %p376 = scmp.lt.s32.totalorder %s19, 2
    // Predicated region
    $region57: #{basic_motion_encoder.1} parent=5 // pred_check
      %p377 = pneg %p376
    $region58: #{basic_motion_encoder.1} parent=5 // pred_check_branch
      %379 = sbr.rel (%p377) target = $region60
    $region59: #{basic_motion_encoder.1} parent=5 // pred_region
      // Predicated region
      $region61: #{basic_motion_encoder.1} parent=59 // pred_check
        %p380 = pneg %p39
      $region62: #{basic_motion_encoder.1} parent=59 // pred_check_branch
        %382 = sbr.rel (%p380) target = $region64
      $region63: #{basic_motion_encoder.1} parent=59 // pred_region
        %p383 = scmp.lt.s32.totalorder %s19, 1
        %s384 = scalar_select %p383, %s19, 1
        %s385 = smul.addr %s384, 4
        %s386 = smul.addr %s385, 4
        %s387 = scalar_lea.vmem %s0, %s386
      $region64: #{basic_motion_encoder.1} parent=59 // pred_fallthru
        _
      // Predicated region
      $region65: #{basic_motion_encoder.1} parent=59 // pred_check
        %p388 = pneg %p65
      $region66: #{basic_motion_encoder.1} parent=59 // pred_check_branch
        %390 = sbr.rel (%p388) target = $region68
      $region67: #{basic_motion_encoder.1} parent=59 // pred_region
        %p391 = scmp.lt.s32.totalorder %s19, 1
        %s392 = scalar_select %p391, %s19, 1
        %s393 = smul.addr %s392, 4
        %s394 = smul.addr %s393, 8
        %s395 = scalar_lea.vmem %s1, %s394
      $region68: #{basic_motion_encoder.1} parent=59 // pred_fallthru
        _
    $region60: #{basic_motion_encoder.1} parent=5 // pred_fallthru
      _
    %p396 = scmp.le.s32.totalorder 1, %s19
    %p397 = scmp.lt.s32.totalorder %s19, 3
    %p398 = pnand %p396, %p397
    %p399 = pneg %p398
    // Predicated region
    $region69: #{basic_motion_encoder.1} parent=5 // pred_check
      _
    $region70: #{basic_motion_encoder.1} parent=5 // pred_check_branch
      %401 = sbr.rel (%p398) target = $region72
    $region71: #{basic_motion_encoder.1} parent=5 // pred_region
      %s402 = ssub.s32 %s19, 1
      %p403 = scmp.lt.s32.totalorder %s24, 1
      %s404 = scalar_select %p403, %s24, 1
      %s405 = smul.addr %s404, 4
      %s406 = smul.addr %s405, 4
      %s407 = scalar_lea.vmem %s0, %s406
      %p408 = pneg %p45
      %p409 = pneg %p42
      %p410 = scmp.lt.s32.totalorder %s24, 1
      %s411 = scalar_select %p410, %s24, 1
      %s412 = smul.addr %s411, 4
      %s413 = smul.addr %s412, 8
      %s414 = scalar_lea.vmem %s1, %s413
      %p415 = pneg %p71
      %p416 = pneg %p68
      %p417 = pneg %p92
      %p418 = pneg %p89
      %p419 = pneg %p113
      %p420 = pneg %p110
      %p421 = pneg %p134
      %p422 = pneg %p131
      %p423 = pneg %p155
      %p424 = pneg %p152
      %p425 = pneg %p176
      %p426 = pneg %p173
      %p427 = pneg %p197
      %p428 = pneg %p194
      %p429 = pneg %p218
      %p430 = pneg %p215
      %p431 = pneg %p239
      %p432 = pneg %p236
      %p433 = pneg %p260
      %p434 = pneg %p257
      %p435 = pneg %p281
      %p436 = pneg %p278
      %p437 = pneg %p302
      %p438 = pneg %p299
      %p439 = pneg %p328
      %p440 = pneg %p325
      %p441 = scmp.lt.s32.totalorder %s24, 1
      %s442 = scalar_select %p441, %s24, 1
      %s443 = smul.addr %s442, 16
      %s444 = smul.addr %s443, 8
      %s445 = scalar_lea.vmem %s13, %s444
      %p446 = scmp.lt.s32.totalorder %s24, 1
      %s447 = scalar_select %p446, %s24, 1
      %s448 = smul.addr %s447, 4
      %s449 = smul.addr %s448, 4
      %s450 = scalar_lea.vmem %s0, %s449
      %p451 = scmp.lt.s32.totalorder %s24, 1
      %s452 = scalar_select %p451, %s24, 1
      %s453 = smul.addr %s452, 4
      %s454 = smul.addr %s453, 8
      %s455 = scalar_lea.vmem %s1, %s454
      %p456 = scmp.lt.s32.totalorder %s24, 1
      %s457 = scalar_select %p456, %s24, 1
      %s458 = smul.addr %s457, 16
      %s459 = smul.addr %s458, 8
      %s460 = scalar_lea.vmem %s13, %s459
      %v462 = vld [vmem:[%s2] sm:$0x7]
      %v463 = vld [vmem:[%s450] sm:$0xff]
      %v464 = vld [vmem:[%s450 + $0x8] sm:$0xff]
      %v465 = vld [vmem:[%s455] sm:$0xff]
      %v466 = vld [vmem:[%s455 + $0x8] sm:$0xff]
      %v467 = vld [vmem:[%s455 + $0x10] sm:$0xff]
      %v468 = vld [vmem:[%s455 + $0x18] sm:$0xff]
      %v469 = vld [vmem:[%s3] sm:$0xf]
      %v470 = vld [vmem:[%s3 + $0x4] sm:$0xf]
      %v471 = vld [vmem:[%s3 + $0x8] sm:$0xf]
      %v472 = vld [vmem:[%s3 + $0xc] sm:$0xf]
      %v473 = vld [vmem:[%s3 + $0x10] sm:$0xf]
      %v474 = vld [vmem:[%s3 + $0x14] sm:$0xf]
      %v475 = vld [vmem:[%s3 + $0x18] sm:$0xf]
      %v476 = vld [vmem:[%s3 + $0x1c] sm:$0xf]
      %v477 = vld [vmem:[%s4] sm:$0xff]
      %v478 = vld [vmem:[%s4 + $0x8] sm:$0xff]
      %v479 = vld [vmem:[%s4 + $0x10] sm:$0xff]
      %v480 = vld [vmem:[%s4 + $0x18] sm:$0xff]
      %v481 = vld [vmem:[%s4 + $0x20] sm:$0xff]
      %v482 = vld [vmem:[%s4 + $0x28] sm:$0xff]
      %v483 = vld [vmem:[%s4 + $0x30] sm:$0xff]
      %v484 = vld [vmem:[%s4 + $0x38] sm:$0xff]
      %486 = vset.pattern.permute.xlu0 0
      %487 = vperm.xlu0 %486, %v477
      %v488 = vpop.permute.xlu0 %487
      %491 = vset.pattern.permute.xlu0 0
      %492 = vperm.xlu0 %491, %v478
      %v493 = vpop.permute.xlu0 %492
      %496 = vset.pattern.permute.xlu0 0
      %497 = vperm.xlu0 %496, %v479
      %v498 = vpop.permute.xlu0 %497
      %501 = vset.pattern.permute.xlu0 0
      %502 = vperm.xlu0 %501, %v480
      %v503 = vpop.permute.xlu0 %502
      %506 = vset.pattern.permute.xlu0 0
      %507 = vperm.xlu0 %506, %v481
      %v508 = vpop.permute.xlu0 %507
      %511 = vset.pattern.permute.xlu0 0
      %512 = vperm.xlu0 %511, %v482
      %v513 = vpop.permute.xlu0 %512
      %516 = vset.pattern.permute.xlu0 0
      %517 = vperm.xlu0 %516, %v483
      %v518 = vpop.permute.xlu0 %517
      %521 = vset.pattern.permute.xlu0 0
      %522 = vperm.xlu0 %521, %v484
      %v523 = vpop.permute.xlu0 %522
      %v533 = vunpack.c.l.b16 %v469
      %v534 = vunpack.c.l.b16 %v470
      %v535 = vunpack.c.l.b16 %v471
      %v536 = vunpack.c.l.b16 %v472
      %v537 = vunpack.c.l.b16 %v473
      %v538 = vunpack.c.l.b16 %v474
      %v539 = vunpack.c.l.b16 %v475
      %v540 = vunpack.c.l.b16 %v476
      %v541 = vpack.c.b16 %v534, %v533
      %v542 = vpack.c.b16 %v536, %v535
      %v543 = vpack.c.b16 %v538, %v537
      %v544 = vpack.c.b16 %v540, %v539
      %v547 = vunpack.c.l.b16 %v463
      %v548 = vunpack.c.h.b16 %v463
      %v549 = vunpack.c.l.b16 %v464
      %v550 = vunpack.c.h.b16 %v464
      %v551 = vpack.c.b16 %v547, %v547
      %v552 = vpack.c.b16 %v548, %v548
      %v553 = vpack.c.b16 %v549, %v549
      %v554 = vpack.c.b16 %v550, %v550
      %555 = vrot.lane.b32.xlu0 %v551, 59
      %v556 = vpop.permute.xlu0 %555
      %557 = vrot.lane.b32.xlu0 %v552, 59
      %v558 = vpop.permute.xlu0 %557
      %559 = vrot.lane.b32.xlu0 %v553, 59
      %v560 = vpop.permute.xlu0 %559
      %561 = vrot.lane.b32.xlu0 %v554, 59
      %v562 = vpop.permute.xlu0 %561
      %vm563 = vcmask 482304
      %v564 = vsel %vm563, %v556, %v558
      %v565 = vsel %vm563, %v558, %v560
      %v566 = vsel %vm563, %v560, %v562
      %vm567 = vcmask 64512
      %v569 = vsel %vm567, %v541, 0
      %v572 = vsel %vm567, %v542, 0
      %v575 = vsel %vm567, %v543, 0
      %v578 = vsel %vm567, %v544, 0
      %vm580 = vcmask 1043456
      %v582 = vsel %vm580, %v564, 0
      %v585 = vsel %vm580, %v565, 0
      %v588 = vsel %vm580, %v566, 0
      %590 = vmatprep.subr.bf16.mxu0 0
      %591 = vmatpush1.bf16.msra.mxu0 0
      %592 = vmatprep.subr.bf16.mxu0 0
      %593 = vmatpush1.bf16.msra.mxu0 0
      %594 = vmatprep.subr.bf16.mxu0 0
      %595 = vmatpush1.bf16.msra.mxu0 0
      %596 = vmatprep.subr.bf16.mxu0 0
      %597 = vmatpush1.bf16.msra.mxu0 0
      %598 = vmatprep.subr.bf16.mxu0 0
      %599 = vmatpush1.bf16.msra.mxu0 0
      %600 = vmatprep.subr.bf16.mxu0 0
      %601 = vmatpush1.bf16.msra.mxu0 0
      %602 = vmatprep.subr.bf16.mxu0 0
      %603 = vmatpush1.bf16.msra.mxu0 0
      %604 = vmatprep.subr.bf16.mxu0 %v585
      %605 = vmatpush1.bf16.msra.mxu0 %v582
      %606 = vmatprep.subr.bf16.mxu0 0
      %607 = vmatpush2.bf16.msra.mxu0 0
      %608 = vmatprep.subr.bf16.mxu0 0
      %609 = vmatpush2.bf16.msra.mxu0 0
      %610 = vmatprep.subr.bf16.mxu0 0
      %611 = vmatpush2.bf16.msra.mxu0 0
      %612 = vmatprep.subr.bf16.mxu0 0
      %613 = vmatpush2.bf16.msra.mxu0 0
      %614 = vmatprep.subr.bf16.mxu0 0
      %615 = vmatpush2.bf16.msra.mxu0 0
      %616 = vmatprep.subr.bf16.mxu0 0
      %617 = vmatpush2.bf16.msra.mxu0 0
      %618 = vmatprep.subr.bf16.mxu0 0
      %619 = vmatpush2.bf16.msra.mxu0 0
      %620 = vmatprep.subr.bf16.mxu0 0
      %621 = vmatpush2.bf16.msra.mxu0 0
      %622 = vmatprep.mubr.bf16.mxu0 0
      %623 = vmatmul.mubr.bf16.gmra.mxu0 %v569
      %v624 = vpop.f32.mrf.mxu0
      %v625 = vadd.f32 %v488, %v624
      %v626 = vpop.f32.mrf.mxu0
      %v627 = vadd.f32 %v488, %v626
      %v628 = vpop.f32.mrf.mxu0
      %v629 = vadd.f32 %v493, %v628
      %v630 = vpop.f32.mrf.mxu0
      %v631 = vadd.f32 %v493, %v630
      %632 = vmatprep.mubr.bf16.mxu0 0
      %633 = vmatmul.mubr.bf16.gmra.mxu0 %v572
      %v634 = vpop.f32.mrf.mxu0
      %v635 = vadd.f32 %v498, %v634
      %v636 = vpop.f32.mrf.mxu0
      %v637 = vadd.f32 %v498, %v636
      %v638 = vpop.f32.mrf.mxu0
      %v639 = vadd.f32 %v503, %v638
      %v640 = vpop.f32.mrf.mxu0
      %v641 = vadd.f32 %v503, %v640
      %642 = vmatprep.mubr.bf16.mxu0 0
      %643 = vmatmul.mubr.bf16.gmra.mxu0 %v575
      %v644 = vpop.f32.mrf.mxu0
      %v645 = vadd.f32 %v508, %v644
      %v646 = vpop.f32.mrf.mxu0
      %v647 = vadd.f32 %v508, %v646
      %v648 = vpop.f32.mrf.mxu0
      %v649 = vadd.f32 %v513, %v648
      %v650 = vpop.f32.mrf.mxu0
      %v651 = vadd.f32 %v513, %v650
      %652 = vmatprep.mubr.bf16.mxu0 0
      %653 = vmatmul.mubr.bf16.gmra.mxu0 %v578
      %v654 = vpop.f32.mrf.mxu0
      %v655 = vadd.f32 %v518, %v654
      %v656 = vpop.f32.mrf.mxu0
      %v657 = vadd.f32 %v518, %v656
      %v658 = vpop.f32.mrf.mxu0
      %v659 = vadd.f32 %v523, %v658
      %v660 = vpop.f32.mrf.mxu0
      %v661 = vadd.f32 %v523, %v660
      %662 = vdwg.mxu0
      %663 = vmatprep.subr.bf16.mxu0 0
      %664 = vmatpush1.bf16.msra.mxu0 0
      %665 = vmatprep.subr.bf16.mxu0 0
      %666 = vmatpush1.bf16.msra.mxu0 0
      %667 = vmatprep.subr.bf16.mxu0 0
      %668 = vmatpush1.bf16.msra.mxu0 0
      %669 = vmatprep.subr.bf16.mxu0 0
      %670 = vmatpush1.bf16.msra.mxu0 0
      %671 = vmatprep.subr.bf16.mxu0 0
      %672 = vmatpush1.bf16.msra.mxu0 0
      %673 = vmatprep.subr.bf16.mxu0 0
      %674 = vmatpush1.bf16.msra.mxu0 0
      %675 = vmatprep.subr.bf16.mxu0 0
      %676 = vmatpush1.bf16.msra.mxu0 0
      %677 = vmatprep.subr.bf16.mxu0 0
      %678 = vmatpush1.bf16.msra.mxu0 %v588
      %679 = vmatprep.subr.bf16.mxu0 0
      %680 = vmatpush2.bf16.msra.mxu0 0
      %681 = vmatprep.subr.bf16.mxu0 0
      %682 = vmatpush2.bf16.msra.mxu0 0
      %683 = vmatprep.subr.bf16.mxu0 0
      %684 = vmatpush2.bf16.msra.mxu0 0
      %685 = vmatprep.subr.bf16.mxu0 0
      %686 = vmatpush2.bf16.msra.mxu0 0
      %687 = vmatprep.subr.bf16.mxu0 0
      %688 = vmatpush2.bf16.msra.mxu0 0
      %689 = vmatprep.subr.bf16.mxu0 0
      %690 = vmatpush2.bf16.msra.mxu0 0
      %691 = vmatprep.subr.bf16.mxu0 0
      %692 = vmatpush2.bf16.msra.mxu0 0
      %693 = vmatprep.subr.bf16.mxu0 0
      %694 = vmatpush2.bf16.msra.mxu0 0
      %695 = vmatprep.mubr.bf16.mxu0 0
      %696 = vmatmul.mubr.bf16.gmra.mxu0 %v569
      %v697 = vpop.f32.mrf.mxu0
      %v698 = vadd.f32 %v488, %v697
      %v699 = vpop.f32.mrf.mxu0
      %v700 = vpop.f32.mrf.mxu0
      %v701 = vadd.f32 %v493, %v700
      %v702 = vpop.f32.mrf.mxu0
      %703 = vmatprep.mubr.bf16.mxu0 0
      %704 = vmatmul.mubr.bf16.gmra.mxu0 %v572
      %v705 = vpop.f32.mrf.mxu0
      %v706 = vadd.f32 %v498, %v705
      %v707 = vpop.f32.mrf.mxu0
      %v708 = vpop.f32.mrf.mxu0
      %v709 = vadd.f32 %v503, %v708
      %v710 = vpop.f32.mrf.mxu0
      %711 = vmatprep.mubr.bf16.mxu0 0
      %712 = vmatmul.mubr.bf16.gmra.mxu0 %v575
      %v713 = vpop.f32.mrf.mxu0
      %v714 = vadd.f32 %v508, %v713
      %v715 = vpop.f32.mrf.mxu0
      %v716 = vpop.f32.mrf.mxu0
      %v717 = vadd.f32 %v513, %v716
      %v718 = vpop.f32.mrf.mxu0
      %719 = vmatprep.mubr.bf16.mxu0 0
      %720 = vmatmul.mubr.bf16.gmra.mxu0 %v578
      %v721 = vpop.f32.mrf.mxu0
      %v722 = vadd.f32 %v518, %v721
      %v723 = vpop.f32.mrf.mxu0
      %v724 = vpop.f32.mrf.mxu0
      %v725 = vadd.f32 %v523, %v724
      %v726 = vpop.f32.mrf.mxu0
      %727 = vdwg.mxu0
      %v728 = vmax.f32 %v625, 0.0
      %v729 = vmax.f32 %v627, 0.0
      %v730 = vmax.f32 %v698, 0.0
      %v731 = vmax.f32 %v629, 0.0
      %v732 = vmax.f32 %v631, 0.0
      %v733 = vmax.f32 %v701, 0.0
      %v734 = vmax.f32 %v635, 0.0
      %v735 = vmax.f32 %v637, 0.0
      %v736 = vmax.f32 %v706, 0.0
      %v737 = vmax.f32 %v639, 0.0
      %v738 = vmax.f32 %v641, 0.0
      %v739 = vmax.f32 %v709, 0.0
      %v740 = vmax.f32 %v645, 0.0
      %v741 = vmax.f32 %v647, 0.0
      %v742 = vmax.f32 %v714, 0.0
      %v743 = vmax.f32 %v649, 0.0
      %v744 = vmax.f32 %v651, 0.0
      %v745 = vmax.f32 %v717, 0.0
      %v746 = vmax.f32 %v655, 0.0
      %v747 = vmax.f32 %v657, 0.0
      %v748 = vmax.f32 %v722, 0.0
      %v749 = vmax.f32 %v659, 0.0
      %v750 = vmax.f32 %v661, 0.0
      %v751 = vmax.f32 %v725, 0.0
      %v753 = vlaneseq
      %v754 = vshrl.u32 %v753, 7
      %v755 = vsub.s32 0, %v754
      %v756 = vrot.slane %v462, %v755
      %v757 = vlaneseq
      %v758 = vshrl.u32 %v757, 7
      %v759 = vsub.s32 1, %v758
      %v760 = vrot.slane %v462, %v759
      %v761 = vlaneseq
      %v762 = vshrl.u32 %v761, 7
      %v763 = vsub.s32 2, %v762
      %v764 = vrot.slane %v462, %v763
      %v768 = vmul.f32 %v728, %v756
      %v769 = vmul.f32 %v729, %v760
      %v770 = vmul.f32 %v730, %v764
      %v771 = vmul.f32 %v731, %v756
      %v772 = vmul.f32 %v732, %v760
      %v773 = vmul.f32 %v733, %v764
      %v774 = vmul.f32 %v734, %v756
      %v775 = vmul.f32 %v735, %v760
      %v776 = vmul.f32 %v736, %v764
      %v777 = vmul.f32 %v737, %v756
      %v778 = vmul.f32 %v738, %v760
      %v779 = vmul.f32 %v739, %v764
      %v780 = vmul.f32 %v740, %v756
      %v781 = vmul.f32 %v741, %v760
      %v782 = vmul.f32 %v742, %v764
      %v783 = vmul.f32 %v743, %v756
      %v784 = vmul.f32 %v744, %v760
      %v785 = vmul.f32 %v745, %v764
      %v786 = vmul.f32 %v746, %v756
      %v787 = vmul.f32 %v747, %v760
      %v788 = vmul.f32 %v748, %v764
      %v789 = vmul.f32 %v749, %v756
      %v790 = vmul.f32 %v750, %v760
      %v791 = vmul.f32 %v751, %v764
      %v792 = vpack.c.bf16 %v771, %v768
      %v793 = vpack.c.bf16 %v772, %v769
      %v794 = vpack.c.bf16 %v773, %v770
      %v795 = vpack.c.bf16 %v777, %v774
      %v796 = vpack.c.bf16 %v778, %v775
      %v797 = vpack.c.bf16 %v779, %v776
      %v798 = vpack.c.bf16 %v783, %v780
      %v799 = vpack.c.bf16 %v784, %v781
      %v800 = vpack.c.bf16 %v785, %v782
      %v801 = vpack.c.bf16 %v789, %v786
      %v802 = vpack.c.bf16 %v790, %v787
      %v803 = vpack.c.bf16 %v791, %v788
      %816 = vrot.lane.b32.xlu0 %v792, 69
      %v817 = vpop.permute.xlu0 %816
      %818 = vrot.lane.b32.xlu0 %v793, 69
      %v819 = vpop.permute.xlu0 %818
      %820 = vrot.lane.b32.xlu0 %v794, 69
      %v821 = vpop.permute.xlu0 %820
      %822 = vrot.lane.b32.xlu0 %v795, 69
      %v823 = vpop.permute.xlu0 %822
      %824 = vrot.lane.b32.xlu0 %v796, 69
      %v825 = vpop.permute.xlu0 %824
      %826 = vrot.lane.b32.xlu0 %v797, 69
      %v827 = vpop.permute.xlu0 %826
      %828 = vrot.lane.b32.xlu0 %v798, 69
      %v829 = vpop.permute.xlu0 %828
      %830 = vrot.lane.b32.xlu0 %v799, 69
      %v831 = vpop.permute.xlu0 %830
      %832 = vrot.lane.b32.xlu0 %v800, 69
      %v833 = vpop.permute.xlu0 %832
      %834 = vrot.lane.b32.xlu0 %v801, 69
      %v835 = vpop.permute.xlu0 %834
      %836 = vrot.lane.b32.xlu0 %v802, 69
      %v837 = vpop.permute.xlu0 %836
      %838 = vrot.lane.b32.xlu0 %v803, 69
      %v839 = vpop.permute.xlu0 %838
      %vm840 = vcmask 564224
      %v841 = vsel %vm840, %v817, %v819
      %v842 = vsel %vm840, %v819, %v821
      %v843 = vsel %vm840, %v823, %v825
      %v844 = vsel %vm840, %v825, %v827
      %v845 = vsel %vm840, %v829, %v831
      %v846 = vsel %vm840, %v831, %v833
      %v847 = vsel %vm840, %v835, %v837
      %v848 = vsel %vm840, %v837, %v839
      %vm849 = vcmask 564224
      %v852 = vsel %vm849, 0, %v817
      %v854 = vsel %vm849, 0, %v823
      %v856 = vsel %vm849, 0, %v829
      %v858 = vsel %vm849, 0, %v835
      %vm859 = vcmask 302080
      %v861 = vsel %vm859, %v821, 0
      %v863 = vsel %vm859, %v827, 0
      %v865 = vsel %vm859, %v833, 0
      %v867 = vsel %vm859, %v839, 0
      %876 = vrot.lane.b32.xlu0 %v852, 127
      %v877 = vpop.permute.xlu0 %876
      %878 = vrot.lane.b32.xlu0 %v841, 127
      %v879 = vpop.permute.xlu0 %878
      %880 = vrot.lane.b32.xlu0 %v842, 127
      %v881 = vpop.permute.xlu0 %880
      %882 = vrot.lane.b32.xlu0 %v861, 127
      %v883 = vpop.permute.xlu0 %882
      %884 = vrot.lane.b32.xlu0 %v854, 127
      %v885 = vpop.permute.xlu0 %884
      %886 = vrot.lane.b32.xlu0 %v843, 127
      %v887 = vpop.permute.xlu0 %886
      %888 = vrot.lane.b32.xlu0 %v844, 127
      %v889 = vpop.permute.xlu0 %888
      %890 = vrot.lane.b32.xlu0 %v863, 127
      %v891 = vpop.permute.xlu0 %890
      %892 = vrot.lane.b32.xlu0 %v856, 127
      %v893 = vpop.permute.xlu0 %892
      %894 = vrot.lane.b32.xlu0 %v845, 127
      %v895 = vpop.permute.xlu0 %894
      %896 = vrot.lane.b32.xlu0 %v846, 127
      %v897 = vpop.permute.xlu0 %896
      %898 = vrot.lane.b32.xlu0 %v865, 127
      %v899 = vpop.permute.xlu0 %898
      %900 = vrot.lane.b32.xlu0 %v858, 127
      %v901 = vpop.permute.xlu0 %900
      %902 = vrot.lane.b32.xlu0 %v847, 127
      %v903 = vpop.permute.xlu0 %902
      %904 = vrot.lane.b32.xlu0 %v848, 127
      %v905 = vpop.permute.xlu0 %904
      %906 = vrot.lane.b32.xlu0 %v867, 127
      %v907 = vpop.permute.xlu0 %906
      %vm908 = vcmask 1039360
      %v909 = vsel %vm908, %v877, %v879
      %v910 = vsel %vm908, %v879, %v881
      %v911 = vsel %vm908, %v881, %v883
      %v912 = vsel %vm908, %v885, %v887
      %v913 = vsel %vm908, %v887, %v889
      %v914 = vsel %vm908, %v889, %v891
      %v915 = vsel %vm908, %v893, %v895
      %v916 = vsel %vm908, %v895, %v897
      %v917 = vsel %vm908, %v897, %v899
      %v918 = vsel %vm908, %v901, %v903
      %v919 = vsel %vm908, %v903, %v905
      %v920 = vsel %vm908, %v905, %v907
      %921 = vrot.lane.b32.xlu0 %v852, 126
      %v922 = vpop.permute.xlu0 %921
      %923 = vrot.lane.b32.xlu0 %v841, 126
      %v924 = vpop.permute.xlu0 %923
      %925 = vrot.lane.b32.xlu0 %v842, 126
      %v926 = vpop.permute.xlu0 %925
      %927 = vrot.lane.b32.xlu0 %v861, 126
      %v928 = vpop.permute.xlu0 %927
      %929 = vrot.lane.b32.xlu0 %v854, 126
      %v930 = vpop.permute.xlu0 %929
      %931 = vrot.lane.b32.xlu0 %v843, 126
      %v932 = vpop.permute.xlu0 %931
      %933 = vrot.lane.b32.xlu0 %v844, 126
      %v934 = vpop.permute.xlu0 %933
      %935 = vrot.lane.b32.xlu0 %v863, 126
      %v936 = vpop.permute.xlu0 %935
      %937 = vrot.lane.b32.xlu0 %v856, 126
      %v938 = vpop.permute.xlu0 %937
      %939 = vrot.lane.b32.xlu0 %v845, 126
      %v940 = vpop.permute.xlu0 %939
      %941 = vrot.lane.b32.xlu0 %v846, 126
      %v942 = vpop.permute.xlu0 %941
      %943 = vrot.lane.b32.xlu0 %v865, 126
      %v944 = vpop.permute.xlu0 %943
      %945 = vrot.lane.b32.xlu0 %v858, 126
      %v946 = vpop.permute.xlu0 %945
      %947 = vrot.lane.b32.xlu0 %v847, 126
      %v948 = vpop.permute.xlu0 %947
      %949 = vrot.lane.b32.xlu0 %v848, 126
      %v950 = vpop.permute.xlu0 %949
      %951 = vrot.lane.b32.xlu0 %v867, 126
      %v952 = vpop.permute.xlu0 %951
      %vm953 = vcmask 1031168
      %v954 = vsel %vm953, %v922, %v924
      %v955 = vsel %vm953, %v924, %v926
      %v956 = vsel %vm953, %v926, %v928
      %v957 = vsel %vm953, %v930, %v932
      %v958 = vsel %vm953, %v932, %v934
      %v959 = vsel %vm953, %v934, %v936
      %v960 = vsel %vm953, %v938, %v940
      %v961 = vsel %vm953, %v940, %v942
      %v962 = vsel %vm953, %v942, %v944
      %v963 = vsel %vm953, %v946, %v948
      %v964 = vsel %vm953, %v948, %v950
      %v965 = vsel %vm953, %v950, %v952
      %966 = vrot.lane.b32.xlu0 %v852, 106
      %v967 = vpop.permute.xlu0 %966
      %968 = vrot.lane.b32.xlu0 %v841, 106
      %v969 = vpop.permute.xlu0 %968
      %970 = vrot.lane.b32.xlu0 %v842, 106
      %v971 = vpop.permute.xlu0 %970
      %972 = vrot.lane.b32.xlu0 %v861, 106
      %v973 = vpop.permute.xlu0 %972
      %974 = vrot.lane.b32.xlu0 %v854, 106
      %v975 = vpop.permute.xlu0 %974
      %976 = vrot.lane.b32.xlu0 %v843, 106
      %v977 = vpop.permute.xlu0 %976
      %978 = vrot.lane.b32.xlu0 %v844, 106
      %v979 = vpop.permute.xlu0 %978
      %980 = vrot.lane.b32.xlu0 %v863, 106
      %v981 = vpop.permute.xlu0 %980
      %982 = vrot.lane.b32.xlu0 %v856, 106
      %v983 = vpop.permute.xlu0 %982
      %984 = vrot.lane.b32.xlu0 %v845, 106
      %v985 = vpop.permute.xlu0 %984
      %986 = vrot.lane.b32.xlu0 %v846, 106
      %v987 = vpop.permute.xlu0 %986
      %988 = vrot.lane.b32.xlu0 %v865, 106
      %v989 = vpop.permute.xlu0 %988
      %990 = vrot.lane.b32.xlu0 %v858, 106
      %v991 = vpop.permute.xlu0 %990
      %992 = vrot.lane.b32.xlu0 %v847, 106
      %v993 = vpop.permute.xlu0 %992
      %994 = vrot.lane.b32.xlu0 %v848, 106
      %v995 = vpop.permute.xlu0 %994
      %996 = vrot.lane.b32.xlu0 %v867, 106
      %v997 = vpop.permute.xlu0 %996
      %vm998 = vcmask 867328
      %v999 = vsel %vm998, %v967, %v969
      %v1000 = vsel %vm998, %v969, %v971
      %v1001 = vsel %vm998, %v971, %v973
      %v1002 = vsel %vm998, %v975, %v977
      %v1003 = vsel %vm998, %v977, %v979
      %v1004 = vsel %vm998, %v979, %v981
      %v1005 = vsel %vm998, %v983, %v985
      %v1006 = vsel %vm998, %v985, %v987
      %v1007 = vsel %vm998, %v987, %v989
      %v1008 = vsel %vm998, %v991, %v993
      %v1009 = vsel %vm998, %v993, %v995
      %v1010 = vsel %vm998, %v995, %v997
      %1011 = vrot.lane.b32.xlu0 %v852, 105
      %v1012 = vpop.permute.xlu0 %1011
      %1013 = vrot.lane.b32.xlu0 %v841, 105
      %v1014 = vpop.permute.xlu0 %1013
      %1015 = vrot.lane.b32.xlu0 %v842, 105
      %v1016 = vpop.permute.xlu0 %1015
      %1017 = vrot.lane.b32.xlu0 %v861, 105
      %v1018 = vpop.permute.xlu0 %1017
      %1019 = vrot.lane.b32.xlu0 %v854, 105
      %v1020 = vpop.permute.xlu0 %1019
      %1021 = vrot.lane.b32.xlu0 %v843, 105
      %v1022 = vpop.permute.xlu0 %1021
      %1023 = vrot.lane.b32.xlu0 %v844, 105
      %v1024 = vpop.permute.xlu0 %1023
      %1025 = vrot.lane.b32.xlu0 %v863, 105
      %v1026 = vpop.permute.xlu0 %1025
      %1027 = vrot.lane.b32.xlu0 %v856, 105
      %v1028 = vpop.permute.xlu0 %1027
      %1029 = vrot.lane.b32.xlu0 %v845, 105
      %v1030 = vpop.permute.xlu0 %1029
      %1031 = vrot.lane.b32.xlu0 %v846, 105
      %v1032 = vpop.permute.xlu0 %1031
      %1033 = vrot.lane.b32.xlu0 %v865, 105
      %v1034 = vpop.permute.xlu0 %1033
      %1035 = vrot.lane.b32.xlu0 %v858, 105
      %v1036 = vpop.permute.xlu0 %1035
      %1037 = vrot.lane.b32.xlu0 %v847, 105
      %v1038 = vpop.permute.xlu0 %1037
      %1039 = vrot.lane.b32.xlu0 %v848, 105
      %v1040 = vpop.permute.xlu0 %1039
      %1041 = vrot.lane.b32.xlu0 %v867, 105
      %v1042 = vpop.permute.xlu0 %1041
      %vm1043 = vcmask 859136
      %v1044 = vsel %vm1043, %v1012, %v1014
      %v1045 = vsel %vm1043, %v1014, %v1016
      %v1046 = vsel %vm1043, %v1016, %v1018
      %v1047 = vsel %vm1043, %v1020, %v1022
      %v1048 = vsel %vm1043, %v1022, %v1024
      %v1049 = vsel %vm1043, %v1024, %v1026
      %v1050 = vsel %vm1043, %v1028, %v1030
      %v1051 = vsel %vm1043, %v1030, %v1032
      %v1052 = vsel %vm1043, %v1032, %v1034
      %v1053 = vsel %vm1043, %v1036, %v1038
      %v1054 = vsel %vm1043, %v1038, %v1040
      %v1055 = vsel %vm1043, %v1040, %v1042
      %1056 = vrot.lane.b32.xlu0 %v852, 104
      %v1057 = vpop.permute.xlu0 %1056
      %1058 = vrot.lane.b32.xlu0 %v841, 104
      %v1059 = vpop.permute.xlu0 %1058
      %1060 = vrot.lane.b32.xlu0 %v842, 104
      %v1061 = vpop.permute.xlu0 %1060
      %1062 = vrot.lane.b32.xlu0 %v861, 104
      %v1063 = vpop.permute.xlu0 %1062
      %1064 = vrot.lane.b32.xlu0 %v854, 104
      %v1065 = vpop.permute.xlu0 %1064
      %1066 = vrot.lane.b32.xlu0 %v843, 104
      %v1067 = vpop.permute.xlu0 %1066
      %1068 = vrot.lane.b32.xlu0 %v844, 104
      %v1069 = vpop.permute.xlu0 %1068
      %1070 = vrot.lane.b32.xlu0 %v863, 104
      %v1071 = vpop.permute.xlu0 %1070
      %1072 = vrot.lane.b32.xlu0 %v856, 104
      %v1073 = vpop.permute.xlu0 %1072
      %1074 = vrot.lane.b32.xlu0 %v845, 104
      %v1075 = vpop.permute.xlu0 %1074
      %1076 = vrot.lane.b32.xlu0 %v846, 104
      %v1077 = vpop.permute.xlu0 %1076
      %1078 = vrot.lane.b32.xlu0 %v865, 104
      %v1079 = vpop.permute.xlu0 %1078
      %1080 = vrot.lane.b32.xlu0 %v858, 104
      %v1081 = vpop.permute.xlu0 %1080
      %1082 = vrot.lane.b32.xlu0 %v847, 104
      %v1083 = vpop.permute.xlu0 %1082
      %1084 = vrot.lane.b32.xlu0 %v848, 104
      %v1085 = vpop.permute.xlu0 %1084
      %1086 = vrot.lane.b32.xlu0 %v867, 104
      %v1087 = vpop.permute.xlu0 %1086
      %vm1088 = vcmask 850944
      %v1089 = vsel %vm1088, %v1057, %v1059
      %v1090 = vsel %vm1088, %v1059, %v1061
      %v1091 = vsel %vm1088, %v1061, %v1063
      %v1092 = vsel %vm1088, %v1065, %v1067
      %v1093 = vsel %vm1088, %v1067, %v1069
      %v1094 = vsel %vm1088, %v1069, %v1071
      %v1095 = vsel %vm1088, %v1073, %v1075
      %v1096 = vsel %vm1088, %v1075, %v1077
      %v1097 = vsel %vm1088, %v1077, %v1079
      %v1098 = vsel %vm1088, %v1081, %v1083
      %v1099 = vsel %vm1088, %v1083, %v1085
      %v1100 = vsel %vm1088, %v1085, %v1087
      %1101 = vrot.lane.b32.xlu0 %v852, 84
      %v1102 = vpop.permute.xlu0 %1101
      %1103 = vrot.lane.b32.xlu0 %v841, 84
      %v1104 = vpop.permute.xlu0 %1103
      %1105 = vrot.lane.b32.xlu0 %v842, 84
      %v1106 = vpop.permute.xlu0 %1105
      %1107 = vrot.lane.b32.xlu0 %v861, 84
      %v1108 = vpop.permute.xlu0 %1107
      %1109 = vrot.lane.b32.xlu0 %v854, 84
      %v1110 = vpop.permute.xlu0 %1109
      %1111 = vrot.lane.b32.xlu0 %v843, 84
      %v1112 = vpop.permute.xlu0 %1111
      %1113 = vrot.lane.b32.xlu0 %v844, 84
      %v1114 = vpop.permute.xlu0 %1113
      %1115 = vrot.lane.b32.xlu0 %v863, 84
      %v1116 = vpop.permute.xlu0 %1115
      %1117 = vrot.lane.b32.xlu0 %v856, 84
      %v1118 = vpop.permute.xlu0 %1117
      %1119 = vrot.lane.b32.xlu0 %v845, 84
      %v1120 = vpop.permute.xlu0 %1119
      %1121 = vrot.lane.b32.xlu0 %v846, 84
      %v1122 = vpop.permute.xlu0 %1121
      %1123 = vrot.lane.b32.xlu0 %v865, 84
      %v1124 = vpop.permute.xlu0 %1123
      %1125 = vrot.lane.b32.xlu0 %v858, 84
      %v1126 = vpop.permute.xlu0 %1125
      %1127 = vrot.lane.b32.xlu0 %v847, 84
      %v1128 = vpop.permute.xlu0 %1127
      %1129 = vrot.lane.b32.xlu0 %v848, 84
      %v1130 = vpop.permute.xlu0 %1129
      %1131 = vrot.lane.b32.xlu0 %v867, 84
      %v1132 = vpop.permute.xlu0 %1131
      %vm1133 = vcmask 687104
      %v1134 = vsel %vm1133, %v1102, %v1104
      %v1135 = vsel %vm1133, %v1104, %v1106
      %v1136 = vsel %vm1133, %v1106, %v1108
      %v1137 = vsel %vm1133, %v1110, %v1112
      %v1138 = vsel %vm1133, %v1112, %v1114
      %v1139 = vsel %vm1133, %v1114, %v1116
      %v1140 = vsel %vm1133, %v1118, %v1120
      %v1141 = vsel %vm1133, %v1120, %v1122
      %v1142 = vsel %vm1133, %v1122, %v1124
      %v1143 = vsel %vm1133, %v1126, %v1128
      %v1144 = vsel %vm1133, %v1128, %v1130
      %v1145 = vsel %vm1133, %v1130, %v1132
      %1146 = vrot.lane.b32.xlu0 %v852, 83
      %v1147 = vpop.permute.xlu0 %1146
      %1148 = vrot.lane.b32.xlu0 %v841, 83
      %v1149 = vpop.permute.xlu0 %1148
      %1150 = vrot.lane.b32.xlu0 %v842, 83
      %v1151 = vpop.permute.xlu0 %1150
      %1152 = vrot.lane.b32.xlu0 %v861, 83
      %v1153 = vpop.permute.xlu0 %1152
      %1154 = vrot.lane.b32.xlu0 %v854, 83
      %v1155 = vpop.permute.xlu0 %1154
      %1156 = vrot.lane.b32.xlu0 %v843, 83
      %v1157 = vpop.permute.xlu0 %1156
      %1158 = vrot.lane.b32.xlu0 %v844, 83
      %v1159 = vpop.permute.xlu0 %1158
      %1160 = vrot.lane.b32.xlu0 %v863, 83
      %v1161 = vpop.permute.xlu0 %1160
      %1162 = vrot.lane.b32.xlu0 %v856, 83
      %v1163 = vpop.permute.xlu0 %1162
      %1164 = vrot.lane.b32.xlu0 %v845, 83
      %v1165 = vpop.permute.xlu0 %1164
      %1166 = vrot.lane.b32.xlu0 %v846, 83
      %v1167 = vpop.permute.xlu0 %1166
      %1168 = vrot.lane.b32.xlu0 %v865, 83
      %v1169 = vpop.permute.xlu0 %1168
      %1170 = vrot.lane.b32.xlu0 %v858, 83
      %v1171 = vpop.permute.xlu0 %1170
      %1172 = vrot.lane.b32.xlu0 %v847, 83
      %v1173 = vpop.permute.xlu0 %1172
      %1174 = vrot.lane.b32.xlu0 %v848, 83
      %v1175 = vpop.permute.xlu0 %1174
      %1176 = vrot.lane.b32.xlu0 %v867, 83
      %v1177 = vpop.permute.xlu0 %1176
      %vm1178 = vcmask 678912
      %v1179 = vsel %vm1178, %v1147, %v1149
      %v1180 = vsel %vm1178, %v1149, %v1151
      %v1181 = vsel %vm1178, %v1151, %v1153
      %v1182 = vsel %vm1178, %v1155, %v1157
      %v1183 = vsel %vm1178, %v1157, %v1159
      %v1184 = vsel %vm1178, %v1159, %v1161
      %v1185 = vsel %vm1178, %v1163, %v1165
      %v1186 = vsel %vm1178, %v1165, %v1167
      %v1187 = vsel %vm1178, %v1167, %v1169
      %v1188 = vsel %vm1178, %v1171, %v1173
      %v1189 = vsel %vm1178, %v1173, %v1175
      %v1190 = vsel %vm1178, %v1175, %v1177
      %1191 = vrot.lane.b32.xlu0 %v852, 82
      %v1192 = vpop.permute.xlu0 %1191
      %1193 = vrot.lane.b32.xlu0 %v841, 82
      %v1194 = vpop.permute.xlu0 %1193
      %1195 = vrot.lane.b32.xlu0 %v842, 82
      %v1196 = vpop.permute.xlu0 %1195
      %1197 = vrot.lane.b32.xlu0 %v861, 82
      %v1198 = vpop.permute.xlu0 %1197
      %1199 = vrot.lane.b32.xlu0 %v854, 82
      %v1200 = vpop.permute.xlu0 %1199
      %1201 = vrot.lane.b32.xlu0 %v843, 82
      %v1202 = vpop.permute.xlu0 %1201
      %1203 = vrot.lane.b32.xlu0 %v844, 82
      %v1204 = vpop.permute.xlu0 %1203
      %1205 = vrot.lane.b32.xlu0 %v863, 82
      %v1206 = vpop.permute.xlu0 %1205
      %1207 = vrot.lane.b32.xlu0 %v856, 82
      %v1208 = vpop.permute.xlu0 %1207
      %1209 = vrot.lane.b32.xlu0 %v845, 82
      %v1210 = vpop.permute.xlu0 %1209
      %1211 = vrot.lane.b32.xlu0 %v846, 82
      %v1212 = vpop.permute.xlu0 %1211
      %1213 = vrot.lane.b32.xlu0 %v865, 82
      %v1214 = vpop.permute.xlu0 %1213
      %1215 = vrot.lane.b32.xlu0 %v858, 82
      %v1216 = vpop.permute.xlu0 %1215
      %1217 = vrot.lane.b32.xlu0 %v847, 82
      %v1218 = vpop.permute.xlu0 %1217
      %1219 = vrot.lane.b32.xlu0 %v848, 82
      %v1220 = vpop.permute.xlu0 %1219
      %1221 = vrot.lane.b32.xlu0 %v867, 82
      %v1222 = vpop.permute.xlu0 %1221
      %vm1223 = vcmask 670720
      %v1224 = vsel %vm1223, %v1192, %v1194
      %v1225 = vsel %vm1223, %v1194, %v1196
      %v1226 = vsel %vm1223, %v1196, %v1198
      %v1227 = vsel %vm1223, %v1200, %v1202
      %v1228 = vsel %vm1223, %v1202, %v1204
      %v1229 = vsel %vm1223, %v1204, %v1206
      %v1230 = vsel %vm1223, %v1208, %v1210
      %v1231 = vsel %vm1223, %v1210, %v1212
      %v1232 = vsel %vm1223, %v1212, %v1214
      %v1233 = vsel %vm1223, %v1216, %v1218
      %v1234 = vsel %vm1223, %v1218, %v1220
      %v1235 = vsel %vm1223, %v1220, %v1222
      %v1236 = vld [vmem:[%s5] sm:$0xff]
      %v1237 = vld [vmem:[%s5 + $0x8] sm:$0xff]
      %v1238 = vld [vmem:[%s5 + $0x10] sm:$0xf]
      %v1239 = vld [vmem:[%s5 + $0x14] sm:$0xff]
      %v1240 = vld [vmem:[%s5 + $0x1c] sm:$0xff]
      %v1241 = vld [vmem:[%s5 + $0x24] sm:$0xf]
      %v1242 = vld [vmem:[%s5 + $0x28] sm:$0xff]
      %v1243 = vld [vmem:[%s5 + $0x30] sm:$0xff]
      %v1244 = vld [vmem:[%s5 + $0x38] sm:$0xf]
      %v1245 = vld [vmem:[%s5 + $0x3c] sm:$0xff]
      %v1246 = vld [vmem:[%s5 + $0x44] sm:$0xff]
      %v1247 = vld [vmem:[%s5 + $0x4c] sm:$0xf]
      %v1248 = vld [vmem:[%s5 + $0x50] sm:$0xff]
      %v1249 = vld [vmem:[%s5 + $0x58] sm:$0xff]
      %v1250 = vld [vmem:[%s5 + $0x60] sm:$0xf]
      %v1251 = vld [vmem:[%s5 + $0x64] sm:$0xff]
      %v1252 = vld [vmem:[%s5 + $0x6c] sm:$0xff]
      %v1253 = vld [vmem:[%s5 + $0x74] sm:$0xf]
      %v1254 = vld [vmem:[%s6] sm:$0xff]
      %v1255 = vld [vmem:[%s6 + $0x8] sm:$0xff]
      %v1256 = vld [vmem:[%s6 + $0x10] sm:$0xff]
      %v1257 = vld [vmem:[%s6 + $0x18] sm:$0xff]
      %v1258 = vld [vmem:[%s6 + $0x20] sm:$0xff]
      %v1259 = vld [vmem:[%s6 + $0x28] sm:$0xff]
      %1261 = vset.pattern.permute.xlu0 0
      %1262 = vperm.xlu0 %1261, %v1254
      %v1263 = vpop.permute.xlu0 %1262
      %1266 = vset.pattern.permute.xlu0 0
      %1267 = vperm.xlu0 %1266, %v1255
      %v1268 = vpop.permute.xlu0 %1267
      %1271 = vset.pattern.permute.xlu0 0
      %1272 = vperm.xlu0 %1271, %v1256
      %v1273 = vpop.permute.xlu0 %1272
      %1276 = vset.pattern.permute.xlu0 0
      %1277 = vperm.xlu0 %1276, %v1257
      %v1278 = vpop.permute.xlu0 %1277
      %1281 = vset.pattern.permute.xlu0 0
      %1282 = vperm.xlu0 %1281, %v1258
      %v1283 = vpop.permute.xlu0 %1282
      %1286 = vset.pattern.permute.xlu0 0
      %1287 = vperm.xlu0 %1286, %v1259
      %v1288 = vpop.permute.xlu0 %1287
      %v1308 = vunpack.c.l.b16 %v1236
      %v1309 = vunpack.c.h.b16 %v1236
      %v1310 = vunpack.c.l.b16 %v1237
      %v1311 = vunpack.c.h.b16 %v1237
      %v1312 = vunpack.c.l.b16 %v1238
      %v1313 = vunpack.c.l.b16 %v1239
      %v1314 = vunpack.c.h.b16 %v1239
      %v1315 = vunpack.c.l.b16 %v1240
      %v1316 = vunpack.c.h.b16 %v1240
      %v1317 = vunpack.c.l.b16 %v1241
      %v1318 = vunpack.c.l.b16 %v1242
      %v1319 = vunpack.c.h.b16 %v1242
      %v1320 = vunpack.c.l.b16 %v1243
      %v1321 = vunpack.c.h.b16 %v1243
      %v1322 = vunpack.c.l.b16 %v1244
      %v1323 = vunpack.c.l.b16 %v1245
      %v1324 = vunpack.c.h.b16 %v1245
      %v1325 = vunpack.c.l.b16 %v1246
      %v1326 = vunpack.c.h.b16 %v1246
      %v1327 = vunpack.c.l.b16 %v1247
      %v1328 = vunpack.c.l.b16 %v1248
      %v1329 = vunpack.c.h.b16 %v1248
      %v1330 = vunpack.c.l.b16 %v1249
      %v1331 = vunpack.c.h.b16 %v1249
      %v1332 = vunpack.c.l.b16 %v1250
      %v1333 = vunpack.c.l.b16 %v1251
      %v1334 = vunpack.c.h.b16 %v1251
      %v1335 = vunpack.c.l.b16 %v1252
      %v1336 = vunpack.c.h.b16 %v1252
      %v1337 = vunpack.c.l.b16 %v1253
      %v1338 = vpack.c.b16 %v1313, %v1308
      %v1339 = vpack.c.b16 %v1314, %v1309
      %v1340 = vpack.c.b16 %v1315, %v1310
      %v1341 = vpack.c.b16 %v1316, %v1311
      %v1342 = vpack.c.b16 %v1317, %v1312
      %v1343 = vpack.c.b16 %v1323, %v1318
      %v1344 = vpack.c.b16 %v1324, %v1319
      %v1345 = vpack.c.b16 %v1325, %v1320
      %v1346 = vpack.c.b16 %v1326, %v1321
      %v1347 = vpack.c.b16 %v1327, %v1322
      %v1348 = vpack.c.b16 %v1333, %v1328
      %v1349 = vpack.c.b16 %v1334, %v1329
      %v1350 = vpack.c.b16 %v1335, %v1330
      %v1351 = vpack.c.b16 %v1336, %v1331
      %v1352 = vpack.c.b16 %v1337, %v1332
      %1365 = vrot.lane.b32.xlu0 %v909, 82
      %v1366 = vpop.permute.xlu0 %1365
      %1367 = vrot.lane.b32.xlu0 %v910, 82
      %v1368 = vpop.permute.xlu0 %1367
      %1369 = vrot.lane.b32.xlu0 %v911, 82
      %v1370 = vpop.permute.xlu0 %1369
      %1371 = vrot.lane.b32.xlu0 %v883, 82
      %v1372 = vpop.permute.xlu0 %1371
      %1373 = vrot.lane.b32.xlu0 %v912, 82
      %v1374 = vpop.permute.xlu0 %1373
      %1375 = vrot.lane.b32.xlu0 %v913, 82
      %v1376 = vpop.permute.xlu0 %1375
      %1377 = vrot.lane.b32.xlu0 %v914, 82
      %v1378 = vpop.permute.xlu0 %1377
      %1379 = vrot.lane.b32.xlu0 %v891, 82
      %v1380 = vpop.permute.xlu0 %1379
      %1381 = vrot.lane.b32.xlu0 %v915, 82
      %v1382 = vpop.permute.xlu0 %1381
      %1383 = vrot.lane.b32.xlu0 %v916, 82
      %v1384 = vpop.permute.xlu0 %1383
      %1385 = vrot.lane.b32.xlu0 %v917, 82
      %v1386 = vpop.permute.xlu0 %1385
      %1387 = vrot.lane.b32.xlu0 %v899, 82
      %v1388 = vpop.permute.xlu0 %1387
      %1389 = vrot.lane.b32.xlu0 %v918, 82
      %v1390 = vpop.permute.xlu0 %1389
      %1391 = vrot.lane.b32.xlu0 %v919, 82
      %v1392 = vpop.permute.xlu0 %1391
      %1393 = vrot.lane.b32.xlu0 %v920, 82
      %v1394 = vpop.permute.xlu0 %1393
      %1395 = vrot.lane.b32.xlu0 %v907, 82
      %v1396 = vpop.permute.xlu0 %1395
      %1397 = vrot.lane.b32.xlu0 %v954, 82
      %v1398 = vpop.permute.xlu0 %1397
      %1399 = vrot.lane.b32.xlu0 %v955, 82
      %v1400 = vpop.permute.xlu0 %1399
      %1401 = vrot.lane.b32.xlu0 %v956, 82
      %v1402 = vpop.permute.xlu0 %1401
      %1403 = vrot.lane.b32.xlu0 %v928, 82
      %v1404 = vpop.permute.xlu0 %1403
      %1405 = vrot.lane.b32.xlu0 %v957, 82
      %v1406 = vpop.permute.xlu0 %1405
      %1407 = vrot.lane.b32.xlu0 %v958, 82
      %v1408 = vpop.permute.xlu0 %1407
      %1409 = vrot.lane.b32.xlu0 %v959, 82
      %v1410 = vpop.permute.xlu0 %1409
      %1411 = vrot.lane.b32.xlu0 %v936, 82
      %v1412 = vpop.permute.xlu0 %1411
      %1413 = vrot.lane.b32.xlu0 %v960, 82
      %v1414 = vpop.permute.xlu0 %1413
      %1415 = vrot.lane.b32.xlu0 %v961, 82
      %v1416 = vpop.permute.xlu0 %1415
      %1417 = vrot.lane.b32.xlu0 %v962, 82
      %v1418 = vpop.permute.xlu0 %1417
      %1419 = vrot.lane.b32.xlu0 %v944, 82
      %v1420 = vpop.permute.xlu0 %1419
      %1421 = vrot.lane.b32.xlu0 %v963, 82
      %v1422 = vpop.permute.xlu0 %1421
      %1423 = vrot.lane.b32.xlu0 %v964, 82
      %v1424 = vpop.permute.xlu0 %1423
      %1425 = vrot.lane.b32.xlu0 %v965, 82
      %v1426 = vpop.permute.xlu0 %1425
      %1427 = vrot.lane.b32.xlu0 %v952, 82
      %v1428 = vpop.permute.xlu0 %1427
      %1429 = vrot.lane.b32.xlu0 %v999, 82
      %v1430 = vpop.permute.xlu0 %1429
      %1431 = vrot.lane.b32.xlu0 %v1000, 82
      %v1432 = vpop.permute.xlu0 %1431
      %1433 = vrot.lane.b32.xlu0 %v1001, 82
      %v1434 = vpop.permute.xlu0 %1433
      %1435 = vrot.lane.b32.xlu0 %v973, 82
      %v1436 = vpop.permute.xlu0 %1435
      %1437 = vrot.lane.b32.xlu0 %v1002, 82
      %v1438 = vpop.permute.xlu0 %1437
      %1439 = vrot.lane.b32.xlu0 %v1003, 82
      %v1440 = vpop.permute.xlu0 %1439
      %1441 = vrot.lane.b32.xlu0 %v1004, 82
      %v1442 = vpop.permute.xlu0 %1441
      %1443 = vrot.lane.b32.xlu0 %v981, 82
      %v1444 = vpop.permute.xlu0 %1443
      %1445 = vrot.lane.b32.xlu0 %v1005, 82
      %v1446 = vpop.permute.xlu0 %1445
      %1447 = vrot.lane.b32.xlu0 %v1006, 82
      %v1448 = vpop.permute.xlu0 %1447
      %1449 = vrot.lane.b32.xlu0 %v1007, 82
      %v1450 = vpop.permute.xlu0 %1449
      %1451 = vrot.lane.b32.xlu0 %v989, 82
      %v1452 = vpop.permute.xlu0 %1451
      %1453 = vrot.lane.b32.xlu0 %v1008, 82
      %v1454 = vpop.permute.xlu0 %1453
      %1455 = vrot.lane.b32.xlu0 %v1009, 82
      %v1456 = vpop.permute.xlu0 %1455
      %1457 = vrot.lane.b32.xlu0 %v1010, 82
      %v1458 = vpop.permute.xlu0 %1457
      %1459 = vrot.lane.b32.xlu0 %v997, 82
      %v1460 = vpop.permute.xlu0 %1459
      %1461 = vrot.lane.b32.xlu0 %v1044, 82
      %v1462 = vpop.permute.xlu0 %1461
      %1463 = vrot.lane.b32.xlu0 %v1045, 82
      %v1464 = vpop.permute.xlu0 %1463
      %1465 = vrot.lane.b32.xlu0 %v1046, 82
      %v1466 = vpop.permute.xlu0 %1465
      %1467 = vrot.lane.b32.xlu0 %v1018, 82
      %v1468 = vpop.permute.xlu0 %1467
      %1469 = vrot.lane.b32.xlu0 %v1047, 82
      %v1470 = vpop.permute.xlu0 %1469
      %1471 = vrot.lane.b32.xlu0 %v1048, 82
      %v1472 = vpop.permute.xlu0 %1471
      %1473 = vrot.lane.b32.xlu0 %v1049, 82
      %v1474 = vpop.permute.xlu0 %1473
      %1475 = vrot.lane.b32.xlu0 %v1026, 82
      %v1476 = vpop.permute.xlu0 %1475
      %1477 = vrot.lane.b32.xlu0 %v1050, 82
      %v1478 = vpop.permute.xlu0 %1477
      %1479 = vrot.lane.b32.xlu0 %v1051, 82
      %v1480 = vpop.permute.xlu0 %1479
      %1481 = vrot.lane.b32.xlu0 %v1052, 82
      %v1482 = vpop.permute.xlu0 %1481
      %1483 = vrot.lane.b32.xlu0 %v1034, 82
      %v1484 = vpop.permute.xlu0 %1483
      %1485 = vrot.lane.b32.xlu0 %v1053, 82
      %v1486 = vpop.permute.xlu0 %1485
      %1487 = vrot.lane.b32.xlu0 %v1054, 82
      %v1488 = vpop.permute.xlu0 %1487
      %1489 = vrot.lane.b32.xlu0 %v1055, 82
      %v1490 = vpop.permute.xlu0 %1489
      %1491 = vrot.lane.b32.xlu0 %v1042, 82
      %v1492 = vpop.permute.xlu0 %1491
      %1493 = vrot.lane.b32.xlu0 %v1089, 82
      %v1494 = vpop.permute.xlu0 %1493
      %1495 = vrot.lane.b32.xlu0 %v1090, 82
      %v1496 = vpop.permute.xlu0 %1495
      %1497 = vrot.lane.b32.xlu0 %v1091, 82
      %v1498 = vpop.permute.xlu0 %1497
      %1499 = vrot.lane.b32.xlu0 %v1063, 82
      %v1500 = vpop.permute.xlu0 %1499
      %1501 = vrot.lane.b32.xlu0 %v1092, 82
      %v1502 = vpop.permute.xlu0 %1501
      %1503 = vrot.lane.b32.xlu0 %v1093, 82
      %v1504 = vpop.permute.xlu0 %1503
      %1505 = vrot.lane.b32.xlu0 %v1094, 82
      %v1506 = vpop.permute.xlu0 %1505
      %1507 = vrot.lane.b32.xlu0 %v1071, 82
      %v1508 = vpop.permute.xlu0 %1507
      %1509 = vrot.lane.b32.xlu0 %v1095, 82
      %v1510 = vpop.permute.xlu0 %1509
      %1511 = vrot.lane.b32.xlu0 %v1096, 82
      %v1512 = vpop.permute.xlu0 %1511
      %1513 = vrot.lane.b32.xlu0 %v1097, 82
      %v1514 = vpop.permute.xlu0 %1513
      %1515 = vrot.lane.b32.xlu0 %v1079, 82
      %v1516 = vpop.permute.xlu0 %1515
      %1517 = vrot.lane.b32.xlu0 %v1098, 82
      %v1518 = vpop.permute.xlu0 %1517
      %1519 = vrot.lane.b32.xlu0 %v1099, 82
      %v1520 = vpop.permute.xlu0 %1519
      %1521 = vrot.lane.b32.xlu0 %v1100, 82
      %v1522 = vpop.permute.xlu0 %1521
      %1523 = vrot.lane.b32.xlu0 %v1087, 82
      %v1524 = vpop.permute.xlu0 %1523
      %1525 = vrot.lane.b32.xlu0 %v1134, 82
      %v1526 = vpop.permute.xlu0 %1525
      %1527 = vrot.lane.b32.xlu0 %v1135, 82
      %v1528 = vpop.permute.xlu0 %1527
      %1529 = vrot.lane.b32.xlu0 %v1136, 82
      %v1530 = vpop.permute.xlu0 %1529
      %1531 = vrot.lane.b32.xlu0 %v1108, 82
      %v1532 = vpop.permute.xlu0 %1531
      %1533 = vrot.lane.b32.xlu0 %v1137, 82
      %v1534 = vpop.permute.xlu0 %1533
      %1535 = vrot.lane.b32.xlu0 %v1138, 82
      %v1536 = vpop.permute.xlu0 %1535
      %1537 = vrot.lane.b32.xlu0 %v1139, 82
      %v1538 = vpop.permute.xlu0 %1537
      %1539 = vrot.lane.b32.xlu0 %v1116, 82
      %v1540 = vpop.permute.xlu0 %1539
      %1541 = vrot.lane.b32.xlu0 %v1140, 82
      %v1542 = vpop.permute.xlu0 %1541
      %1543 = vrot.lane.b32.xlu0 %v1141, 82
      %v1544 = vpop.permute.xlu0 %1543
      %1545 = vrot.lane.b32.xlu0 %v1142, 82
      %v1546 = vpop.permute.xlu0 %1545
      %1547 = vrot.lane.b32.xlu0 %v1124, 82
      %v1548 = vpop.permute.xlu0 %1547
      %1549 = vrot.lane.b32.xlu0 %v1143, 82
      %v1550 = vpop.permute.xlu0 %1549
      %1551 = vrot.lane.b32.xlu0 %v1144, 82
      %v1552 = vpop.permute.xlu0 %1551
      %1553 = vrot.lane.b32.xlu0 %v1145, 82
      %v1554 = vpop.permute.xlu0 %1553
      %1555 = vrot.lane.b32.xlu0 %v1132, 82
      %v1556 = vpop.permute.xlu0 %1555
      %1557 = vrot.lane.b32.xlu0 %v1179, 82
      %v1558 = vpop.permute.xlu0 %1557
      %1559 = vrot.lane.b32.xlu0 %v1180, 82
      %v1560 = vpop.permute.xlu0 %1559
      %1561 = vrot.lane.b32.xlu0 %v1181, 82
      %v1562 = vpop.permute.xlu0 %1561
      %1563 = vrot.lane.b32.xlu0 %v1153, 82
      %v1564 = vpop.permute.xlu0 %1563
      %1565 = vrot.lane.b32.xlu0 %v1182, 82
      %v1566 = vpop.permute.xlu0 %1565
      %1567 = vrot.lane.b32.xlu0 %v1183, 82
      %v1568 = vpop.permute.xlu0 %1567
      %1569 = vrot.lane.b32.xlu0 %v1184, 82
      %v1570 = vpop.permute.xlu0 %1569
      %1571 = vrot.lane.b32.xlu0 %v1161, 82
      %v1572 = vpop.permute.xlu0 %1571
      %1573 = vrot.lane.b32.xlu0 %v1185, 82
      %v1574 = vpop.permute.xlu0 %1573
      %1575 = vrot.lane.b32.xlu0 %v1186, 82
      %v1576 = vpop.permute.xlu0 %1575
      %1577 = vrot.lane.b32.xlu0 %v1187, 82
      %v1578 = vpop.permute.xlu0 %1577
      %1579 = vrot.lane.b32.xlu0 %v1169, 82
      %v1580 = vpop.permute.xlu0 %1579
      %1581 = vrot.lane.b32.xlu0 %v1188, 82
      %v1582 = vpop.permute.xlu0 %1581
      %1583 = vrot.lane.b32.xlu0 %v1189, 82
      %v1584 = vpop.permute.xlu0 %1583
      %1585 = vrot.lane.b32.xlu0 %v1190, 82
      %v1586 = vpop.permute.xlu0 %1585
      %1587 = vrot.lane.b32.xlu0 %v1177, 82
      %v1588 = vpop.permute.xlu0 %1587
      %1589 = vrot.lane.b32.xlu0 %v1224, 82
      %v1590 = vpop.permute.xlu0 %1589
      %1591 = vrot.lane.b32.xlu0 %v1225, 82
      %v1592 = vpop.permute.xlu0 %1591
      %1593 = vrot.lane.b32.xlu0 %v1226, 82
      %v1594 = vpop.permute.xlu0 %1593
      %1595 = vrot.lane.b32.xlu0 %v1198, 82
      %v1596 = vpop.permute.xlu0 %1595
      %1597 = vrot.lane.b32.xlu0 %v1227, 82
      %v1598 = vpop.permute.xlu0 %1597
      %1599 = vrot.lane.b32.xlu0 %v1228, 82
      %v1600 = vpop.permute.xlu0 %1599
      %1601 = vrot.lane.b32.xlu0 %v1229, 82
      %v1602 = vpop.permute.xlu0 %1601
      %1603 = vrot.lane.b32.xlu0 %v1206, 82
      %v1604 = vpop.permute.xlu0 %1603
      %1605 = vrot.lane.b32.xlu0 %v1230, 82
      %v1606 = vpop.permute.xlu0 %1605
      %1607 = vrot.lane.b32.xlu0 %v1231, 82
      %v1608 = vpop.permute.xlu0 %1607
      %1609 = vrot.lane.b32.xlu0 %v1232, 82
      %v1610 = vpop.permute.xlu0 %1609
      %1611 = vrot.lane.b32.xlu0 %v1214, 82
      %v1612 = vpop.permute.xlu0 %1611
      %1613 = vrot.lane.b32.xlu0 %v1233, 82
      %v1614 = vpop.permute.xlu0 %1613
      %1615 = vrot.lane.b32.xlu0 %v1234, 82
      %v1616 = vpop.permute.xlu0 %1615
      %1617 = vrot.lane.b32.xlu0 %v1235, 82
      %v1618 = vpop.permute.xlu0 %1617
      %1619 = vrot.lane.b32.xlu0 %v1222, 82
      %v1620 = vpop.permute.xlu0 %1619
      %v1621 = vsel %vm1223, %v1366, %v1368
      %v1622 = vsel %vm1223, %v1368, %v1370
      %v1623 = vsel %vm1223, %v1370, %v1372
      %v1624 = vsel %vm1223, %v1374, %v1376
      %v1625 = vsel %vm1223, %v1376, %v1378
      %v1626 = vsel %vm1223, %v1378, %v1380
      %v1627 = vsel %vm1223, %v1382, %v1384
      %v1628 = vsel %vm1223, %v1384, %v1386
      %v1629 = vsel %vm1223, %v1386, %v1388
      %v1630 = vsel %vm1223, %v1390, %v1392
      %v1631 = vsel %vm1223, %v1392, %v1394
      %v1632 = vsel %vm1223, %v1394, %v1396
      %v1633 = vsel %vm1223, %v1398, %v1400
      %v1634 = vsel %vm1223, %v1400, %v1402
      %v1635 = vsel %vm1223, %v1402, %v1404
      %v1636 = vsel %vm1223, %v1406, %v1408
      %v1637 = vsel %vm1223, %v1408, %v1410
      %v1638 = vsel %vm1223, %v1410, %v1412
      %v1639 = vsel %vm1223, %v1414, %v1416
      %v1640 = vsel %vm1223, %v1416, %v1418
      %v1641 = vsel %vm1223, %v1418, %v1420
      %v1642 = vsel %vm1223, %v1422, %v1424
      %v1643 = vsel %vm1223, %v1424, %v1426
      %v1644 = vsel %vm1223, %v1426, %v1428
      %v1645 = vsel %vm1223, %v1430, %v1432
      %v1646 = vsel %vm1223, %v1432, %v1434
      %v1647 = vsel %vm1223, %v1434, %v1436
      %v1648 = vsel %vm1223, %v1438, %v1440
      %v1649 = vsel %vm1223, %v1440, %v1442
      %v1650 = vsel %vm1223, %v1442, %v1444
      %v1651 = vsel %vm1223, %v1446, %v1448
      %v1652 = vsel %vm1223, %v1448, %v1450
      %v1653 = vsel %vm1223, %v1450, %v1452
      %v1654 = vsel %vm1223, %v1454, %v1456
      %v1655 = vsel %vm1223, %v1456, %v1458
      %v1656 = vsel %vm1223, %v1458, %v1460
      %v1657 = vsel %vm1223, %v1462, %v1464
      %v1658 = vsel %vm1223, %v1464, %v1466
      %v1659 = vsel %vm1223, %v1466, %v1468
      %v1660 = vsel %vm1223, %v1470, %v1472
      %v1661 = vsel %vm1223, %v1472, %v1474
      %v1662 = vsel %vm1223, %v1474, %v1476
      %v1663 = vsel %vm1223, %v1478, %v1480
      %v1664 = vsel %vm1223, %v1480, %v1482
      %v1665 = vsel %vm1223, %v1482, %v1484
      %v1666 = vsel %vm1223, %v1486, %v1488
      %v1667 = vsel %vm1223, %v1488, %v1490
      %v1668 = vsel %vm1223, %v1490, %v1492
      %v1669 = vsel %vm1223, %v1494, %v1496
      %v1670 = vsel %vm1223, %v1496, %v1498
      %v1671 = vsel %vm1223, %v1498, %v1500
      %v1672 = vsel %vm1223, %v1502, %v1504
      %v1673 = vsel %vm1223, %v1504, %v1506
      %v1674 = vsel %vm1223, %v1506, %v1508
      %v1675 = vsel %vm1223, %v1510, %v1512
      %v1676 = vsel %vm1223, %v1512, %v1514
      %v1677 = vsel %vm1223, %v1514, %v1516
      %v1678 = vsel %vm1223, %v1518, %v1520
      %v1679 = vsel %vm1223, %v1520, %v1522
      %v1680 = vsel %vm1223, %v1522, %v1524
      %v1681 = vsel %vm1223, %v1526, %v1528
      %v1682 = vsel %vm1223, %v1528, %v1530
      %v1683 = vsel %vm1223, %v1530, %v1532
      %v1684 = vsel %vm1223, %v1534, %v1536
      %v1685 = vsel %vm1223, %v1536, %v1538
      %v1686 = vsel %vm1223, %v1538, %v1540
      %v1687 = vsel %vm1223, %v1542, %v1544
      %v1688 = vsel %vm1223, %v1544, %v1546
      %v1689 = vsel %vm1223, %v1546, %v1548
      %v1690 = vsel %vm1223, %v1550, %v1552
      %v1691 = vsel %vm1223, %v1552, %v1554
      %v1692 = vsel %vm1223, %v1554, %v1556
      %v1693 = vsel %vm1223, %v1558, %v1560
      %v1694 = vsel %vm1223, %v1560, %v1562
      %v1695 = vsel %vm1223, %v1562, %v1564
      %v1696 = vsel %vm1223, %v1566, %v1568
      %v1697 = vsel %vm1223, %v1568, %v1570
      %v1698 = vsel %vm1223, %v1570, %v1572
      %v1699 = vsel %vm1223, %v1574, %v1576
      %v1700 = vsel %vm1223, %v1576, %v1578
      %v1701 = vsel %vm1223, %v1578, %v1580
      %v1702 = vsel %vm1223, %v1582, %v1584
      %v1703 = vsel %vm1223, %v1584, %v1586
      %v1704 = vsel %vm1223, %v1586, %v1588
      %v1705 = vsel %vm1223, %v1590, %v1592
      %v1706 = vsel %vm1223, %v1592, %v1594
      %v1707 = vsel %vm1223, %v1594, %v1596
      %v1708 = vsel %vm1223, %v1598, %v1600
      %v1709 = vsel %vm1223, %v1600, %v1602
      %v1710 = vsel %vm1223, %v1602, %v1604
      %v1711 = vsel %vm1223, %v1606, %v1608
      %v1712 = vsel %vm1223, %v1608, %v1610
      %v1713 = vsel %vm1223, %v1610, %v1612
      %v1714 = vsel %vm1223, %v1614, %v1616
      %v1715 = vsel %vm1223, %v1616, %v1618
      %v1716 = vsel %vm1223, %v1618, %v1620
      %vm1825 = vcmask 523264
      %v1827 = vsel %vm1825, %v1342, 0
      %v1830 = vsel %vm1825, %v1347, 0
      %v1833 = vsel %vm1825, %v1352, 0
      %1835 = vmatprep.subr.bf16.mxu0 %v1631
      %1836 = vmatpush1.bf16.msra.mxu0 %v1630
      %1837 = vmatprep.subr.bf16.mxu0 %v1628
      %1838 = vmatpush1.bf16.msra.mxu0 %v1627
      %1839 = vmatprep.subr.bf16.mxu0 %v1625
      %1840 = vmatpush1.bf16.msra.mxu0 %v1624
      %1841 = vmatprep.subr.bf16.mxu0 %v1622
      %1842 = vmatpush1.bf16.msra.mxu0 %v1621
      %1843 = vmatprep.subr.bf16.mxu0 %v1234
      %1844 = vmatpush1.bf16.msra.mxu0 %v1233
      %1845 = vmatprep.subr.bf16.mxu0 %v1231
      %1846 = vmatpush1.bf16.msra.mxu0 %v1230
      %1847 = vmatprep.subr.bf16.mxu0 %v1228
      %1848 = vmatpush1.bf16.msra.mxu0 %v1227
      %1849 = vmatprep.subr.bf16.mxu0 %v1225
      %1850 = vmatpush1.bf16.msra.mxu0 %v1224
      %1851 = vmatprep.subr.bf16.mxu0 %v1655
      %1852 = vmatpush2.bf16.msra.mxu0 %v1654
      %1853 = vmatprep.subr.bf16.mxu0 %v1652
      %1854 = vmatpush2.bf16.msra.mxu0 %v1651
      %1855 = vmatprep.subr.bf16.mxu0 %v1649
      %1856 = vmatpush2.bf16.msra.mxu0 %v1648
      %1857 = vmatprep.subr.bf16.mxu0 %v1646
      %1858 = vmatpush2.bf16.msra.mxu0 %v1645
      %1859 = vmatprep.subr.bf16.mxu0 %v1643
      %1860 = vmatpush2.bf16.msra.mxu0 %v1642
      %1861 = vmatprep.subr.bf16.mxu0 %v1640
      %1862 = vmatpush2.bf16.msra.mxu0 %v1639
      %1863 = vmatprep.subr.bf16.mxu0 %v1637
      %1864 = vmatpush2.bf16.msra.mxu0 %v1636
      %1865 = vmatprep.subr.bf16.mxu0 %v1634
      %1866 = vmatpush2.bf16.msra.mxu0 %v1633
      %1867 = vmatprep.mubr.bf16.mxu0 %v1339
      %1868 = vmatmul.mubr.bf16.gmra.mxu0 %v1338
      %v1869 = vpop.f32.mrf.mxu0
      %v1870 = vadd.f32 %v1263, %v1869
      %v1871 = vpop.f32.mrf.mxu0
      %v1872 = vadd.f32 %v1263, %v1871
      %v1873 = vpop.f32.mrf.mxu0
      %v1874 = vadd.f32 %v1268, %v1873
      %v1875 = vpop.f32.mrf.mxu0
      %v1876 = vadd.f32 %v1268, %v1875
      %1877 = vmatprep.mubr.bf16.mxu0 %v1344
      %1878 = vmatmul.mubr.bf16.gmra.mxu0 %v1343
      %v1879 = vpop.f32.mrf.mxu0
      %v1880 = vadd.f32 %v1273, %v1879
      %v1881 = vpop.f32.mrf.mxu0
      %v1882 = vadd.f32 %v1273, %v1881
      %v1883 = vpop.f32.mrf.mxu0
      %v1884 = vadd.f32 %v1278, %v1883
      %v1885 = vpop.f32.mrf.mxu0
      %v1886 = vadd.f32 %v1278, %v1885
      %1887 = vmatprep.mubr.bf16.mxu0 %v1349
      %1888 = vmatmul.mubr.bf16.gmra.mxu0 %v1348
      %v1889 = vpop.f32.mrf.mxu0
      %v1890 = vadd.f32 %v1283, %v1889
      %v1891 = vpop.f32.mrf.mxu0
      %v1892 = vadd.f32 %v1283, %v1891
      %v1893 = vpop.f32.mrf.mxu0
      %v1894 = vadd.f32 %v1288, %v1893
      %v1895 = vpop.f32.mrf.mxu0
      %v1896 = vadd.f32 %v1288, %v1895
      %1897 = vdwg.mxu0
      %1898 = vmatprep.subr.bf16.mxu0 %v1679
      %1899 = vmatpush1.bf16.msra.mxu0 %v1678
      %1900 = vmatprep.subr.bf16.mxu0 %v1676
      %1901 = vmatpush1.bf16.msra.mxu0 %v1675
      %1902 = vmatprep.subr.bf16.mxu0 %v1673
      %1903 = vmatpush1.bf16.msra.mxu0 %v1672
      %1904 = vmatprep.subr.bf16.mxu0 %v1670
      %1905 = vmatpush1.bf16.msra.mxu0 %v1669
      %1906 = vmatprep.subr.bf16.mxu0 %v1667
      %1907 = vmatpush1.bf16.msra.mxu0 %v1666
      %1908 = vmatprep.subr.bf16.mxu0 %v1664
      %1909 = vmatpush1.bf16.msra.mxu0 %v1663
      %1910 = vmatprep.subr.bf16.mxu0 %v1661
      %1911 = vmatpush1.bf16.msra.mxu0 %v1660
      %1912 = vmatprep.subr.bf16.mxu0 %v1658
      %1913 = vmatpush1.bf16.msra.mxu0 %v1657
      %1914 = vmatprep.subr.bf16.mxu0 %v1703
      %1915 = vmatpush2.bf16.msra.mxu0 %v1702
      %1916 = vmatprep.subr.bf16.mxu0 %v1700
      %1917 = vmatpush2.bf16.msra.mxu0 %v1699
      %1918 = vmatprep.subr.bf16.mxu0 %v1697
      %1919 = vmatpush2.bf16.msra.mxu0 %v1696
      %1920 = vmatprep.subr.bf16.mxu0 %v1694
      %1921 = vmatpush2.bf16.msra.mxu0 %v1693
      %1922 = vmatprep.subr.bf16.mxu0 %v1691
      %1923 = vmatpush2.bf16.msra.mxu0 %v1690
      %1924 = vmatprep.subr.bf16.mxu0 %v1688
      %1925 = vmatpush2.bf16.msra.mxu0 %v1687
      %1926 = vmatprep.subr.bf16.mxu0 %v1685
      %1927 = vmatpush2.bf16.msra.mxu0 %v1684
      %1928 = vmatprep.subr.bf16.mxu0 %v1682
      %1929 = vmatpush2.bf16.msra.mxu0 %v1681
      %1930 = vmatprep.mubr.bf16.mxu0 %v1341
      %1931 = vmatmul.mubr.bf16.gmra.mxu0 %v1340
      %v1932 = vpop.f32.mrf.mxu0
      %v1933 = vadd.f32 %v1870, %v1932
      %v1934 = vpop.f32.mrf.mxu0
      %v1935 = vadd.f32 %v1872, %v1934
      %v1936 = vpop.f32.mrf.mxu0
      %v1937 = vadd.f32 %v1874, %v1936
      %v1938 = vpop.f32.mrf.mxu0
      %v1939 = vadd.f32 %v1876, %v1938
      %1940 = vmatprep.mubr.bf16.mxu0 %v1346
      %1941 = vmatmul.mubr.bf16.gmra.mxu0 %v1345
      %v1942 = vpop.f32.mrf.mxu0
      %v1943 = vadd.f32 %v1880, %v1942
      %v1944 = vpop.f32.mrf.mxu0
      %v1945 = vadd.f32 %v1882, %v1944
      %v1946 = vpop.f32.mrf.mxu0
      %v1947 = vadd.f32 %v1884, %v1946
      %v1948 = vpop.f32.mrf.mxu0
      %v1949 = vadd.f32 %v1886, %v1948
      %1950 = vmatprep.mubr.bf16.mxu0 %v1351
      %1951 = vmatmul.mubr.bf16.gmra.mxu0 %v1350
      %v1952 = vpop.f32.mrf.mxu0
      %v1953 = vadd.f32 %v1890, %v1952
      %v1954 = vpop.f32.mrf.mxu0
      %v1955 = vadd.f32 %v1892, %v1954
      %v1956 = vpop.f32.mrf.mxu0
      %v1957 = vadd.f32 %v1894, %v1956
      %v1958 = vpop.f32.mrf.mxu0
      %v1959 = vadd.f32 %v1896, %v1958
      %1960 = vdwg.mxu0
      %1961 = vmatprep.subr.bf16.mxu0 0
      %1962 = vmatpush1.bf16.msra.mxu0 0
      %1963 = vmatprep.subr.bf16.mxu0 0
      %1964 = vmatpush1.bf16.msra.mxu0 0
      %1965 = vmatprep.subr.bf16.mxu0 0
      %1966 = vmatpush1.bf16.msra.mxu0 0
      %1967 = vmatprep.subr.bf16.mxu0 0
      %1968 = vmatpush1.bf16.msra.mxu0 0
      %1969 = vmatprep.subr.bf16.mxu0 %v1715
      %1970 = vmatpush1.bf16.msra.mxu0 %v1714
      %1971 = vmatprep.subr.bf16.mxu0 %v1712
      %1972 = vmatpush1.bf16.msra.mxu0 %v1711
      %1973 = vmatprep.subr.bf16.mxu0 %v1709
      %1974 = vmatpush1.bf16.msra.mxu0 %v1708
      %1975 = vmatprep.subr.bf16.mxu0 %v1706
      %1976 = vmatpush1.bf16.msra.mxu0 %v1705
      %1977 = vmatprep.subr.bf16.mxu0 0
      %1978 = vmatpush2.bf16.msra.mxu0 0
      %1979 = vmatprep.subr.bf16.mxu0 0
      %1980 = vmatpush2.bf16.msra.mxu0 0
      %1981 = vmatprep.subr.bf16.mxu0 0
      %1982 = vmatpush2.bf16.msra.mxu0 0
      %1983 = vmatprep.subr.bf16.mxu0 0
      %1984 = vmatpush2.bf16.msra.mxu0 0
      %1985 = vmatprep.subr.bf16.mxu0 0
      %1986 = vmatpush2.bf16.msra.mxu0 0
      %1987 = vmatprep.subr.bf16.mxu0 0
      %1988 = vmatpush2.bf16.msra.mxu0 0
      %1989 = vmatprep.subr.bf16.mxu0 0
      %1990 = vmatpush2.bf16.msra.mxu0 0
      %1991 = vmatprep.subr.bf16.mxu0 0
      %1992 = vmatpush2.bf16.msra.mxu0 0
      %1993 = vmatprep.mubr.bf16.mxu0 0
      %1994 = vmatmul.mubr.bf16.gmra.mxu0 %v1827
      %v1995 = vpop.f32.mrf.mxu0
      %v1996 = vadd.f32 %v1933, %v1995
      %v1997 = vpop.f32.mrf.mxu0
      %v1998 = vadd.f32 %v1935, %v1997
      %v1999 = vpop.f32.mrf.mxu0
      %v2000 = vadd.f32 %v1937, %v1999
      %v2001 = vpop.f32.mrf.mxu0
      %v2002 = vadd.f32 %v1939, %v2001
      %2003 = vmatprep.mubr.bf16.mxu0 0
      %2004 = vmatmul.mubr.bf16.gmra.mxu0 %v1830
      %v2005 = vpop.f32.mrf.mxu0
      %v2006 = vadd.f32 %v1943, %v2005
      %v2007 = vpop.f32.mrf.mxu0
      %v2008 = vadd.f32 %v1945, %v2007
      %v2009 = vpop.f32.mrf.mxu0
      %v2010 = vadd.f32 %v1947, %v2009
      %v2011 = vpop.f32.mrf.mxu0
      %v2012 = vadd.f32 %v1949, %v2011
      %2013 = vmatprep.mubr.bf16.mxu0 0
      %2014 = vmatmul.mubr.bf16.gmra.mxu0 %v1833
      %v2015 = vpop.f32.mrf.mxu0
      %v2016 = vadd.f32 %v1953, %v2015
      %v2017 = vpop.f32.mrf.mxu0
      %v2018 = vadd.f32 %v1955, %v2017
      %v2019 = vpop.f32.mrf.mxu0
      %v2020 = vadd.f32 %v1957, %v2019
      %v2021 = vpop.f32.mrf.mxu0
      %v2022 = vadd.f32 %v1959, %v2021
      %2023 = vdwg.mxu0
      %2024 = vmatprep.subr.bf16.mxu0 0
      %2025 = vmatpush1.bf16.msra.mxu0 %v1632
      %2026 = vmatprep.subr.bf16.mxu0 0
      %2027 = vmatpush1.bf16.msra.mxu0 %v1629
      %2028 = vmatprep.subr.bf16.mxu0 0
      %2029 = vmatpush1.bf16.msra.mxu0 %v1626
      %2030 = vmatprep.subr.bf16.mxu0 0
      %2031 = vmatpush1.bf16.msra.mxu0 %v1623
      %2032 = vmatprep.subr.bf16.mxu0 0
      %2033 = vmatpush1.bf16.msra.mxu0 %v1235
      %2034 = vmatprep.subr.bf16.mxu0 0
      %2035 = vmatpush1.bf16.msra.mxu0 %v1232
      %2036 = vmatprep.subr.bf16.mxu0 0
      %2037 = vmatpush1.bf16.msra.mxu0 %v1229
      %2038 = vmatprep.subr.bf16.mxu0 0
      %2039 = vmatpush1.bf16.msra.mxu0 %v1226
      %2040 = vmatprep.subr.bf16.mxu0 0
      %2041 = vmatpush2.bf16.msra.mxu0 %v1656
      %2042 = vmatprep.subr.bf16.mxu0 0
      %2043 = vmatpush2.bf16.msra.mxu0 %v1653
      %2044 = vmatprep.subr.bf16.mxu0 0
      %2045 = vmatpush2.bf16.msra.mxu0 %v1650
      %2046 = vmatprep.subr.bf16.mxu0 0
      %2047 = vmatpush2.bf16.msra.mxu0 %v1647
      %2048 = vmatprep.subr.bf16.mxu0 0
      %2049 = vmatpush2.bf16.msra.mxu0 %v1644
      %2050 = vmatprep.subr.bf16.mxu0 0
      %2051 = vmatpush2.bf16.msra.mxu0 %v1641
      %2052 = vmatprep.subr.bf16.mxu0 0
      %2053 = vmatpush2.bf16.msra.mxu0 %v1638
      %2054 = vmatprep.subr.bf16.mxu0 0
      %2055 = vmatpush2.bf16.msra.mxu0 %v1635
      %2056 = vmatprep.mubr.bf16.mxu0 %v1339
      %2057 = vmatmul.mubr.bf16.gmra.mxu0 %v1338
      %v2058 = vpop.f32.mrf.mxu0
      %v2059 = vadd.f32 %v1263, %v2058
      %v2060 = vpop.f32.mrf.mxu0
      %v2061 = vpop.f32.mrf.mxu0
      %v2062 = vadd.f32 %v1268, %v2061
      %v2063 = vpop.f32.mrf.mxu0
      %2064 = vmatprep.mubr.bf16.mxu0 %v1344
      %2065 = vmatmul.mubr.bf16.gmra.mxu0 %v1343
      %v2066 = vpop.f32.mrf.mxu0
      %v2067 = vadd.f32 %v1273, %v2066
      %v2068 = vpop.f32.mrf.mxu0
      %v2069 = vpop.f32.mrf.mxu0
      %v2070 = vadd.f32 %v1278, %v2069
      %v2071 = vpop.f32.mrf.mxu0
      %2072 = vmatprep.mubr.bf16.mxu0 %v1349
      %2073 = vmatmul.mubr.bf16.gmra.mxu0 %v1348
      %v2074 = vpop.f32.mrf.mxu0
      %v2075 = vadd.f32 %v1283, %v2074
      %v2076 = vpop.f32.mrf.mxu0
      %v2077 = vpop.f32.mrf.mxu0
      %v2078 = vadd.f32 %v1288, %v2077
      %v2079 = vpop.f32.mrf.mxu0
      %2080 = vdwg.mxu0
      %2081 = vmatprep.subr.bf16.mxu0 0
      %2082 = vmatpush1.bf16.msra.mxu0 %v1680
      %2083 = vmatprep.subr.bf16.mxu0 0
      %2084 = vmatpush1.bf16.msra.mxu0 %v1677
      %2085 = vmatprep.subr.bf16.mxu0 0
      %2086 = vmatpush1.bf16.msra.mxu0 %v1674
      %2087 = vmatprep.subr.bf16.mxu0 0
      %2088 = vmatpush1.bf16.msra.mxu0 %v1671
      %2089 = vmatprep.subr.bf16.mxu0 0
      %2090 = vmatpush1.bf16.msra.mxu0 %v1668
      %2091 = vmatprep.subr.bf16.mxu0 0
      %2092 = vmatpush1.bf16.msra.mxu0 %v1665
      %2093 = vmatprep.subr.bf16.mxu0 0
      %2094 = vmatpush1.bf16.msra.mxu0 %v1662
      %2095 = vmatprep.subr.bf16.mxu0 0
      %2096 = vmatpush1.bf16.msra.mxu0 %v1659
      %2097 = vmatprep.subr.bf16.mxu0 0
      %2098 = vmatpush2.bf16.msra.mxu0 %v1704
      %2099 = vmatprep.subr.bf16.mxu0 0
      %2100 = vmatpush2.bf16.msra.mxu0 %v1701
      %2101 = vmatprep.subr.bf16.mxu0 0
      %2102 = vmatpush2.bf16.msra.mxu0 %v1698
      %2103 = vmatprep.subr.bf16.mxu0 0
      %2104 = vmatpush2.bf16.msra.mxu0 %v1695
      %2105 = vmatprep.subr.bf16.mxu0 0
      %2106 = vmatpush2.bf16.msra.mxu0 %v1692
      %2107 = vmatprep.subr.bf16.mxu0 0
      %2108 = vmatpush2.bf16.msra.mxu0 %v1689
      %2109 = vmatprep.subr.bf16.mxu0 0
      %2110 = vmatpush2.bf16.msra.mxu0 %v1686
      %2111 = vmatprep.subr.bf16.mxu0 0
      %2112 = vmatpush2.bf16.msra.mxu0 %v1683
      %2113 = vmatprep.mubr.bf16.mxu0 %v1341
      %2114 = vmatmul.mubr.bf16.gmra.mxu0 %v1340
      %v2115 = vpop.f32.mrf.mxu0
      %v2116 = vadd.f32 %v2059, %v2115
      %v2117 = vpop.f32.mrf.mxu0
      %v2118 = vpop.f32.mrf.mxu0
      %v2119 = vadd.f32 %v2062, %v2118
      %v2120 = vpop.f32.mrf.mxu0
      %2121 = vmatprep.mubr.bf16.mxu0 %v1346
      %2122 = vmatmul.mubr.bf16.gmra.mxu0 %v1345
      %v2123 = vpop.f32.mrf.mxu0
      %v2124 = vadd.f32 %v2067, %v2123
      %v2125 = vpop.f32.mrf.mxu0
      %v2126 = vpop.f32.mrf.mxu0
      %v2127 = vadd.f32 %v2070, %v2126
      %v2128 = vpop.f32.mrf.mxu0
      %2129 = vmatprep.mubr.bf16.mxu0 %v1351
      %2130 = vmatmul.mubr.bf16.gmra.mxu0 %v1350
      %v2131 = vpop.f32.mrf.mxu0
      %v2132 = vadd.f32 %v2075, %v2131
      %v2133 = vpop.f32.mrf.mxu0
      %v2134 = vpop.f32.mrf.mxu0
      %v2135 = vadd.f32 %v2078, %v2134
      %v2136 = vpop.f32.mrf.mxu0
      %2137 = vdwg.mxu0
      %2138 = vmatprep.subr.bf16.mxu0 0
      %2139 = vmatpush1.bf16.msra.mxu0 0
      %2140 = vmatprep.subr.bf16.mxu0 0
      %2141 = vmatpush1.bf16.msra.mxu0 0
      %2142 = vmatprep.subr.bf16.mxu0 0
      %2143 = vmatpush1.bf16.msra.mxu0 0
      %2144 = vmatprep.subr.bf16.mxu0 0
      %2145 = vmatpush1.bf16.msra.mxu0 0
      %2146 = vmatprep.subr.bf16.mxu0 0
      %2147 = vmatpush1.bf16.msra.mxu0 %v1716
      %2148 = vmatprep.subr.bf16.mxu0 0
      %2149 = vmatpush1.bf16.msra.mxu0 %v1713
      %2150 = vmatprep.subr.bf16.mxu0 0
      %2151 = vmatpush1.bf16.msra.mxu0 %v1710
      %2152 = vmatprep.subr.bf16.mxu0 0
      %2153 = vmatpush1.bf16.msra.mxu0 %v1707
      %2154 = vmatprep.subr.bf16.mxu0 0
      %2155 = vmatpush2.bf16.msra.mxu0 0
      %2156 = vmatprep.subr.bf16.mxu0 0
      %2157 = vmatpush2.bf16.msra.mxu0 0
      %2158 = vmatprep.subr.bf16.mxu0 0
      %2159 = vmatpush2.bf16.msra.mxu0 0
      %2160 = vmatprep.subr.bf16.mxu0 0
      %2161 = vmatpush2.bf16.msra.mxu0 0
      %2162 = vmatprep.subr.bf16.mxu0 0
      %2163 = vmatpush2.bf16.msra.mxu0 0
      %2164 = vmatprep.subr.bf16.mxu0 0
      %2165 = vmatpush2.bf16.msra.mxu0 0
      %2166 = vmatprep.subr.bf16.mxu0 0
      %2167 = vmatpush2.bf16.msra.mxu0 0
      %2168 = vmatprep.subr.bf16.mxu0 0
      %2169 = vmatpush2.bf16.msra.mxu0 0
      %2170 = vmatprep.mubr.bf16.mxu0 0
      %2171 = vmatmul.mubr.bf16.gmra.mxu0 %v1827
      %v2172 = vpop.f32.mrf.mxu0
      %v2173 = vadd.f32 %v2116, %v2172
      %v2174 = vpop.f32.mrf.mxu0
      %v2175 = vpop.f32.mrf.mxu0
      %v2176 = vadd.f32 %v2119, %v2175
      %v2177 = vpop.f32.mrf.mxu0
      %2178 = vmatprep.mubr.bf16.mxu0 0
      %2179 = vmatmul.mubr.bf16.gmra.mxu0 %v1830
      %v2180 = vpop.f32.mrf.mxu0
      %v2181 = vadd.f32 %v2124, %v2180
      %v2182 = vpop.f32.mrf.mxu0
      %v2183 = vpop.f32.mrf.mxu0
      %v2184 = vadd.f32 %v2127, %v2183
      %v2185 = vpop.f32.mrf.mxu0
      %2186 = vmatprep.mubr.bf16.mxu0 0
      %2187 = vmatmul.mubr.bf16.gmra.mxu0 %v1833
      %v2188 = vpop.f32.mrf.mxu0
      %v2189 = vadd.f32 %v2132, %v2188
      %v2190 = vpop.f32.mrf.mxu0
      %v2191 = vpop.f32.mrf.mxu0
      %v2192 = vadd.f32 %v2135, %v2191
      %v2193 = vpop.f32.mrf.mxu0
      %2194 = vdwg.mxu0
      %v2195 = vmax.f32 %v1996, 0.0
      %v2196 = vmax.f32 %v1998, 0.0
      %v2197 = vmax.f32 %v2173, 0.0
      %v2198 = vmax.f32 %v2000, 0.0
      %v2199 = vmax.f32 %v2002, 0.0
      %v2200 = vmax.f32 %v2176, 0.0
      %v2201 = vmax.f32 %v2006, 0.0
      %v2202 = vmax.f32 %v2008, 0.0
      %v2203 = vmax.f32 %v2181, 0.0
      %v2204 = vmax.f32 %v2010, 0.0
      %v2205 = vmax.f32 %v2012, 0.0
      %v2206 = vmax.f32 %v2184, 0.0
      %v2207 = vmax.f32 %v2016, 0.0
      %v2208 = vmax.f32 %v2018, 0.0
      %v2209 = vmax.f32 %v2189, 0.0
      %v2210 = vmax.f32 %v2020, 0.0
      %v2211 = vmax.f32 %v2022, 0.0
      %v2212 = vmax.f32 %v2192, 0.0
      %v2213 = vmul.f32 %v2195, %v756
      %v2214 = vmul.f32 %v2196, %v760
      %v2215 = vmul.f32 %v2197, %v764
      %v2216 = vmul.f32 %v2198, %v756
      %v2217 = vmul.f32 %v2199, %v760
      %v2218 = vmul.f32 %v2200, %v764
      %v2219 = vmul.f32 %v2201, %v756
      %v2220 = vmul.f32 %v2202, %v760
      %v2221 = vmul.f32 %v2203, %v764
      %v2222 = vmul.f32 %v2204, %v756
      %v2223 = vmul.f32 %v2205, %v760
      %v2224 = vmul.f32 %v2206, %v764
      %v2225 = vmul.f32 %v2207, %v756
      %v2226 = vmul.f32 %v2208, %v760
      %v2227 = vmul.f32 %v2209, %v764
      %v2228 = vmul.f32 %v2210, %v756
      %v2229 = vmul.f32 %v2211, %v760
      %v2230 = vmul.f32 %v2212, %v764
      %v2231 = vpack.c.bf16 %v2216, %v2213
      %v2232 = vpack.c.bf16 %v2217, %v2214
      %v2233 = vpack.c.bf16 %v2218, %v2215
      %v2234 = vpack.c.bf16 %v2222, %v2219
      %v2235 = vpack.c.bf16 %v2223, %v2220
      %v2236 = vpack.c.bf16 %v2224, %v2221
      %v2237 = vpack.c.bf16 %v2228, %v2225
      %v2238 = vpack.c.bf16 %v2229, %v2226
      %v2239 = vpack.c.bf16 %v2230, %v2227
      %2249 = vrot.lane.b32.xlu0 %v2231, 69
      %v2250 = vpop.permute.xlu0 %2249
      %2251 = vrot.lane.b32.xlu0 %v2232, 69
      %v2252 = vpop.permute.xlu0 %2251
      %2253 = vrot.lane.b32.xlu0 %v2233, 69
      %v2254 = vpop.permute.xlu0 %2253
      %2255 = vrot.lane.b32.xlu0 %v2234, 69
      %v2256 = vpop.permute.xlu0 %2255
      %2257 = vrot.lane.b32.xlu0 %v2235, 69
      %v2258 = vpop.permute.xlu0 %2257
      %2259 = vrot.lane.b32.xlu0 %v2236, 69
      %v2260 = vpop.permute.xlu0 %2259
      %2261 = vrot.lane.b32.xlu0 %v2237, 69
      %v2262 = vpop.permute.xlu0 %2261
      %2263 = vrot.lane.b32.xlu0 %v2238, 69
      %v2264 = vpop.permute.xlu0 %2263
      %2265 = vrot.lane.b32.xlu0 %v2239, 69
      %v2266 = vpop.permute.xlu0 %2265
      %v2267 = vsel %vm840, %v2250, %v2252
      %v2268 = vsel %vm840, %v2252, %v2254
      %v2269 = vsel %vm840, %v2256, %v2258
      %v2270 = vsel %vm840, %v2258, %v2260
      %v2271 = vsel %vm840, %v2262, %v2264
      %v2272 = vsel %vm840, %v2264, %v2266
      %v2274 = vsel %vm849, 0, %v2250
      %v2276 = vsel %vm849, 0, %v2256
      %v2278 = vsel %vm849, 0, %v2262
      %v2280 = vsel %vm859, %v2254, 0
      %v2282 = vsel %vm859, %v2260, 0
      %v2284 = vsel %vm859, %v2266, 0
      %2288 = vrot.lane.b32.xlu0 %v465, 127
      %v2289 = vpop.permute.xlu0 %2288
      %2290 = vrot.lane.b32.xlu0 %v466, 127
      %v2291 = vpop.permute.xlu0 %2290
      %2292 = vrot.lane.b32.xlu0 %v467, 127
      %v2293 = vpop.permute.xlu0 %2292
      %vm2294 = vcmask 1039360
      %v2295 = vsel %vm2294, %v2289, %v2291
      %v2296 = vsel %vm2294, %v2291, %v2293
      %2300 = vrot.lane.b32.xlu0 %v465, 126
      %v2301 = vpop.permute.xlu0 %2300
      %2302 = vrot.lane.b32.xlu0 %v466, 126
      %v2303 = vpop.permute.xlu0 %2302
      %2304 = vrot.lane.b32.xlu0 %v467, 126
      %v2305 = vpop.permute.xlu0 %2304
      %vm2306 = vcmask 1031168
      %v2307 = vsel %vm2306, %v2301, %v2303
      %v2308 = vsel %vm2306, %v2303, %v2305
      %2312 = vrot.lane.b32.xlu0 %v465, 125
      %v2313 = vpop.permute.xlu0 %2312
      %2314 = vrot.lane.b32.xlu0 %v466, 125
      %v2315 = vpop.permute.xlu0 %2314
      %2316 = vrot.lane.b32.xlu0 %v467, 125
      %v2317 = vpop.permute.xlu0 %2316
      %vm2318 = vcmask 1022976
      %v2319 = vsel %vm2318, %v2313, %v2315
      %v2320 = vsel %vm2318, %v2315, %v2317
      %2324 = vrot.lane.b32.xlu0 %v465, 124
      %v2325 = vpop.permute.xlu0 %2324
      %2326 = vrot.lane.b32.xlu0 %v466, 124
      %v2327 = vpop.permute.xlu0 %2326
      %2328 = vrot.lane.b32.xlu0 %v467, 124
      %v2329 = vpop.permute.xlu0 %2328
      %vm2330 = vcmask 1014784
      %v2331 = vsel %vm2330, %v2325, %v2327
      %v2332 = vsel %vm2330, %v2327, %v2329
      %2336 = vrot.lane.b32.xlu0 %v465, 123
      %v2337 = vpop.permute.xlu0 %2336
      %2338 = vrot.lane.b32.xlu0 %v466, 123
      %v2339 = vpop.permute.xlu0 %2338
      %2340 = vrot.lane.b32.xlu0 %v467, 123
      %v2341 = vpop.permute.xlu0 %2340
      %vm2342 = vcmask 1006592
      %v2343 = vsel %vm2342, %v2337, %v2339
      %v2344 = vsel %vm2342, %v2339, %v2341
      %2348 = vrot.lane.b32.xlu0 %v465, 122
      %v2349 = vpop.permute.xlu0 %2348
      %2350 = vrot.lane.b32.xlu0 %v466, 122
      %v2351 = vpop.permute.xlu0 %2350
      %2352 = vrot.lane.b32.xlu0 %v467, 122
      %v2353 = vpop.permute.xlu0 %2352
      %vm2354 = vcmask 998400
      %v2355 = vsel %vm2354, %v2349, %v2351
      %v2356 = vsel %vm2354, %v2351, %v2353
      %2360 = vrot.lane.b32.xlu0 %v465, 106
      %v2361 = vpop.permute.xlu0 %2360
      %2362 = vrot.lane.b32.xlu0 %v466, 106
      %v2363 = vpop.permute.xlu0 %2362
      %2364 = vrot.lane.b32.xlu0 %v467, 106
      %v2365 = vpop.permute.xlu0 %2364
      %vm2366 = vcmask 867328
      %v2367 = vsel %vm2366, %v2361, %v2363
      %v2368 = vsel %vm2366, %v2363, %v2365
      %2372 = vrot.lane.b32.xlu0 %v465, 105
      %v2373 = vpop.permute.xlu0 %2372
      %2374 = vrot.lane.b32.xlu0 %v466, 105
      %v2375 = vpop.permute.xlu0 %2374
      %2376 = vrot.lane.b32.xlu0 %v467, 105
      %v2377 = vpop.permute.xlu0 %2376
      %vm2378 = vcmask 859136
      %v2379 = vsel %vm2378, %v2373, %v2375
      %v2380 = vsel %vm2378, %v2375, %v2377
      %2384 = vrot.lane.b32.xlu0 %v465, 104
      %v2385 = vpop.permute.xlu0 %2384
      %2386 = vrot.lane.b32.xlu0 %v466, 104
      %v2387 = vpop.permute.xlu0 %2386
      %2388 = vrot.lane.b32.xlu0 %v467, 104
      %v2389 = vpop.permute.xlu0 %2388
      %vm2390 = vcmask 850944
      %v2391 = vsel %vm2390, %v2385, %v2387
      %v2392 = vsel %vm2390, %v2387, %v2389
      %2396 = vrot.lane.b32.xlu0 %v465, 103
      %v2397 = vpop.permute.xlu0 %2396
      %2398 = vrot.lane.b32.xlu0 %v466, 103
      %v2399 = vpop.permute.xlu0 %2398
      %2400 = vrot.lane.b32.xlu0 %v467, 103
      %v2401 = vpop.permute.xlu0 %2400
      %vm2402 = vcmask 842752
      %v2403 = vsel %vm2402, %v2397, %v2399
      %v2404 = vsel %vm2402, %v2399, %v2401
      %2408 = vrot.lane.b32.xlu0 %v465, 102
      %v2409 = vpop.permute.xlu0 %2408
      %2410 = vrot.lane.b32.xlu0 %v466, 102
      %v2411 = vpop.permute.xlu0 %2410
      %2412 = vrot.lane.b32.xlu0 %v467, 102
      %v2413 = vpop.permute.xlu0 %2412
      %vm2414 = vcmask 834560
      %v2415 = vsel %vm2414, %v2409, %v2411
      %v2416 = vsel %vm2414, %v2411, %v2413
      %2420 = vrot.lane.b32.xlu0 %v465, 101
      %v2421 = vpop.permute.xlu0 %2420
      %2422 = vrot.lane.b32.xlu0 %v466, 101
      %v2423 = vpop.permute.xlu0 %2422
      %2424 = vrot.lane.b32.xlu0 %v467, 101
      %v2425 = vpop.permute.xlu0 %2424
      %vm2426 = vcmask 826368
      %v2427 = vsel %vm2426, %v2421, %v2423
      %v2428 = vsel %vm2426, %v2423, %v2425
      %2432 = vrot.lane.b32.xlu0 %v465, 100
      %v2433 = vpop.permute.xlu0 %2432
      %2434 = vrot.lane.b32.xlu0 %v466, 100
      %v2435 = vpop.permute.xlu0 %2434
      %2436 = vrot.lane.b32.xlu0 %v467, 100
      %v2437 = vpop.permute.xlu0 %2436
      %vm2438 = vcmask 818176
      %v2439 = vsel %vm2438, %v2433, %v2435
      %v2440 = vsel %vm2438, %v2435, %v2437
      %2445 = vrot.lane.b32.xlu0 %v465, 84
      %v2446 = vpop.permute.xlu0 %2445
      %2447 = vrot.lane.b32.xlu0 %v466, 84
      %v2448 = vpop.permute.xlu0 %2447
      %2449 = vrot.lane.b32.xlu0 %v467, 84
      %v2450 = vpop.permute.xlu0 %2449
      %2451 = vrot.lane.b32.xlu0 %v468, 84
      %v2452 = vpop.permute.xlu0 %2451
      %vm2453 = vcmask 687104
      %v2454 = vsel %vm2453, %v2446, %v2448
      %v2455 = vsel %vm2453, %v2448, %v2450
      %v2456 = vsel %vm2453, %v2450, %v2452
      %2460 = vrot.lane.b32.xlu0 %v465, 83
      %v2461 = vpop.permute.xlu0 %2460
      %2462 = vrot.lane.b32.xlu0 %v466, 83
      %v2463 = vpop.permute.xlu0 %2462
      %2464 = vrot.lane.b32.xlu0 %v467, 83
      %v2465 = vpop.permute.xlu0 %2464
      %2466 = vrot.lane.b32.xlu0 %v468, 83
      %v2467 = vpop.permute.xlu0 %2466
      %vm2468 = vcmask 678912
      %v2469 = vsel %vm2468, %v2461, %v2463
      %v2470 = vsel %vm2468, %v2463, %v2465
      %v2471 = vsel %vm2468, %v2465, %v2467
      %2475 = vrot.lane.b32.xlu0 %v468, 127
      %v2476 = vpop.permute.xlu0 %2475
      %v2477 = vsel %vm2294, %v2293, %v2476
      %2478 = vrot.lane.b32.xlu0 %v468, 126
      %v2479 = vpop.permute.xlu0 %2478
      %v2480 = vsel %vm2306, %v2305, %v2479
      %2481 = vrot.lane.b32.xlu0 %v468, 125
      %v2482 = vpop.permute.xlu0 %2481
      %v2483 = vsel %vm2318, %v2317, %v2482
      %2484 = vrot.lane.b32.xlu0 %v468, 124
      %v2485 = vpop.permute.xlu0 %2484
      %v2486 = vsel %vm2330, %v2329, %v2485
      %2487 = vrot.lane.b32.xlu0 %v465, 108
      %v2488 = vpop.permute.xlu0 %2487
      %2489 = vrot.lane.b32.xlu0 %v466, 108
      %v2490 = vpop.permute.xlu0 %2489
      %2491 = vrot.lane.b32.xlu0 %v467, 108
      %v2492 = vpop.permute.xlu0 %2491
      %2493 = vrot.lane.b32.xlu0 %v468, 108
      %v2494 = vpop.permute.xlu0 %2493
      %vm2495 = vcmask 883712
      %v2496 = vsel %vm2495, %v2488, %v2490
      %v2497 = vsel %vm2495, %v2490, %v2492
      %v2498 = vsel %vm2495, %v2492, %v2494
      %2499 = vrot.lane.b32.xlu0 %v465, 107
      %v2500 = vpop.permute.xlu0 %2499
      %2501 = vrot.lane.b32.xlu0 %v466, 107
      %v2502 = vpop.permute.xlu0 %2501
      %2503 = vrot.lane.b32.xlu0 %v467, 107
      %v2504 = vpop.permute.xlu0 %2503
      %2505 = vrot.lane.b32.xlu0 %v468, 107
      %v2506 = vpop.permute.xlu0 %2505
      %vm2507 = vcmask 875520
      %v2508 = vsel %vm2507, %v2500, %v2502
      %v2509 = vsel %vm2507, %v2502, %v2504
      %v2510 = vsel %vm2507, %v2504, %v2506
      %2511 = vrot.lane.b32.xlu0 %v468, 106
      %v2512 = vpop.permute.xlu0 %2511
      %v2513 = vsel %vm2366, %v2365, %v2512
      %2514 = vrot.lane.b32.xlu0 %v468, 105
      %v2515 = vpop.permute.xlu0 %2514
      %v2516 = vsel %vm2378, %v2377, %v2515
      %2517 = vrot.lane.b32.xlu0 %v468, 104
      %v2518 = vpop.permute.xlu0 %2517
      %v2519 = vsel %vm2390, %v2389, %v2518
      %2520 = vrot.lane.b32.xlu0 %v468, 103
      %v2521 = vpop.permute.xlu0 %2520
      %v2522 = vsel %vm2402, %v2401, %v2521
      %2523 = vrot.lane.b32.xlu0 %v468, 102
      %v2524 = vpop.permute.xlu0 %2523
      %v2525 = vsel %vm2414, %v2413, %v2524
      %2526 = vrot.lane.b32.xlu0 %v465, 86
      %v2527 = vpop.permute.xlu0 %2526
      %2528 = vrot.lane.b32.xlu0 %v466, 86
      %v2529 = vpop.permute.xlu0 %2528
      %2530 = vrot.lane.b32.xlu0 %v467, 86
      %v2531 = vpop.permute.xlu0 %2530
      %2532 = vrot.lane.b32.xlu0 %v468, 86
      %v2533 = vpop.permute.xlu0 %2532
      %vm2534 = vcmask 703488
      %v2535 = vsel %vm2534, %v2527, %v2529
      %v2536 = vsel %vm2534, %v2529, %v2531
      %v2537 = vsel %vm2534, %v2531, %v2533
      %2538 = vrot.lane.b32.xlu0 %v465, 85
      %v2539 = vpop.permute.xlu0 %2538
      %2540 = vrot.lane.b32.xlu0 %v466, 85
      %v2541 = vpop.permute.xlu0 %2540
      %2542 = vrot.lane.b32.xlu0 %v467, 85
      %v2543 = vpop.permute.xlu0 %2542
      %2544 = vrot.lane.b32.xlu0 %v468, 85
      %v2545 = vpop.permute.xlu0 %2544
      %vm2546 = vcmask 695296
      %v2547 = vsel %vm2546, %v2539, %v2541
      %v2548 = vsel %vm2546, %v2541, %v2543
      %v2549 = vsel %vm2546, %v2543, %v2545
      %2550 = vrot.lane.b32.xlu0 %v465, 110
      %v2551 = vpop.permute.xlu0 %2550
      %2552 = vrot.lane.b32.xlu0 %v466, 110
      %v2553 = vpop.permute.xlu0 %2552
      %2554 = vrot.lane.b32.xlu0 %v467, 110
      %v2555 = vpop.permute.xlu0 %2554
      %2556 = vrot.lane.b32.xlu0 %v468, 110
      %v2557 = vpop.permute.xlu0 %2556
      %vm2558 = vcmask 900096
      %v2559 = vsel %vm2558, %v2551, %v2553
      %v2560 = vsel %vm2558, %v2553, %v2555
      %v2561 = vsel %vm2558, %v2555, %v2557
      %2562 = vrot.lane.b32.xlu0 %v465, 109
      %v2563 = vpop.permute.xlu0 %2562
      %2564 = vrot.lane.b32.xlu0 %v466, 109
      %v2565 = vpop.permute.xlu0 %2564
      %2566 = vrot.lane.b32.xlu0 %v467, 109
      %v2567 = vpop.permute.xlu0 %2566
      %2568 = vrot.lane.b32.xlu0 %v468, 109
      %v2569 = vpop.permute.xlu0 %2568
      %vm2570 = vcmask 891904
      %v2571 = vsel %vm2570, %v2563, %v2565
      %v2572 = vsel %vm2570, %v2565, %v2567
      %v2573 = vsel %vm2570, %v2567, %v2569
      %2574 = vrot.lane.b32.xlu0 %v466, 88
      %v2575 = vpop.permute.xlu0 %2574
      %2576 = vrot.lane.b32.xlu0 %v467, 88
      %v2577 = vpop.permute.xlu0 %2576
      %2578 = vrot.lane.b32.xlu0 %v468, 88
      %v2579 = vpop.permute.xlu0 %2578
      %vm2580 = vcmask 719872
      %v2581 = vsel %vm2580, %v2575, %v2577
      %v2582 = vsel %vm2580, %v2577, %v2579
      %2583 = vrot.lane.b32.xlu0 %v466, 87
      %v2584 = vpop.permute.xlu0 %2583
      %2585 = vrot.lane.b32.xlu0 %v467, 87
      %v2586 = vpop.permute.xlu0 %2585
      %2587 = vrot.lane.b32.xlu0 %v468, 87
      %v2588 = vpop.permute.xlu0 %2587
      %vm2589 = vcmask 711680
      %v2590 = vsel %vm2589, %v2584, %v2586
      %v2591 = vsel %vm2589, %v2586, %v2588
      %2592 = vrot.lane.b32.xlu0 %v465, 82
      %v2593 = vpop.permute.xlu0 %2592
      %2594 = vrot.lane.b32.xlu0 %v466, 82
      %v2595 = vpop.permute.xlu0 %2594
      %2596 = vrot.lane.b32.xlu0 %v467, 82
      %v2597 = vpop.permute.xlu0 %2596
      %2598 = vrot.lane.b32.xlu0 %v468, 82
      %v2599 = vpop.permute.xlu0 %2598
      %2600 = vrot.lane.b32.xlu0 %v2295, 82
      %v2601 = vpop.permute.xlu0 %2600
      %2602 = vrot.lane.b32.xlu0 %v2296, 82
      %v2603 = vpop.permute.xlu0 %2602
      %2604 = vrot.lane.b32.xlu0 %v2477, 82
      %v2605 = vpop.permute.xlu0 %2604
      %2606 = vrot.lane.b32.xlu0 %v2476, 82
      %v2607 = vpop.permute.xlu0 %2606
      %2608 = vrot.lane.b32.xlu0 %v2307, 82
      %v2609 = vpop.permute.xlu0 %2608
      %2610 = vrot.lane.b32.xlu0 %v2308, 82
      %v2611 = vpop.permute.xlu0 %2610
      %2612 = vrot.lane.b32.xlu0 %v2480, 82
      %v2613 = vpop.permute.xlu0 %2612
      %2614 = vrot.lane.b32.xlu0 %v2479, 82
      %v2615 = vpop.permute.xlu0 %2614
      %2616 = vrot.lane.b32.xlu0 %v2319, 82
      %v2617 = vpop.permute.xlu0 %2616
      %2618 = vrot.lane.b32.xlu0 %v2320, 82
      %v2619 = vpop.permute.xlu0 %2618
      %2620 = vrot.lane.b32.xlu0 %v2483, 82
      %v2621 = vpop.permute.xlu0 %2620
      %2622 = vrot.lane.b32.xlu0 %v2482, 82
      %v2623 = vpop.permute.xlu0 %2622
      %2624 = vrot.lane.b32.xlu0 %v2331, 82
      %v2625 = vpop.permute.xlu0 %2624
      %2626 = vrot.lane.b32.xlu0 %v2332, 82
      %v2627 = vpop.permute.xlu0 %2626
      %2628 = vrot.lane.b32.xlu0 %v2486, 82
      %v2629 = vpop.permute.xlu0 %2628
      %2630 = vrot.lane.b32.xlu0 %v2485, 82
      %v2631 = vpop.permute.xlu0 %2630
      %2632 = vrot.lane.b32.xlu0 %v2496, 82
      %v2633 = vpop.permute.xlu0 %2632
      %2634 = vrot.lane.b32.xlu0 %v2497, 82
      %v2635 = vpop.permute.xlu0 %2634
      %2636 = vrot.lane.b32.xlu0 %v2498, 82
      %v2637 = vpop.permute.xlu0 %2636
      %2638 = vrot.lane.b32.xlu0 %v2494, 82
      %v2639 = vpop.permute.xlu0 %2638
      %2640 = vrot.lane.b32.xlu0 %v2508, 82
      %v2641 = vpop.permute.xlu0 %2640
      %2642 = vrot.lane.b32.xlu0 %v2509, 82
      %v2643 = vpop.permute.xlu0 %2642
      %2644 = vrot.lane.b32.xlu0 %v2510, 82
      %v2645 = vpop.permute.xlu0 %2644
      %2646 = vrot.lane.b32.xlu0 %v2506, 82
      %v2647 = vpop.permute.xlu0 %2646
      %2648 = vrot.lane.b32.xlu0 %v2367, 82
      %v2649 = vpop.permute.xlu0 %2648
      %2650 = vrot.lane.b32.xlu0 %v2368, 82
      %v2651 = vpop.permute.xlu0 %2650
      %2652 = vrot.lane.b32.xlu0 %v2513, 82
      %v2653 = vpop.permute.xlu0 %2652
      %2654 = vrot.lane.b32.xlu0 %v2512, 82
      %v2655 = vpop.permute.xlu0 %2654
      %2656 = vrot.lane.b32.xlu0 %v2379, 82
      %v2657 = vpop.permute.xlu0 %2656
      %2658 = vrot.lane.b32.xlu0 %v2380, 82
      %v2659 = vpop.permute.xlu0 %2658
      %2660 = vrot.lane.b32.xlu0 %v2516, 82
      %v2661 = vpop.permute.xlu0 %2660
      %2662 = vrot.lane.b32.xlu0 %v2515, 82
      %v2663 = vpop.permute.xlu0 %2662
      %2664 = vrot.lane.b32.xlu0 %v2391, 82
      %v2665 = vpop.permute.xlu0 %2664
      %2666 = vrot.lane.b32.xlu0 %v2392, 82
      %v2667 = vpop.permute.xlu0 %2666
      %2668 = vrot.lane.b32.xlu0 %v2519, 82
      %v2669 = vpop.permute.xlu0 %2668
      %2670 = vrot.lane.b32.xlu0 %v2518, 82
      %v2671 = vpop.permute.xlu0 %2670
      %2672 = vrot.lane.b32.xlu0 %v2403, 82
      %v2673 = vpop.permute.xlu0 %2672
      %2674 = vrot.lane.b32.xlu0 %v2404, 82
      %v2675 = vpop.permute.xlu0 %2674
      %2676 = vrot.lane.b32.xlu0 %v2522, 82
      %v2677 = vpop.permute.xlu0 %2676
      %2678 = vrot.lane.b32.xlu0 %v2521, 82
      %v2679 = vpop.permute.xlu0 %2678
      %2680 = vrot.lane.b32.xlu0 %v2415, 82
      %v2681 = vpop.permute.xlu0 %2680
      %2682 = vrot.lane.b32.xlu0 %v2416, 82
      %v2683 = vpop.permute.xlu0 %2682
      %2684 = vrot.lane.b32.xlu0 %v2525, 82
      %v2685 = vpop.permute.xlu0 %2684
      %2686 = vrot.lane.b32.xlu0 %v2524, 82
      %v2687 = vpop.permute.xlu0 %2686
      %2688 = vrot.lane.b32.xlu0 %v2535, 82
      %v2689 = vpop.permute.xlu0 %2688
      %2690 = vrot.lane.b32.xlu0 %v2536, 82
      %v2691 = vpop.permute.xlu0 %2690
      %2692 = vrot.lane.b32.xlu0 %v2537, 82
      %v2693 = vpop.permute.xlu0 %2692
      %2694 = vrot.lane.b32.xlu0 %v2533, 82
      %v2695 = vpop.permute.xlu0 %2694
      %2696 = vrot.lane.b32.xlu0 %v2547, 82
      %v2697 = vpop.permute.xlu0 %2696
      %2698 = vrot.lane.b32.xlu0 %v2548, 82
      %v2699 = vpop.permute.xlu0 %2698
      %2700 = vrot.lane.b32.xlu0 %v2549, 82
      %v2701 = vpop.permute.xlu0 %2700
      %2702 = vrot.lane.b32.xlu0 %v2545, 82
      %v2703 = vpop.permute.xlu0 %2702
      %2704 = vrot.lane.b32.xlu0 %v2454, 82
      %v2705 = vpop.permute.xlu0 %2704
      %2706 = vrot.lane.b32.xlu0 %v2455, 82
      %v2707 = vpop.permute.xlu0 %2706
      %2708 = vrot.lane.b32.xlu0 %v2456, 82
      %v2709 = vpop.permute.xlu0 %2708
      %2710 = vrot.lane.b32.xlu0 %v2452, 82
      %v2711 = vpop.permute.xlu0 %2710
      %2712 = vrot.lane.b32.xlu0 %v2469, 82
      %v2713 = vpop.permute.xlu0 %2712
      %2714 = vrot.lane.b32.xlu0 %v2470, 82
      %v2715 = vpop.permute.xlu0 %2714
      %2716 = vrot.lane.b32.xlu0 %v2471, 82
      %v2717 = vpop.permute.xlu0 %2716
      %2718 = vrot.lane.b32.xlu0 %v2467, 82
      %v2719 = vpop.permute.xlu0 %2718
      %vm2720 = vcmask 670720
      %v2721 = vsel %vm2720, %v2593, %v2595
      %v2722 = vsel %vm2720, %v2595, %v2597
      %v2723 = vsel %vm2720, %v2597, %v2599
      %v2724 = vsel %vm2720, %v2601, %v2603
      %v2725 = vsel %vm2720, %v2603, %v2605
      %v2726 = vsel %vm2720, %v2605, %v2607
      %v2727 = vsel %vm2720, %v2609, %v2611
      %v2728 = vsel %vm2720, %v2611, %v2613
      %v2729 = vsel %vm2720, %v2613, %v2615
      %v2730 = vsel %vm2720, %v2617, %v2619
      %v2731 = vsel %vm2720, %v2619, %v2621
      %v2732 = vsel %vm2720, %v2621, %v2623
      %v2733 = vsel %vm2720, %v2625, %v2627
      %v2734 = vsel %vm2720, %v2627, %v2629
      %v2735 = vsel %vm2720, %v2629, %v2631
      %v2736 = vsel %vm2720, %v2633, %v2635
      %v2737 = vsel %vm2720, %v2635, %v2637
      %v2738 = vsel %vm2720, %v2637, %v2639
      %v2739 = vsel %vm2720, %v2641, %v2643
      %v2740 = vsel %vm2720, %v2643, %v2645
      %v2741 = vsel %vm2720, %v2645, %v2647
      %v2742 = vsel %vm2720, %v2649, %v2651
      %v2743 = vsel %vm2720, %v2651, %v2653
      %v2744 = vsel %vm2720, %v2653, %v2655
      %v2745 = vsel %vm2720, %v2657, %v2659
      %v2746 = vsel %vm2720, %v2659, %v2661
      %v2747 = vsel %vm2720, %v2661, %v2663
      %v2748 = vsel %vm2720, %v2665, %v2667
      %v2749 = vsel %vm2720, %v2667, %v2669
      %v2750 = vsel %vm2720, %v2669, %v2671
      %v2751 = vsel %vm2720, %v2673, %v2675
      %v2752 = vsel %vm2720, %v2675, %v2677
      %v2753 = vsel %vm2720, %v2677, %v2679
      %v2754 = vsel %vm2720, %v2681, %v2683
      %v2755 = vsel %vm2720, %v2683, %v2685
      %v2756 = vsel %vm2720, %v2685, %v2687
      %v2757 = vsel %vm2720, %v2689, %v2691
      %v2758 = vsel %vm2720, %v2691, %v2693
      %v2759 = vsel %vm2720, %v2693, %v2695
      %v2760 = vsel %vm2720, %v2697, %v2699
      %v2761 = vsel %vm2720, %v2699, %v2701
      %v2762 = vsel %vm2720, %v2701, %v2703
      %v2763 = vsel %vm2720, %v2705, %v2707
      %v2764 = vsel %vm2720, %v2707, %v2709
      %v2765 = vsel %vm2720, %v2709, %v2711
      %v2766 = vsel %vm2720, %v2713, %v2715
      %v2767 = vsel %vm2720, %v2715, %v2717
      %v2768 = vsel %vm2720, %v2717, %v2719
      %2817 = vrot.lane.b32.xlu0 %v465, 36
      %v2818 = vpop.permute.xlu0 %2817
      %2819 = vrot.lane.b32.xlu0 %v466, 36
      %v2820 = vpop.permute.xlu0 %2819
      %2821 = vrot.lane.b32.xlu0 %v467, 36
      %v2822 = vpop.permute.xlu0 %2821
      %2823 = vrot.lane.b32.xlu0 %v468, 36
      %v2824 = vpop.permute.xlu0 %2823
      %2825 = vrot.lane.b32.xlu0 %v2295, 36
      %v2826 = vpop.permute.xlu0 %2825
      %2827 = vrot.lane.b32.xlu0 %v2296, 36
      %v2828 = vpop.permute.xlu0 %2827
      %2829 = vrot.lane.b32.xlu0 %v2477, 36
      %v2830 = vpop.permute.xlu0 %2829
      %2831 = vrot.lane.b32.xlu0 %v2476, 36
      %v2832 = vpop.permute.xlu0 %2831
      %2833 = vrot.lane.b32.xlu0 %v2307, 36
      %v2834 = vpop.permute.xlu0 %2833
      %2835 = vrot.lane.b32.xlu0 %v2308, 36
      %v2836 = vpop.permute.xlu0 %2835
      %2837 = vrot.lane.b32.xlu0 %v2480, 36
      %v2838 = vpop.permute.xlu0 %2837
      %2839 = vrot.lane.b32.xlu0 %v2479, 36
      %v2840 = vpop.permute.xlu0 %2839
      %2841 = vrot.lane.b32.xlu0 %v2559, 36
      %v2842 = vpop.permute.xlu0 %2841
      %2843 = vrot.lane.b32.xlu0 %v2560, 36
      %v2844 = vpop.permute.xlu0 %2843
      %2845 = vrot.lane.b32.xlu0 %v2561, 36
      %v2846 = vpop.permute.xlu0 %2845
      %2847 = vrot.lane.b32.xlu0 %v2557, 36
      %v2848 = vpop.permute.xlu0 %2847
      %2849 = vrot.lane.b32.xlu0 %v2571, 36
      %v2850 = vpop.permute.xlu0 %2849
      %2851 = vrot.lane.b32.xlu0 %v2572, 36
      %v2852 = vpop.permute.xlu0 %2851
      %2853 = vrot.lane.b32.xlu0 %v2573, 36
      %v2854 = vpop.permute.xlu0 %2853
      %2855 = vrot.lane.b32.xlu0 %v2569, 36
      %v2856 = vpop.permute.xlu0 %2855
      %2857 = vrot.lane.b32.xlu0 %v2496, 36
      %v2858 = vpop.permute.xlu0 %2857
      %2859 = vrot.lane.b32.xlu0 %v2497, 36
      %v2860 = vpop.permute.xlu0 %2859
      %2861 = vrot.lane.b32.xlu0 %v2498, 36
      %v2862 = vpop.permute.xlu0 %2861
      %2863 = vrot.lane.b32.xlu0 %v2494, 36
      %v2864 = vpop.permute.xlu0 %2863
      %2865 = vrot.lane.b32.xlu0 %v2508, 36
      %v2866 = vpop.permute.xlu0 %2865
      %2867 = vrot.lane.b32.xlu0 %v2509, 36
      %v2868 = vpop.permute.xlu0 %2867
      %2869 = vrot.lane.b32.xlu0 %v2510, 36
      %v2870 = vpop.permute.xlu0 %2869
      %2871 = vrot.lane.b32.xlu0 %v2506, 36
      %v2872 = vpop.permute.xlu0 %2871
      %2873 = vrot.lane.b32.xlu0 %v2367, 36
      %v2874 = vpop.permute.xlu0 %2873
      %2875 = vrot.lane.b32.xlu0 %v2368, 36
      %v2876 = vpop.permute.xlu0 %2875
      %2877 = vrot.lane.b32.xlu0 %v2513, 36
      %v2878 = vpop.permute.xlu0 %2877
      %2879 = vrot.lane.b32.xlu0 %v2512, 36
      %v2880 = vpop.permute.xlu0 %2879
      %2881 = vrot.lane.b32.xlu0 %v2379, 36
      %v2882 = vpop.permute.xlu0 %2881
      %2883 = vrot.lane.b32.xlu0 %v2380, 36
      %v2884 = vpop.permute.xlu0 %2883
      %2885 = vrot.lane.b32.xlu0 %v2516, 36
      %v2886 = vpop.permute.xlu0 %2885
      %2887 = vrot.lane.b32.xlu0 %v2515, 36
      %v2888 = vpop.permute.xlu0 %2887
      %2889 = vrot.lane.b32.xlu0 %v2391, 36
      %v2890 = vpop.permute.xlu0 %2889
      %2891 = vrot.lane.b32.xlu0 %v2392, 36
      %v2892 = vpop.permute.xlu0 %2891
      %2893 = vrot.lane.b32.xlu0 %v2519, 36
      %v2894 = vpop.permute.xlu0 %2893
      %2895 = vrot.lane.b32.xlu0 %v2518, 36
      %v2896 = vpop.permute.xlu0 %2895
      %2897 = vrot.lane.b32.xlu0 %v2575, 36
      %v2898 = vpop.permute.xlu0 %2897
      %2899 = vrot.lane.b32.xlu0 %v2581, 36
      %v2900 = vpop.permute.xlu0 %2899
      %2901 = vrot.lane.b32.xlu0 %v2582, 36
      %v2902 = vpop.permute.xlu0 %2901
      %2903 = vrot.lane.b32.xlu0 %v2579, 36
      %v2904 = vpop.permute.xlu0 %2903
      %2905 = vrot.lane.b32.xlu0 %v2584, 36
      %v2906 = vpop.permute.xlu0 %2905
      %2907 = vrot.lane.b32.xlu0 %v2590, 36
      %v2908 = vpop.permute.xlu0 %2907
      %2909 = vrot.lane.b32.xlu0 %v2591, 36
      %v2910 = vpop.permute.xlu0 %2909
      %2911 = vrot.lane.b32.xlu0 %v2588, 36
      %v2912 = vpop.permute.xlu0 %2911
      %2913 = vrot.lane.b32.xlu0 %v2529, 36
      %v2914 = vpop.permute.xlu0 %2913
      %2915 = vrot.lane.b32.xlu0 %v2536, 36
      %v2916 = vpop.permute.xlu0 %2915
      %2917 = vrot.lane.b32.xlu0 %v2537, 36
      %v2918 = vpop.permute.xlu0 %2917
      %2919 = vrot.lane.b32.xlu0 %v2533, 36
      %v2920 = vpop.permute.xlu0 %2919
      %2921 = vrot.lane.b32.xlu0 %v2541, 36
      %v2922 = vpop.permute.xlu0 %2921
      %2923 = vrot.lane.b32.xlu0 %v2548, 36
      %v2924 = vpop.permute.xlu0 %2923
      %2925 = vrot.lane.b32.xlu0 %v2549, 36
      %v2926 = vpop.permute.xlu0 %2925
      %2927 = vrot.lane.b32.xlu0 %v2545, 36
      %v2928 = vpop.permute.xlu0 %2927
      %2929 = vrot.lane.b32.xlu0 %v2448, 36
      %v2930 = vpop.permute.xlu0 %2929
      %2931 = vrot.lane.b32.xlu0 %v2455, 36
      %v2932 = vpop.permute.xlu0 %2931
      %2933 = vrot.lane.b32.xlu0 %v2456, 36
      %v2934 = vpop.permute.xlu0 %2933
      %2935 = vrot.lane.b32.xlu0 %v2452, 36
      %v2936 = vpop.permute.xlu0 %2935
      %2937 = vrot.lane.b32.xlu0 %v2463, 36
      %v2938 = vpop.permute.xlu0 %2937
      %2939 = vrot.lane.b32.xlu0 %v2470, 36
      %v2940 = vpop.permute.xlu0 %2939
      %2941 = vrot.lane.b32.xlu0 %v2471, 36
      %v2942 = vpop.permute.xlu0 %2941
      %2943 = vrot.lane.b32.xlu0 %v2467, 36
      %v2944 = vpop.permute.xlu0 %2943
      %vm2945 = vcmask 293888
      %v2946 = vsel %vm2945, %v2818, %v2820
      %v2947 = vsel %vm2945, %v2820, %v2822
      %v2948 = vsel %vm2945, %v2822, %v2824
      %v2949 = vsel %vm2945, %v2826, %v2828
      %v2950 = vsel %vm2945, %v2828, %v2830
      %v2951 = vsel %vm2945, %v2830, %v2832
      %v2952 = vsel %vm2945, %v2834, %v2836
      %v2953 = vsel %vm2945, %v2836, %v2838
      %v2954 = vsel %vm2945, %v2838, %v2840
      %v2955 = vsel %vm2945, %v2842, %v2844
      %v2956 = vsel %vm2945, %v2844, %v2846
      %v2957 = vsel %vm2945, %v2846, %v2848
      %v2958 = vsel %vm2945, %v2850, %v2852
      %v2959 = vsel %vm2945, %v2852, %v2854
      %v2960 = vsel %vm2945, %v2854, %v2856
      %v2961 = vsel %vm2945, %v2858, %v2860
      %v2962 = vsel %vm2945, %v2860, %v2862
      %v2963 = vsel %vm2945, %v2862, %v2864
      %v2964 = vsel %vm2945, %v2866, %v2868
      %v2965 = vsel %vm2945, %v2868, %v2870
      %v2966 = vsel %vm2945, %v2870, %v2872
      %v2967 = vsel %vm2945, %v2874, %v2876
      %v2968 = vsel %vm2945, %v2876, %v2878
      %v2969 = vsel %vm2945, %v2878, %v2880
      %v2970 = vsel %vm2945, %v2882, %v2884
      %v2971 = vsel %vm2945, %v2884, %v2886
      %v2972 = vsel %vm2945, %v2886, %v2888
      %v2973 = vsel %vm2945, %v2890, %v2892
      %v2974 = vsel %vm2945, %v2892, %v2894
      %v2975 = vsel %vm2945, %v2894, %v2896
      %v2976 = vsel %vm2945, %v2898, %v2900
      %v2977 = vsel %vm2945, %v2900, %v2902
      %v2978 = vsel %vm2945, %v2902, %v2904
      %v2979 = vsel %vm2945, %v2906, %v2908
      %v2980 = vsel %vm2945, %v2908, %v2910
      %v2981 = vsel %vm2945, %v2910, %v2912
      %v2982 = vsel %vm2945, %v2914, %v2916
      %v2983 = vsel %vm2945, %v2916, %v2918
      %v2984 = vsel %vm2945, %v2918, %v2920
      %v2985 = vsel %vm2945, %v2922, %v2924
      %v2986 = vsel %vm2945, %v2924, %v2926
      %v2987 = vsel %vm2945, %v2926, %v2928
      %v2988 = vsel %vm2945, %v2930, %v2932
      %v2989 = vsel %vm2945, %v2932, %v2934
      %v2990 = vsel %vm2945, %v2934, %v2936
      %v2991 = vsel %vm2945, %v2938, %v2940
      %v2992 = vsel %vm2945, %v2940, %v2942
      %v2993 = vsel %vm2945, %v2942, %v2944
      %3042 = vrot.lane.b32.xlu0 %v466, 118
      %v3043 = vpop.permute.xlu0 %3042
      %3044 = vrot.lane.b32.xlu0 %v467, 118
      %v3045 = vpop.permute.xlu0 %3044
      %3046 = vrot.lane.b32.xlu0 %v468, 118
      %v3047 = vpop.permute.xlu0 %3046
      %vm3048 = vcmask 965632
      %v3049 = vsel %vm3048, %v3043, %v3045
      %v3050 = vsel %vm3048, %v3045, %v3047
      %v3054 = vpack.c.bf16 %v2295, %v465
      %v3055 = vpack.c.bf16 %v2296, %v466
      %v3056 = vpack.c.bf16 %v2293, %v467
      %v3057 = vpack.c.bf16 %v2319, %v2307
      %v3058 = vpack.c.bf16 %v2320, %v2308
      %v3059 = vpack.c.bf16 %v2317, %v2305
      %v3060 = vpack.c.bf16 %v2343, %v2331
      %v3061 = vpack.c.bf16 %v2344, %v2332
      %v3062 = vpack.c.bf16 %v2341, %v2329
      %v3063 = vpack.c.bf16 %v2367, %v2355
      %v3064 = vpack.c.bf16 %v2368, %v2356
      %v3065 = vpack.c.bf16 %v2365, %v2353
      %v3066 = vpack.c.bf16 %v2391, %v2379
      %v3067 = vpack.c.bf16 %v2392, %v2380
      %v3068 = vpack.c.bf16 %v2389, %v2377
      %v3069 = vpack.c.bf16 %v2415, %v2403
      %v3070 = vpack.c.bf16 %v2416, %v2404
      %v3071 = vpack.c.bf16 %v2413, %v2401
      %v3072 = vpack.c.bf16 %v2439, %v2427
      %v3073 = vpack.c.bf16 %v2440, %v2428
      %v3074 = vpack.c.bf16 %v2437, %v2425
      %v3075 = vpack.c.bf16 %v2469, %v2454
      %v3076 = vpack.c.bf16 %v2470, %v2455
      %v3077 = vpack.c.bf16 %v2471, %v2456
      %v3078 = vpack.c.bf16 %v2724, %v2721
      %v3079 = vpack.c.bf16 %v2725, %v2722
      %v3080 = vpack.c.bf16 %v2726, %v2723
      %v3081 = vpack.c.bf16 %v2730, %v2727
      %v3082 = vpack.c.bf16 %v2731, %v2728
      %v3083 = vpack.c.bf16 %v2732, %v2729
      %v3084 = vpack.c.bf16 %v2736, %v2733
      %v3085 = vpack.c.bf16 %v2737, %v2734
      %v3086 = vpack.c.bf16 %v2738, %v2735
      %v3087 = vpack.c.bf16 %v2742, %v2739
      %v3088 = vpack.c.bf16 %v2743, %v2740
      %v3089 = vpack.c.bf16 %v2744, %v2741
      %v3090 = vpack.c.bf16 %v2748, %v2745
      %v3091 = vpack.c.bf16 %v2749, %v2746
      %v3092 = vpack.c.bf16 %v2750, %v2747
      %v3093 = vpack.c.bf16 %v2754, %v2751
      %v3094 = vpack.c.bf16 %v2755, %v2752
      %v3095 = vpack.c.bf16 %v2756, %v2753
      %v3096 = vpack.c.bf16 %v2760, %v2757
      %v3097 = vpack.c.bf16 %v2761, %v2758
      %v3098 = vpack.c.bf16 %v2762, %v2759
      %v3099 = vpack.c.bf16 %v2766, %v2763
      %v3100 = vpack.c.bf16 %v2767, %v2764
      %v3101 = vpack.c.bf16 %v2768, %v2765
      %v3102 = vpack.c.bf16 %v2949, %v2946
      %v3103 = vpack.c.bf16 %v2950, %v2947
      %v3104 = vpack.c.bf16 %v2951, %v2948
      %v3105 = vpack.c.bf16 %v2955, %v2952
      %v3106 = vpack.c.bf16 %v2956, %v2953
      %v3107 = vpack.c.bf16 %v2957, %v2954
      %v3108 = vpack.c.bf16 %v2961, %v2958
      %v3109 = vpack.c.bf16 %v2962, %v2959
      %v3110 = vpack.c.bf16 %v2963, %v2960
      %v3111 = vpack.c.bf16 %v2967, %v2964
      %v3112 = vpack.c.bf16 %v2968, %v2965
      %v3113 = vpack.c.bf16 %v2969, %v2966
      %v3114 = vpack.c.bf16 %v2973, %v2970
      %v3115 = vpack.c.bf16 %v2974, %v2971
      %v3116 = vpack.c.bf16 %v2975, %v2972
      %v3117 = vpack.c.bf16 %v2979, %v2976
      %v3118 = vpack.c.bf16 %v2980, %v2977
      %v3119 = vpack.c.bf16 %v2981, %v2978
      %v3120 = vpack.c.bf16 %v2985, %v2982
      %v3121 = vpack.c.bf16 %v2986, %v2983
      %v3122 = vpack.c.bf16 %v2987, %v2984
      %v3123 = vpack.c.bf16 %v2991, %v2988
      %v3124 = vpack.c.bf16 %v2992, %v2989
      %v3125 = vpack.c.bf16 %v2993, %v2990
      %v3126 = vpack.c.bf16 %v3049, %v3049
      %v3127 = vpack.c.bf16 %v3050, %v3050
      %v3128 = vpack.c.bf16 %v3047, %v3047
      %v3129 = vld [vmem:[%s7] sm:$0xff]
      %v3130 = vld [vmem:[%s7 + $0x8] sm:$0xff]
      %v3131 = vld [vmem:[%s7 + $0x10] sm:$0xff]
      %v3132 = vld [vmem:[%s7 + $0x18] sm:$0xff]
      %v3133 = vld [vmem:[%s7 + $0x20] sm:$0xff]
      %v3134 = vld [vmem:[%s7 + $0x28] sm:$0xff]
      %v3135 = vld [vmem:[%s7 + $0x30] sm:$0xff]
      %v3136 = vld [vmem:[%s7 + $0x38] sm:$0xff]
      %v3137 = vld [vmem:[%s8] sm:$0xff]
      %v3138 = vld [vmem:[%s8 + $0x8] sm:$0xff]
      %v3139 = vld [vmem:[%s8 + $0x10] sm:$0xff]
      %v3140 = vld [vmem:[%s8 + $0x18] sm:$0xff]
      %3142 = vset.pattern.permute.xlu0 0
      %3143 = vperm.xlu0 %3142, %v3137
      %v3144 = vpop.permute.xlu0 %3143
      %3147 = vset.pattern.permute.xlu0 0
      %3148 = vperm.xlu0 %3147, %v3138
      %v3149 = vpop.permute.xlu0 %3148
      %3152 = vset.pattern.permute.xlu0 0
      %3153 = vperm.xlu0 %3152, %v3139
      %v3154 = vpop.permute.xlu0 %3153
      %3157 = vset.pattern.permute.xlu0 0
      %3158 = vperm.xlu0 %3157, %v3140
      %v3159 = vpop.permute.xlu0 %3158
      %v3169 = vunpack.c.l.b16 %v3129
      %v3170 = vunpack.c.h.b16 %v3129
      %v3171 = vunpack.c.l.b16 %v3130
      %v3172 = vunpack.c.h.b16 %v3130
      %v3173 = vunpack.c.l.b16 %v3131
      %v3174 = vunpack.c.h.b16 %v3131
      %v3175 = vunpack.c.l.b16 %v3132
      %v3176 = vunpack.c.h.b16 %v3132
      %v3177 = vunpack.c.l.b16 %v3133
      %v3178 = vunpack.c.h.b16 %v3133
      %v3179 = vunpack.c.l.b16 %v3134
      %v3180 = vunpack.c.h.b16 %v3134
      %v3181 = vunpack.c.l.b16 %v3135
      %v3182 = vunpack.c.h.b16 %v3135
      %v3183 = vunpack.c.l.b16 %v3136
      %v3184 = vunpack.c.h.b16 %v3136
      %v3185 = vpack.c.b16 %v3173, %v3169
      %v3186 = vpack.c.b16 %v3174, %v3170
      %v3187 = vpack.c.b16 %v3175, %v3171
      %v3188 = vpack.c.b16 %v3176, %v3172
      %v3189 = vpack.c.b16 %v3181, %v3177
      %v3190 = vpack.c.b16 %v3182, %v3178
      %v3191 = vpack.c.b16 %v3183, %v3179
      %v3192 = vpack.c.b16 %v3184, %v3180
      %v3200 = vsel %vm567, %v3188, 0
      %v3203 = vsel %vm567, %v3192, 0
      %v3206 = vsel %vm580, %v3126, 0
      %v3209 = vsel %vm580, %v3127, 0
      %v3212 = vsel %vm580, %v3128, 0
      %3214 = vmatprep.subr.bf16.mxu0 %v3076
      %3215 = vmatpush1.bf16.msra.mxu0 %v3075
      %3216 = vmatprep.subr.bf16.mxu0 %v3073
      %3217 = vmatpush1.bf16.msra.mxu0 %v3072
      %3218 = vmatprep.subr.bf16.mxu0 %v3070
      %3219 = vmatpush1.bf16.msra.mxu0 %v3069
      %3220 = vmatprep.subr.bf16.mxu0 %v3067
      %3221 = vmatpush1.bf16.msra.mxu0 %v3066
      %3222 = vmatprep.subr.bf16.mxu0 %v3064
      %3223 = vmatpush1.bf16.msra.mxu0 %v3063
      %3224 = vmatprep.subr.bf16.mxu0 %v3061
      %3225 = vmatpush1.bf16.msra.mxu0 %v3060
      %3226 = vmatprep.subr.bf16.mxu0 %v3058
      %3227 = vmatpush1.bf16.msra.mxu0 %v3057
      %3228 = vmatprep.subr.bf16.mxu0 %v3055
      %3229 = vmatpush1.bf16.msra.mxu0 %v3054
      %3230 = vmatprep.subr.bf16.mxu0 %v3100
      %3231 = vmatpush2.bf16.msra.mxu0 %v3099
      %3232 = vmatprep.subr.bf16.mxu0 %v3097
      %3233 = vmatpush2.bf16.msra.mxu0 %v3096
      %3234 = vmatprep.subr.bf16.mxu0 %v3094
      %3235 = vmatpush2.bf16.msra.mxu0 %v3093
      %3236 = vmatprep.subr.bf16.mxu0 %v3091
      %3237 = vmatpush2.bf16.msra.mxu0 %v3090
      %3238 = vmatprep.subr.bf16.mxu0 %v3088
      %3239 = vmatpush2.bf16.msra.mxu0 %v3087
      %3240 = vmatprep.subr.bf16.mxu0 %v3085
      %3241 = vmatpush2.bf16.msra.mxu0 %v3084
      %3242 = vmatprep.subr.bf16.mxu0 %v3082
      %3243 = vmatpush2.bf16.msra.mxu0 %v3081
      %3244 = vmatprep.subr.bf16.mxu0 %v3079
      %3245 = vmatpush2.bf16.msra.mxu0 %v3078
      %3246 = vmatprep.mubr.bf16.mxu0 %v3186
      %3247 = vmatmul.mubr.bf16.gmra.mxu0 %v3185
      %v3248 = vpop.f32.mrf.mxu0
      %v3249 = vadd.f32 %v3144, %v3248
      %v3250 = vpop.f32.mrf.mxu0
      %v3251 = vadd.f32 %v3144, %v3250
      %v3252 = vpop.f32.mrf.mxu0
      %v3253 = vadd.f32 %v3149, %v3252
      %v3254 = vpop.f32.mrf.mxu0
      %v3255 = vadd.f32 %v3149, %v3254
      %3256 = vmatprep.mubr.bf16.mxu0 %v3190
      %3257 = vmatmul.mubr.bf16.gmra.mxu0 %v3189
      %v3258 = vpop.f32.mrf.mxu0
      %v3259 = vadd.f32 %v3154, %v3258
      %v3260 = vpop.f32.mrf.mxu0
      %v3261 = vadd.f32 %v3154, %v3260
      %v3262 = vpop.f32.mrf.mxu0
      %v3263 = vadd.f32 %v3159, %v3262
      %v3264 = vpop.f32.mrf.mxu0
      %v3265 = vadd.f32 %v3159, %v3264
      %3266 = vdwg.mxu0
      %3267 = vmatprep.subr.bf16.mxu0 %v3124
      %3268 = vmatpush1.bf16.msra.mxu0 %v3123
      %3269 = vmatprep.subr.bf16.mxu0 %v3121
      %3270 = vmatpush1.bf16.msra.mxu0 %v3120
      %3271 = vmatprep.subr.bf16.mxu0 %v3118
      %3272 = vmatpush1.bf16.msra.mxu0 %v3117
      %3273 = vmatprep.subr.bf16.mxu0 %v3115
      %3274 = vmatpush1.bf16.msra.mxu0 %v3114
      %3275 = vmatprep.subr.bf16.mxu0 %v3112
      %3276 = vmatpush1.bf16.msra.mxu0 %v3111
      %3277 = vmatprep.subr.bf16.mxu0 %v3109
      %3278 = vmatpush1.bf16.msra.mxu0 %v3108
      %3279 = vmatprep.subr.bf16.mxu0 %v3106
      %3280 = vmatpush1.bf16.msra.mxu0 %v3105
      %3281 = vmatprep.subr.bf16.mxu0 %v3103
      %3282 = vmatpush1.bf16.msra.mxu0 %v3102
      %3283 = vmatprep.subr.bf16.mxu0 0
      %3284 = vmatpush2.bf16.msra.mxu0 0
      %3285 = vmatprep.subr.bf16.mxu0 0
      %3286 = vmatpush2.bf16.msra.mxu0 0
      %3287 = vmatprep.subr.bf16.mxu0 0
      %3288 = vmatpush2.bf16.msra.mxu0 0
      %3289 = vmatprep.subr.bf16.mxu0 0
      %3290 = vmatpush2.bf16.msra.mxu0 0
      %3291 = vmatprep.subr.bf16.mxu0 0
      %3292 = vmatpush2.bf16.msra.mxu0 0
      %3293 = vmatprep.subr.bf16.mxu0 0
      %3294 = vmatpush2.bf16.msra.mxu0 0
      %3295 = vmatprep.subr.bf16.mxu0 0
      %3296 = vmatpush2.bf16.msra.mxu0 0
      %3297 = vmatprep.subr.bf16.mxu0 %v3209
      %3298 = vmatpush2.bf16.msra.mxu0 %v3206
      %3299 = vmatprep.mubr.bf16.mxu0 %v3200
      %3300 = vmatmul.mubr.bf16.gmra.mxu0 %v3187
      %v3301 = vpop.f32.mrf.mxu0
      %v3302 = vadd.f32 %v3249, %v3301
      %v3303 = vpop.f32.mrf.mxu0
      %v3304 = vadd.f32 %v3251, %v3303
      %v3305 = vpop.f32.mrf.mxu0
      %v3306 = vadd.f32 %v3253, %v3305
      %v3307 = vpop.f32.mrf.mxu0
      %v3308 = vadd.f32 %v3255, %v3307
      %3309 = vmatprep.mubr.bf16.mxu0 %v3203
      %3310 = vmatmul.mubr.bf16.gmra.mxu0 %v3191
      %v3311 = vpop.f32.mrf.mxu0
      %v3312 = vadd.f32 %v3259, %v3311
      %v3313 = vpop.f32.mrf.mxu0
      %v3314 = vadd.f32 %v3261, %v3313
      %v3315 = vpop.f32.mrf.mxu0
      %v3316 = vadd.f32 %v3263, %v3315
      %v3317 = vpop.f32.mrf.mxu0
      %v3318 = vadd.f32 %v3265, %v3317
      %3319 = vdwg.mxu0
      %3320 = vmatprep.subr.bf16.mxu0 0
      %3321 = vmatpush1.bf16.msra.mxu0 %v3077
      %3322 = vmatprep.subr.bf16.mxu0 0
      %3323 = vmatpush1.bf16.msra.mxu0 %v3074
      %3324 = vmatprep.subr.bf16.mxu0 0
      %3325 = vmatpush1.bf16.msra.mxu0 %v3071
      %3326 = vmatprep.subr.bf16.mxu0 0
      %3327 = vmatpush1.bf16.msra.mxu0 %v3068
      %3328 = vmatprep.subr.bf16.mxu0 0
      %3329 = vmatpush1.bf16.msra.mxu0 %v3065
      %3330 = vmatprep.subr.bf16.mxu0 0
      %3331 = vmatpush1.bf16.msra.mxu0 %v3062
      %3332 = vmatprep.subr.bf16.mxu0 0
      %3333 = vmatpush1.bf16.msra.mxu0 %v3059
      %3334 = vmatprep.subr.bf16.mxu0 0
      %3335 = vmatpush1.bf16.msra.mxu0 %v3056
      %3336 = vmatprep.subr.bf16.mxu0 0
      %3337 = vmatpush2.bf16.msra.mxu0 %v3101
      %3338 = vmatprep.subr.bf16.mxu0 0
      %3339 = vmatpush2.bf16.msra.mxu0 %v3098
      %3340 = vmatprep.subr.bf16.mxu0 0
      %3341 = vmatpush2.bf16.msra.mxu0 %v3095
      %3342 = vmatprep.subr.bf16.mxu0 0
      %3343 = vmatpush2.bf16.msra.mxu0 %v3092
      %3344 = vmatprep.subr.bf16.mxu0 0
      %3345 = vmatpush2.bf16.msra.mxu0 %v3089
      %3346 = vmatprep.subr.bf16.mxu0 0
      %3347 = vmatpush2.bf16.msra.mxu0 %v3086
      %3348 = vmatprep.subr.bf16.mxu0 0
      %3349 = vmatpush2.bf16.msra.mxu0 %v3083
      %3350 = vmatprep.subr.bf16.mxu0 0
      %3351 = vmatpush2.bf16.msra.mxu0 %v3080
      %3352 = vmatprep.mubr.bf16.mxu0 %v3186
      %3353 = vmatmul.mubr.bf16.gmra.mxu0 %v3185
      %v3354 = vpop.f32.mrf.mxu0
      %v3355 = vadd.f32 %v3144, %v3354
      %v3356 = vpop.f32.mrf.mxu0
      %v3357 = vpop.f32.mrf.mxu0
      %v3358 = vadd.f32 %v3149, %v3357
      %v3359 = vpop.f32.mrf.mxu0
      %3360 = vmatprep.mubr.bf16.mxu0 %v3190
      %3361 = vmatmul.mubr.bf16.gmra.mxu0 %v3189
      %v3362 = vpop.f32.mrf.mxu0
      %v3363 = vadd.f32 %v3154, %v3362
      %v3364 = vpop.f32.mrf.mxu0
      %v3365 = vpop.f32.mrf.mxu0
      %v3366 = vadd.f32 %v3159, %v3365
      %v3367 = vpop.f32.mrf.mxu0
      %3368 = vdwg.mxu0
      %3369 = vmatprep.subr.bf16.mxu0 0
      %3370 = vmatpush1.bf16.msra.mxu0 %v3125
      %3371 = vmatprep.subr.bf16.mxu0 0
      %3372 = vmatpush1.bf16.msra.mxu0 %v3122
      %3373 = vmatprep.subr.bf16.mxu0 0
      %3374 = vmatpush1.bf16.msra.mxu0 %v3119
      %3375 = vmatprep.subr.bf16.mxu0 0
      %3376 = vmatpush1.bf16.msra.mxu0 %v3116
      %3377 = vmatprep.subr.bf16.mxu0 0
      %3378 = vmatpush1.bf16.msra.mxu0 %v3113
      %3379 = vmatprep.subr.bf16.mxu0 0
      %3380 = vmatpush1.bf16.msra.mxu0 %v3110
      %3381 = vmatprep.subr.bf16.mxu0 0
      %3382 = vmatpush1.bf16.msra.mxu0 %v3107
      %3383 = vmatprep.subr.bf16.mxu0 0
      %3384 = vmatpush1.bf16.msra.mxu0 %v3104
      %3385 = vmatprep.subr.bf16.mxu0 0
      %3386 = vmatpush2.bf16.msra.mxu0 0
      %3387 = vmatprep.subr.bf16.mxu0 0
      %3388 = vmatpush2.bf16.msra.mxu0 0
      %3389 = vmatprep.subr.bf16.mxu0 0
      %3390 = vmatpush2.bf16.msra.mxu0 0
      %3391 = vmatprep.subr.bf16.mxu0 0
      %3392 = vmatpush2.bf16.msra.mxu0 0
      %3393 = vmatprep.subr.bf16.mxu0 0
      %3394 = vmatpush2.bf16.msra.mxu0 0
      %3395 = vmatprep.subr.bf16.mxu0 0
      %3396 = vmatpush2.bf16.msra.mxu0 0
      %3397 = vmatprep.subr.bf16.mxu0 0
      %3398 = vmatpush2.bf16.msra.mxu0 0
      %3399 = vmatprep.subr.bf16.mxu0 0
      %3400 = vmatpush2.bf16.msra.mxu0 %v3212
      %3401 = vmatprep.mubr.bf16.mxu0 %v3200
      %3402 = vmatmul.mubr.bf16.gmra.mxu0 %v3187
      %v3403 = vpop.f32.mrf.mxu0
      %v3404 = vadd.f32 %v3355, %v3403
      %v3405 = vpop.f32.mrf.mxu0
      %v3406 = vpop.f32.mrf.mxu0
      %v3407 = vadd.f32 %v3358, %v3406
      %v3408 = vpop.f32.mrf.mxu0
      %3409 = vmatprep.mubr.bf16.mxu0 %v3203
      %3410 = vmatmul.mubr.bf16.gmra.mxu0 %v3191
      %v3411 = vpop.f32.mrf.mxu0
      %v3412 = vadd.f32 %v3363, %v3411
      %v3413 = vpop.f32.mrf.mxu0
      %v3414 = vpop.f32.mrf.mxu0
      %v3415 = vadd.f32 %v3366, %v3414
      %v3416 = vpop.f32.mrf.mxu0
      %3417 = vdwg.mxu0
      %v3418 = vmax.f32 %v3302, 0.0
      %v3419 = vmax.f32 %v3304, 0.0
      %v3420 = vmax.f32 %v3404, 0.0
      %v3421 = vmax.f32 %v3306, 0.0
      %v3422 = vmax.f32 %v3308, 0.0
      %v3423 = vmax.f32 %v3407, 0.0
      %v3424 = vmax.f32 %v3312, 0.0
      %v3425 = vmax.f32 %v3314, 0.0
      %v3426 = vmax.f32 %v3412, 0.0
      %v3427 = vmax.f32 %v3316, 0.0
      %v3428 = vmax.f32 %v3318, 0.0
      %v3429 = vmax.f32 %v3415, 0.0
      %v3430 = vmul.f32 %v3418, %v756
      %v3431 = vmul.f32 %v3419, %v760
      %v3432 = vmul.f32 %v3420, %v764
      %v3433 = vmul.f32 %v3421, %v756
      %v3434 = vmul.f32 %v3422, %v760
      %v3435 = vmul.f32 %v3423, %v764
      %v3436 = vmul.f32 %v3424, %v756
      %v3437 = vmul.f32 %v3425, %v760
      %v3438 = vmul.f32 %v3426, %v764
      %v3439 = vmul.f32 %v3427, %v756
      %v3440 = vmul.f32 %v3428, %v760
      %v3441 = vmul.f32 %v3429, %v764
      %v3442 = vpack.c.bf16 %v3433, %v3430
      %v3443 = vpack.c.bf16 %v3434, %v3431
      %v3444 = vpack.c.bf16 %v3435, %v3432
      %v3445 = vpack.c.bf16 %v3439, %v3436
      %v3446 = vpack.c.bf16 %v3440, %v3437
      %v3447 = vpack.c.bf16 %v3441, %v3438
      %3454 = vrot.lane.b32.xlu0 %v3442, 69
      %v3455 = vpop.permute.xlu0 %3454
      %3456 = vrot.lane.b32.xlu0 %v3443, 69
      %v3457 = vpop.permute.xlu0 %3456
      %3458 = vrot.lane.b32.xlu0 %v3444, 69
      %v3459 = vpop.permute.xlu0 %3458
      %3460 = vrot.lane.b32.xlu0 %v3445, 69
      %v3461 = vpop.permute.xlu0 %3460
      %3462 = vrot.lane.b32.xlu0 %v3446, 69
      %v3463 = vpop.permute.xlu0 %3462
      %3464 = vrot.lane.b32.xlu0 %v3447, 69
      %v3465 = vpop.permute.xlu0 %3464
      %v3466 = vsel %vm840, %v3455, %v3457
      %v3467 = vsel %vm840, %v3457, %v3459
      %v3468 = vsel %vm840, %v3461, %v3463
      %v3469 = vsel %vm840, %v3463, %v3465
      %v3471 = vsel %vm849, 0, %v3455
      %v3473 = vsel %vm849, 0, %v3461
      %v3475 = vsel %vm859, %v3459, 0
      %v3477 = vsel %vm859, %v3465, 0
      %3482 = vrot.lane.b32.xlu0 %v3471, 127
      %v3483 = vpop.permute.xlu0 %3482
      %3484 = vrot.lane.b32.xlu0 %v3466, 127
      %v3485 = vpop.permute.xlu0 %3484
      %3486 = vrot.lane.b32.xlu0 %v3467, 127
      %v3487 = vpop.permute.xlu0 %3486
      %3488 = vrot.lane.b32.xlu0 %v3475, 127
      %v3489 = vpop.permute.xlu0 %3488
      %3490 = vrot.lane.b32.xlu0 %v3473, 127
      %v3491 = vpop.permute.xlu0 %3490
      %3492 = vrot.lane.b32.xlu0 %v3468, 127
      %v3493 = vpop.permute.xlu0 %3492
      %3494 = vrot.lane.b32.xlu0 %v3469, 127
      %v3495 = vpop.permute.xlu0 %3494
      %3496 = vrot.lane.b32.xlu0 %v3477, 127
      %v3497 = vpop.permute.xlu0 %3496
      %v3498 = vsel %vm908, %v3483, %v3485
      %v3499 = vsel %vm908, %v3485, %v3487
      %v3500 = vsel %vm908, %v3487, %v3489
      %v3501 = vsel %vm908, %v3491, %v3493
      %v3502 = vsel %vm908, %v3493, %v3495
      %v3503 = vsel %vm908, %v3495, %v3497
      %3504 = vrot.lane.b32.xlu0 %v3471, 126
      %v3505 = vpop.permute.xlu0 %3504
      %3506 = vrot.lane.b32.xlu0 %v3466, 126
      %v3507 = vpop.permute.xlu0 %3506
      %3508 = vrot.lane.b32.xlu0 %v3467, 126
      %v3509 = vpop.permute.xlu0 %3508
      %3510 = vrot.lane.b32.xlu0 %v3475, 126
      %v3511 = vpop.permute.xlu0 %3510
      %3512 = vrot.lane.b32.xlu0 %v3473, 126
      %v3513 = vpop.permute.xlu0 %3512
      %3514 = vrot.lane.b32.xlu0 %v3468, 126
      %v3515 = vpop.permute.xlu0 %3514
      %3516 = vrot.lane.b32.xlu0 %v3469, 126
      %v3517 = vpop.permute.xlu0 %3516
      %3518 = vrot.lane.b32.xlu0 %v3477, 126
      %v3519 = vpop.permute.xlu0 %3518
      %v3520 = vsel %vm953, %v3505, %v3507
      %v3521 = vsel %vm953, %v3507, %v3509
      %v3522 = vsel %vm953, %v3509, %v3511
      %v3523 = vsel %vm953, %v3513, %v3515
      %v3524 = vsel %vm953, %v3515, %v3517
      %v3525 = vsel %vm953, %v3517, %v3519
      %3526 = vrot.lane.b32.xlu0 %v3471, 106
      %v3527 = vpop.permute.xlu0 %3526
      %3528 = vrot.lane.b32.xlu0 %v3466, 106
      %v3529 = vpop.permute.xlu0 %3528
      %3530 = vrot.lane.b32.xlu0 %v3467, 106
      %v3531 = vpop.permute.xlu0 %3530
      %3532 = vrot.lane.b32.xlu0 %v3475, 106
      %v3533 = vpop.permute.xlu0 %3532
      %3534 = vrot.lane.b32.xlu0 %v3473, 106
      %v3535 = vpop.permute.xlu0 %3534
      %3536 = vrot.lane.b32.xlu0 %v3468, 106
      %v3537 = vpop.permute.xlu0 %3536
      %3538 = vrot.lane.b32.xlu0 %v3469, 106
      %v3539 = vpop.permute.xlu0 %3538
      %3540 = vrot.lane.b32.xlu0 %v3477, 106
      %v3541 = vpop.permute.xlu0 %3540
      %v3542 = vsel %vm998, %v3527, %v3529
      %v3543 = vsel %vm998, %v3529, %v3531
      %v3544 = vsel %vm998, %v3531, %v3533
      %v3545 = vsel %vm998, %v3535, %v3537
      %v3546 = vsel %vm998, %v3537, %v3539
      %v3547 = vsel %vm998, %v3539, %v3541
      %3548 = vrot.lane.b32.xlu0 %v3471, 105
      %v3549 = vpop.permute.xlu0 %3548
      %3550 = vrot.lane.b32.xlu0 %v3466, 105
      %v3551 = vpop.permute.xlu0 %3550
      %3552 = vrot.lane.b32.xlu0 %v3467, 105
      %v3553 = vpop.permute.xlu0 %3552
      %3554 = vrot.lane.b32.xlu0 %v3475, 105
      %v3555 = vpop.permute.xlu0 %3554
      %3556 = vrot.lane.b32.xlu0 %v3473, 105
      %v3557 = vpop.permute.xlu0 %3556
      %3558 = vrot.lane.b32.xlu0 %v3468, 105
      %v3559 = vpop.permute.xlu0 %3558
      %3560 = vrot.lane.b32.xlu0 %v3469, 105
      %v3561 = vpop.permute.xlu0 %3560
      %3562 = vrot.lane.b32.xlu0 %v3477, 105
      %v3563 = vpop.permute.xlu0 %3562
      %v3564 = vsel %vm1043, %v3549, %v3551
      %v3565 = vsel %vm1043, %v3551, %v3553
      %v3566 = vsel %vm1043, %v3553, %v3555
      %v3567 = vsel %vm1043, %v3557, %v3559
      %v3568 = vsel %vm1043, %v3559, %v3561
      %v3569 = vsel %vm1043, %v3561, %v3563
      %3570 = vrot.lane.b32.xlu0 %v3471, 104
      %v3571 = vpop.permute.xlu0 %3570
      %3572 = vrot.lane.b32.xlu0 %v3466, 104
      %v3573 = vpop.permute.xlu0 %3572
      %3574 = vrot.lane.b32.xlu0 %v3467, 104
      %v3575 = vpop.permute.xlu0 %3574
      %3576 = vrot.lane.b32.xlu0 %v3475, 104
      %v3577 = vpop.permute.xlu0 %3576
      %3578 = vrot.lane.b32.xlu0 %v3473, 104
      %v3579 = vpop.permute.xlu0 %3578
      %3580 = vrot.lane.b32.xlu0 %v3468, 104
      %v3581 = vpop.permute.xlu0 %3580
      %3582 = vrot.lane.b32.xlu0 %v3469, 104
      %v3583 = vpop.permute.xlu0 %3582
      %3584 = vrot.lane.b32.xlu0 %v3477, 104
      %v3585 = vpop.permute.xlu0 %3584
      %v3586 = vsel %vm1088, %v3571, %v3573
      %v3587 = vsel %vm1088, %v3573, %v3575
      %v3588 = vsel %vm1088, %v3575, %v3577
      %v3589 = vsel %vm1088, %v3579, %v3581
      %v3590 = vsel %vm1088, %v3581, %v3583
      %v3591 = vsel %vm1088, %v3583, %v3585
      %3592 = vrot.lane.b32.xlu0 %v3471, 84
      %v3593 = vpop.permute.xlu0 %3592
      %3594 = vrot.lane.b32.xlu0 %v3466, 84
      %v3595 = vpop.permute.xlu0 %3594
      %3596 = vrot.lane.b32.xlu0 %v3467, 84
      %v3597 = vpop.permute.xlu0 %3596
      %3598 = vrot.lane.b32.xlu0 %v3475, 84
      %v3599 = vpop.permute.xlu0 %3598
      %3600 = vrot.lane.b32.xlu0 %v3473, 84
      %v3601 = vpop.permute.xlu0 %3600
      %3602 = vrot.lane.b32.xlu0 %v3468, 84
      %v3603 = vpop.permute.xlu0 %3602
      %3604 = vrot.lane.b32.xlu0 %v3469, 84
      %v3605 = vpop.permute.xlu0 %3604
      %3606 = vrot.lane.b32.xlu0 %v3477, 84
      %v3607 = vpop.permute.xlu0 %3606
      %v3608 = vsel %vm1133, %v3593, %v3595
      %v3609 = vsel %vm1133, %v3595, %v3597
      %v3610 = vsel %vm1133, %v3597, %v3599
      %v3611 = vsel %vm1133, %v3601, %v3603
      %v3612 = vsel %vm1133, %v3603, %v3605
      %v3613 = vsel %vm1133, %v3605, %v3607
      %3614 = vrot.lane.b32.xlu0 %v3471, 83
      %v3615 = vpop.permute.xlu0 %3614
      %3616 = vrot.lane.b32.xlu0 %v3466, 83
      %v3617 = vpop.permute.xlu0 %3616
      %3618 = vrot.lane.b32.xlu0 %v3467, 83
      %v3619 = vpop.permute.xlu0 %3618
      %3620 = vrot.lane.b32.xlu0 %v3475, 83
      %v3621 = vpop.permute.xlu0 %3620
      %3622 = vrot.lane.b32.xlu0 %v3473, 83
      %v3623 = vpop.permute.xlu0 %3622
      %3624 = vrot.lane.b32.xlu0 %v3468, 83
      %v3625 = vpop.permute.xlu0 %3624
      %3626 = vrot.lane.b32.xlu0 %v3469, 83
      %v3627 = vpop.permute.xlu0 %3626
      %3628 = vrot.lane.b32.xlu0 %v3477, 83
      %v3629 = vpop.permute.xlu0 %3628
      %v3630 = vsel %vm1178, %v3615, %v3617
      %v3631 = vsel %vm1178, %v3617, %v3619
      %v3632 = vsel %vm1178, %v3619, %v3621
      %v3633 = vsel %vm1178, %v3623, %v3625
      %v3634 = vsel %vm1178, %v3625, %v3627
      %v3635 = vsel %vm1178, %v3627, %v3629
      %3636 = vrot.lane.b32.xlu0 %v3471, 82
      %v3637 = vpop.permute.xlu0 %3636
      %3638 = vrot.lane.b32.xlu0 %v3466, 82
      %v3639 = vpop.permute.xlu0 %3638
      %3640 = vrot.lane.b32.xlu0 %v3467, 82
      %v3641 = vpop.permute.xlu0 %3640
      %3642 = vrot.lane.b32.xlu0 %v3475, 82
      %v3643 = vpop.permute.xlu0 %3642
      %3644 = vrot.lane.b32.xlu0 %v3473, 82
      %v3645 = vpop.permute.xlu0 %3644
      %3646 = vrot.lane.b32.xlu0 %v3468, 82
      %v3647 = vpop.permute.xlu0 %3646
      %3648 = vrot.lane.b32.xlu0 %v3469, 82
      %v3649 = vpop.permute.xlu0 %3648
      %3650 = vrot.lane.b32.xlu0 %v3477, 82
      %v3651 = vpop.permute.xlu0 %3650
      %v3652 = vsel %vm1223, %v3637, %v3639
      %v3653 = vsel %vm1223, %v3639, %v3641
      %v3654 = vsel %vm1223, %v3641, %v3643
      %v3655 = vsel %vm1223, %v3645, %v3647
      %v3656 = vsel %vm1223, %v3647, %v3649
      %v3657 = vsel %vm1223, %v3649, %v3651
      %v3658 = vld [vmem:[%s9] sm:$0xff]
      %v3659 = vld [vmem:[%s9 + $0x8] sm:$0xf]
      %v3660 = vld [vmem:[%s9 + $0xc] sm:$0xff]
      %v3661 = vld [vmem:[%s9 + $0x14] sm:$0xf]
      %v3662 = vld [vmem:[%s10] sm:$0xff]
      %v3663 = vld [vmem:[%s10 + $0x8] sm:$0xff]
      %3665 = vset.pattern.permute.xlu0 0
      %3666 = vperm.xlu0 %3665, %v3662
      %v3667 = vpop.permute.xlu0 %3666
      %3670 = vset.pattern.permute.xlu0 0
      %3671 = vperm.xlu0 %3670, %v3663
      %v3672 = vpop.permute.xlu0 %3671
      %v3678 = vunpack.c.l.b16 %v3658
      %v3679 = vunpack.c.h.b16 %v3658
      %v3680 = vunpack.c.l.b16 %v3659
      %v3681 = vunpack.c.l.b16 %v3660
      %v3682 = vunpack.c.h.b16 %v3660
      %v3683 = vunpack.c.l.b16 %v3661
      %v3684 = vpack.c.b16 %v3681, %v3678
      %v3685 = vpack.c.b16 %v3682, %v3679
      %v3686 = vpack.c.b16 %v3683, %v3680
      %3689 = vrot.lane.b32.xlu0 %v3498, 82
      %v3690 = vpop.permute.xlu0 %3689
      %3691 = vrot.lane.b32.xlu0 %v3499, 82
      %v3692 = vpop.permute.xlu0 %3691
      %3693 = vrot.lane.b32.xlu0 %v3500, 82
      %v3694 = vpop.permute.xlu0 %3693
      %3695 = vrot.lane.b32.xlu0 %v3489, 82
      %v3696 = vpop.permute.xlu0 %3695
      %3697 = vrot.lane.b32.xlu0 %v3501, 82
      %v3698 = vpop.permute.xlu0 %3697
      %3699 = vrot.lane.b32.xlu0 %v3502, 82
      %v3700 = vpop.permute.xlu0 %3699
      %3701 = vrot.lane.b32.xlu0 %v3503, 82
      %v3702 = vpop.permute.xlu0 %3701
      %3703 = vrot.lane.b32.xlu0 %v3497, 82
      %v3704 = vpop.permute.xlu0 %3703
      %3705 = vrot.lane.b32.xlu0 %v3520, 82
      %v3706 = vpop.permute.xlu0 %3705
      %3707 = vrot.lane.b32.xlu0 %v3521, 82
      %v3708 = vpop.permute.xlu0 %3707
      %3709 = vrot.lane.b32.xlu0 %v3522, 82
      %v3710 = vpop.permute.xlu0 %3709
      %3711 = vrot.lane.b32.xlu0 %v3511, 82
      %v3712 = vpop.permute.xlu0 %3711
      %3713 = vrot.lane.b32.xlu0 %v3523, 82
      %v3714 = vpop.permute.xlu0 %3713
      %3715 = vrot.lane.b32.xlu0 %v3524, 82
      %v3716 = vpop.permute.xlu0 %3715
      %3717 = vrot.lane.b32.xlu0 %v3525, 82
      %v3718 = vpop.permute.xlu0 %3717
      %3719 = vrot.lane.b32.xlu0 %v3519, 82
      %v3720 = vpop.permute.xlu0 %3719
      %3721 = vrot.lane.b32.xlu0 %v3542, 82
      %v3722 = vpop.permute.xlu0 %3721
      %3723 = vrot.lane.b32.xlu0 %v3543, 82
      %v3724 = vpop.permute.xlu0 %3723
      %3725 = vrot.lane.b32.xlu0 %v3544, 82
      %v3726 = vpop.permute.xlu0 %3725
      %3727 = vrot.lane.b32.xlu0 %v3533, 82
      %v3728 = vpop.permute.xlu0 %3727
      %3729 = vrot.lane.b32.xlu0 %v3545, 82
      %v3730 = vpop.permute.xlu0 %3729
      %3731 = vrot.lane.b32.xlu0 %v3546, 82
      %v3732 = vpop.permute.xlu0 %3731
      %3733 = vrot.lane.b32.xlu0 %v3547, 82
      %v3734 = vpop.permute.xlu0 %3733
      %3735 = vrot.lane.b32.xlu0 %v3541, 82
      %v3736 = vpop.permute.xlu0 %3735
      %3737 = vrot.lane.b32.xlu0 %v3564, 82
      %v3738 = vpop.permute.xlu0 %3737
      %3739 = vrot.lane.b32.xlu0 %v3565, 82
      %v3740 = vpop.permute.xlu0 %3739
      %3741 = vrot.lane.b32.xlu0 %v3566, 82
      %v3742 = vpop.permute.xlu0 %3741
      %3743 = vrot.lane.b32.xlu0 %v3555, 82
      %v3744 = vpop.permute.xlu0 %3743
      %3745 = vrot.lane.b32.xlu0 %v3567, 82
      %v3746 = vpop.permute.xlu0 %3745
      %3747 = vrot.lane.b32.xlu0 %v3568, 82
      %v3748 = vpop.permute.xlu0 %3747
      %3749 = vrot.lane.b32.xlu0 %v3569, 82
      %v3750 = vpop.permute.xlu0 %3749
      %3751 = vrot.lane.b32.xlu0 %v3563, 82
      %v3752 = vpop.permute.xlu0 %3751
      %3753 = vrot.lane.b32.xlu0 %v3586, 82
      %v3754 = vpop.permute.xlu0 %3753
      %3755 = vrot.lane.b32.xlu0 %v3587, 82
      %v3756 = vpop.permute.xlu0 %3755
      %3757 = vrot.lane.b32.xlu0 %v3588, 82
      %v3758 = vpop.permute.xlu0 %3757
      %3759 = vrot.lane.b32.xlu0 %v3577, 82
      %v3760 = vpop.permute.xlu0 %3759
      %3761 = vrot.lane.b32.xlu0 %v3589, 82
      %v3762 = vpop.permute.xlu0 %3761
      %3763 = vrot.lane.b32.xlu0 %v3590, 82
      %v3764 = vpop.permute.xlu0 %3763
      %3765 = vrot.lane.b32.xlu0 %v3591, 82
      %v3766 = vpop.permute.xlu0 %3765
      %3767 = vrot.lane.b32.xlu0 %v3585, 82
      %v3768 = vpop.permute.xlu0 %3767
      %3769 = vrot.lane.b32.xlu0 %v3608, 82
      %v3770 = vpop.permute.xlu0 %3769
      %3771 = vrot.lane.b32.xlu0 %v3609, 82
      %v3772 = vpop.permute.xlu0 %3771
      %3773 = vrot.lane.b32.xlu0 %v3610, 82
      %v3774 = vpop.permute.xlu0 %3773
      %3775 = vrot.lane.b32.xlu0 %v3599, 82
      %v3776 = vpop.permute.xlu0 %3775
      %3777 = vrot.lane.b32.xlu0 %v3611, 82
      %v3778 = vpop.permute.xlu0 %3777
      %3779 = vrot.lane.b32.xlu0 %v3612, 82
      %v3780 = vpop.permute.xlu0 %3779
      %3781 = vrot.lane.b32.xlu0 %v3613, 82
      %v3782 = vpop.permute.xlu0 %3781
      %3783 = vrot.lane.b32.xlu0 %v3607, 82
      %v3784 = vpop.permute.xlu0 %3783
      %3785 = vrot.lane.b32.xlu0 %v3630, 82
      %v3786 = vpop.permute.xlu0 %3785
      %3787 = vrot.lane.b32.xlu0 %v3631, 82
      %v3788 = vpop.permute.xlu0 %3787
      %3789 = vrot.lane.b32.xlu0 %v3632, 82
      %v3790 = vpop.permute.xlu0 %3789
      %3791 = vrot.lane.b32.xlu0 %v3621, 82
      %v3792 = vpop.permute.xlu0 %3791
      %3793 = vrot.lane.b32.xlu0 %v3633, 82
      %v3794 = vpop.permute.xlu0 %3793
      %3795 = vrot.lane.b32.xlu0 %v3634, 82
      %v3796 = vpop.permute.xlu0 %3795
      %3797 = vrot.lane.b32.xlu0 %v3635, 82
      %v3798 = vpop.permute.xlu0 %3797
      %3799 = vrot.lane.b32.xlu0 %v3629, 82
      %v3800 = vpop.permute.xlu0 %3799
      %3801 = vrot.lane.b32.xlu0 %v3652, 82
      %v3802 = vpop.permute.xlu0 %3801
      %3803 = vrot.lane.b32.xlu0 %v3653, 82
      %v3804 = vpop.permute.xlu0 %3803
      %3805 = vrot.lane.b32.xlu0 %v3654, 82
      %v3806 = vpop.permute.xlu0 %3805
      %3807 = vrot.lane.b32.xlu0 %v3643, 82
      %v3808 = vpop.permute.xlu0 %3807
      %3809 = vrot.lane.b32.xlu0 %v3655, 82
      %v3810 = vpop.permute.xlu0 %3809
      %3811 = vrot.lane.b32.xlu0 %v3656, 82
      %v3812 = vpop.permute.xlu0 %3811
      %3813 = vrot.lane.b32.xlu0 %v3657, 82
      %v3814 = vpop.permute.xlu0 %3813
      %3815 = vrot.lane.b32.xlu0 %v3651, 82
      %v3816 = vpop.permute.xlu0 %3815
      %v3817 = vsel %vm1223, %v3690, %v3692
      %v3818 = vsel %vm1223, %v3692, %v3694
      %v3819 = vsel %vm1223, %v3694, %v3696
      %v3820 = vsel %vm1223, %v3698, %v3700
      %v3821 = vsel %vm1223, %v3700, %v3702
      %v3822 = vsel %vm1223, %v3702, %v3704
      %v3823 = vsel %vm1223, %v3706, %v3708
      %v3824 = vsel %vm1223, %v3708, %v3710
      %v3825 = vsel %vm1223, %v3710, %v3712
      %v3826 = vsel %vm1223, %v3714, %v3716
      %v3827 = vsel %vm1223, %v3716, %v3718
      %v3828 = vsel %vm1223, %v3718, %v3720
      %v3829 = vsel %vm1223, %v3722, %v3724
      %v3830 = vsel %vm1223, %v3724, %v3726
      %v3831 = vsel %vm1223, %v3726, %v3728
      %v3832 = vsel %vm1223, %v3730, %v3732
      %v3833 = vsel %vm1223, %v3732, %v3734
      %v3834 = vsel %vm1223, %v3734, %v3736
      %v3835 = vsel %vm1223, %v3738, %v3740
      %v3836 = vsel %vm1223, %v3740, %v3742
      %v3837 = vsel %vm1223, %v3742, %v3744
      %v3838 = vsel %vm1223, %v3746, %v3748
      %v3839 = vsel %vm1223, %v3748, %v3750
      %v3840 = vsel %vm1223, %v3750, %v3752
      %v3841 = vsel %vm1223, %v3754, %v3756
      %v3842 = vsel %vm1223, %v3756, %v3758
      %v3843 = vsel %vm1223, %v3758, %v3760
      %v3844 = vsel %vm1223, %v3762, %v3764
      %v3845 = vsel %vm1223, %v3764, %v3766
      %v3846 = vsel %vm1223, %v3766, %v3768
      %v3847 = vsel %vm1223, %v3770, %v3772
      %v3848 = vsel %vm1223, %v3772, %v3774
      %v3849 = vsel %vm1223, %v3774, %v3776
      %v3850 = vsel %vm1223, %v3778, %v3780
      %v3851 = vsel %vm1223, %v3780, %v3782
      %v3852 = vsel %vm1223, %v3782, %v3784
      %v3853 = vsel %vm1223, %v3786, %v3788
      %v3854 = vsel %vm1223, %v3788, %v3790
      %v3855 = vsel %vm1223, %v3790, %v3792
      %v3856 = vsel %vm1223, %v3794, %v3796
      %v3857 = vsel %vm1223, %v3796, %v3798
      %v3858 = vsel %vm1223, %v3798, %v3800
      %v3859 = vsel %vm1223, %v3802, %v3804
      %v3860 = vsel %vm1223, %v3804, %v3806
      %v3861 = vsel %vm1223, %v3806, %v3808
      %v3862 = vsel %vm1223, %v3810, %v3812
      %v3863 = vsel %vm1223, %v3812, %v3814
      %v3864 = vsel %vm1223, %v3814, %v3816
      %vm3919 = vcmask 261120
      %v3921 = vsel %vm3919, %v3686, 0
      %3923 = vmatprep.subr.bf16.mxu0 %v3833
      %3924 = vmatpush1.bf16.msra.mxu0 %v3832
      %3925 = vmatprep.subr.bf16.mxu0 %v3830
      %3926 = vmatpush1.bf16.msra.mxu0 %v3829
      %3927 = vmatprep.subr.bf16.mxu0 %v3827
      %3928 = vmatpush1.bf16.msra.mxu0 %v3826
      %3929 = vmatprep.subr.bf16.mxu0 %v3824
      %3930 = vmatpush1.bf16.msra.mxu0 %v3823
      %3931 = vmatprep.subr.bf16.mxu0 %v3821
      %3932 = vmatpush1.bf16.msra.mxu0 %v3820
      %3933 = vmatprep.subr.bf16.mxu0 %v3818
      %3934 = vmatpush1.bf16.msra.mxu0 %v3817
      %3935 = vmatprep.subr.bf16.mxu0 %v3656
      %3936 = vmatpush1.bf16.msra.mxu0 %v3655
      %3937 = vmatprep.subr.bf16.mxu0 %v3653
      %3938 = vmatpush1.bf16.msra.mxu0 %v3652
      %3939 = vmatprep.subr.bf16.mxu0 %v3857
      %3940 = vmatpush2.bf16.msra.mxu0 %v3856
      %3941 = vmatprep.subr.bf16.mxu0 %v3854
      %3942 = vmatpush2.bf16.msra.mxu0 %v3853
      %3943 = vmatprep.subr.bf16.mxu0 %v3851
      %3944 = vmatpush2.bf16.msra.mxu0 %v3850
      %3945 = vmatprep.subr.bf16.mxu0 %v3848
      %3946 = vmatpush2.bf16.msra.mxu0 %v3847
      %3947 = vmatprep.subr.bf16.mxu0 %v3845
      %3948 = vmatpush2.bf16.msra.mxu0 %v3844
      %3949 = vmatprep.subr.bf16.mxu0 %v3842
      %3950 = vmatpush2.bf16.msra.mxu0 %v3841
      %3951 = vmatprep.subr.bf16.mxu0 %v3839
      %3952 = vmatpush2.bf16.msra.mxu0 %v3838
      %3953 = vmatprep.subr.bf16.mxu0 %v3836
      %3954 = vmatpush2.bf16.msra.mxu0 %v3835
      %3955 = vmatprep.mubr.bf16.mxu0 %v3685
      %3956 = vmatmul.mubr.bf16.gmra.mxu0 %v3684
      %v3957 = vpop.f32.mrf.mxu0
      %v3958 = vadd.f32 %v3667, %v3957
      %v3959 = vpop.f32.mrf.mxu0
      %v3960 = vadd.f32 %v3667, %v3959
      %v3961 = vpop.f32.mrf.mxu0
      %v3962 = vadd.f32 %v3672, %v3961
      %v3963 = vpop.f32.mrf.mxu0
      %v3964 = vadd.f32 %v3672, %v3963
      %3965 = vdwg.mxu0
      %3966 = vmatprep.subr.bf16.mxu0 0
      %3967 = vmatpush1.bf16.msra.mxu0 0
      %3968 = vmatprep.subr.bf16.mxu0 0
      %3969 = vmatpush1.bf16.msra.mxu0 0
      %3970 = vmatprep.subr.bf16.mxu0 0
      %3971 = vmatpush1.bf16.msra.mxu0 0
      %3972 = vmatprep.subr.bf16.mxu0 0
      %3973 = vmatpush1.bf16.msra.mxu0 0
      %3974 = vmatprep.subr.bf16.mxu0 0
      %3975 = vmatpush1.bf16.msra.mxu0 0
      %3976 = vmatprep.subr.bf16.mxu0 0
      %3977 = vmatpush1.bf16.msra.mxu0 0
      %3978 = vmatprep.subr.bf16.mxu0 %v3863
      %3979 = vmatpush1.bf16.msra.mxu0 %v3862
      %3980 = vmatprep.subr.bf16.mxu0 %v3860
      %3981 = vmatpush1.bf16.msra.mxu0 %v3859
      %3982 = vmatprep.subr.bf16.mxu0 0
      %3983 = vmatpush2.bf16.msra.mxu0 0
      %3984 = vmatprep.subr.bf16.mxu0 0
      %3985 = vmatpush2.bf16.msra.mxu0 0
      %3986 = vmatprep.subr.bf16.mxu0 0
      %3987 = vmatpush2.bf16.msra.mxu0 0
      %3988 = vmatprep.subr.bf16.mxu0 0
      %3989 = vmatpush2.bf16.msra.mxu0 0
      %3990 = vmatprep.subr.bf16.mxu0 0
      %3991 = vmatpush2.bf16.msra.mxu0 0
      %3992 = vmatprep.subr.bf16.mxu0 0
      %3993 = vmatpush2.bf16.msra.mxu0 0
      %3994 = vmatprep.subr.bf16.mxu0 0
      %3995 = vmatpush2.bf16.msra.mxu0 0
      %3996 = vmatprep.subr.bf16.mxu0 0
      %3997 = vmatpush2.bf16.msra.mxu0 0
      %3998 = vmatprep.mubr.bf16.mxu0 0
      %3999 = vmatmul.mubr.bf16.gmra.mxu0 %v3921
      %v4000 = vpop.f32.mrf.mxu0
      %v4001 = vadd.f32 %v3958, %v4000
      %v4002 = vpop.f32.mrf.mxu0
      %v4003 = vadd.f32 %v3960, %v4002
      %v4004 = vpop.f32.mrf.mxu0
      %v4005 = vadd.f32 %v3962, %v4004
      %v4006 = vpop.f32.mrf.mxu0
      %v4007 = vadd.f32 %v3964, %v4006
      %4008 = vdwg.mxu0
      %4009 = vmatprep.subr.bf16.mxu0 0
      %4010 = vmatpush1.bf16.msra.mxu0 %v3834
      %4011 = vmatprep.subr.bf16.mxu0 0
      %4012 = vmatpush1.bf16.msra.mxu0 %v3831
      %4013 = vmatprep.subr.bf16.mxu0 0
      %4014 = vmatpush1.bf16.msra.mxu0 %v3828
      %4015 = vmatprep.subr.bf16.mxu0 0
      %4016 = vmatpush1.bf16.msra.mxu0 %v3825
      %4017 = vmatprep.subr.bf16.mxu0 0
      %4018 = vmatpush1.bf16.msra.mxu0 %v3822
      %4019 = vmatprep.subr.bf16.mxu0 0
      %4020 = vmatpush1.bf16.msra.mxu0 %v3819
      %4021 = vmatprep.subr.bf16.mxu0 0
      %4022 = vmatpush1.bf16.msra.mxu0 %v3657
      %4023 = vmatprep.subr.bf16.mxu0 0
      %4024 = vmatpush1.bf16.msra.mxu0 %v3654
      %4025 = vmatprep.subr.bf16.mxu0 0
      %4026 = vmatpush2.bf16.msra.mxu0 %v3858
      %4027 = vmatprep.subr.bf16.mxu0 0
      %4028 = vmatpush2.bf16.msra.mxu0 %v3855
      %4029 = vmatprep.subr.bf16.mxu0 0
      %4030 = vmatpush2.bf16.msra.mxu0 %v3852
      %4031 = vmatprep.subr.bf16.mxu0 0
      %4032 = vmatpush2.bf16.msra.mxu0 %v3849
      %4033 = vmatprep.subr.bf16.mxu0 0
      %4034 = vmatpush2.bf16.msra.mxu0 %v3846
      %4035 = vmatprep.subr.bf16.mxu0 0
      %4036 = vmatpush2.bf16.msra.mxu0 %v3843
      %4037 = vmatprep.subr.bf16.mxu0 0
      %4038 = vmatpush2.bf16.msra.mxu0 %v3840
      %4039 = vmatprep.subr.bf16.mxu0 0
      %4040 = vmatpush2.bf16.msra.mxu0 %v3837
      %4041 = vmatprep.mubr.bf16.mxu0 %v3685
      %4042 = vmatmul.mubr.bf16.gmra.mxu0 %v3684
      %v4043 = vpop.f32.mrf.mxu0
      %v4044 = vadd.f32 %v3667, %v4043
      %v4045 = vpop.f32.mrf.mxu0
      %v4046 = vpop.f32.mrf.mxu0
      %v4047 = vadd.f32 %v3672, %v4046
      %v4048 = vpop.f32.mrf.mxu0
      %4049 = vdwg.mxu0
      %4050 = vmatprep.subr.bf16.mxu0 0
      %4051 = vmatpush1.bf16.msra.mxu0 0
      %4052 = vmatprep.subr.bf16.mxu0 0
      %4053 = vmatpush1.bf16.msra.mxu0 0
      %4054 = vmatprep.subr.bf16.mxu0 0
      %4055 = vmatpush1.bf16.msra.mxu0 0
      %4056 = vmatprep.subr.bf16.mxu0 0
      %4057 = vmatpush1.bf16.msra.mxu0 0
      %4058 = vmatprep.subr.bf16.mxu0 0
      %4059 = vmatpush1.bf16.msra.mxu0 0
      %4060 = vmatprep.subr.bf16.mxu0 0
      %4061 = vmatpush1.bf16.msra.mxu0 0
      %4062 = vmatprep.subr.bf16.mxu0 0
      %4063 = vmatpush1.bf16.msra.mxu0 %v3864
      %4064 = vmatprep.subr.bf16.mxu0 0
      %4065 = vmatpush1.bf16.msra.mxu0 %v3861
      %4066 = vmatprep.subr.bf16.mxu0 0
      %4067 = vmatpush2.bf16.msra.mxu0 0
      %4068 = vmatprep.subr.bf16.mxu0 0
      %4069 = vmatpush2.bf16.msra.mxu0 0
      %4070 = vmatprep.subr.bf16.mxu0 0
      %4071 = vmatpush2.bf16.msra.mxu0 0
      %4072 = vmatprep.subr.bf16.mxu0 0
      %4073 = vmatpush2.bf16.msra.mxu0 0
      %4074 = vmatprep.subr.bf16.mxu0 0
      %4075 = vmatpush2.bf16.msra.mxu0 0
      %4076 = vmatprep.subr.bf16.mxu0 0
      %4077 = vmatpush2.bf16.msra.mxu0 0
      %4078 = vmatprep.subr.bf16.mxu0 0
      %4079 = vmatpush2.bf16.msra.mxu0 0
      %4080 = vmatprep.subr.bf16.mxu0 0
      %4081 = vmatpush2.bf16.msra.mxu0 0
      %4082 = vmatprep.mubr.bf16.mxu0 0
      %4083 = vmatmul.mubr.bf16.gmra.mxu0 %v3921
      %v4084 = vpop.f32.mrf.mxu0
      %v4085 = vadd.f32 %v4044, %v4084
      %v4086 = vpop.f32.mrf.mxu0
      %v4087 = vpop.f32.mrf.mxu0
      %v4088 = vadd.f32 %v4047, %v4087
      %v4089 = vpop.f32.mrf.mxu0
      %4090 = vdwg.mxu0
      %v4091 = vmax.f32 %v4001, 0.0
      %v4092 = vmax.f32 %v4003, 0.0
      %v4093 = vmax.f32 %v4085, 0.0
      %v4094 = vmax.f32 %v4005, 0.0
      %v4095 = vmax.f32 %v4007, 0.0
      %v4096 = vmax.f32 %v4088, 0.0
      %v4097 = vmul.f32 %v4091, %v756
      %v4098 = vmul.f32 %v4092, %v760
      %v4099 = vmul.f32 %v4093, %v764
      %v4100 = vmul.f32 %v4094, %v756
      %v4101 = vmul.f32 %v4095, %v760
      %v4102 = vmul.f32 %v4096, %v764
      %v4103 = vpack.c.bf16 %v4100, %v4097
      %v4104 = vpack.c.bf16 %v4101, %v4098
      %v4105 = vpack.c.bf16 %v4102, %v4099
      %4109 = vrot.lane.b32.xlu0 %v4103, 69
      %v4110 = vpop.permute.xlu0 %4109
      %4111 = vrot.lane.b32.xlu0 %v4104, 69
      %v4112 = vpop.permute.xlu0 %4111
      %4113 = vrot.lane.b32.xlu0 %v4105, 69
      %v4114 = vpop.permute.xlu0 %4113
      %v4115 = vsel %vm840, %v4110, %v4112
      %v4116 = vsel %vm840, %v4112, %v4114
      %v4118 = vsel %vm849, 0, %v4110
      %v4120 = vsel %vm859, %v4114, 0
      %4129 = vrot.lane.b32.xlu0 %v2274, 127
      %v4130 = vpop.permute.xlu0 %4129
      %4131 = vrot.lane.b32.xlu0 %v2267, 127
      %v4132 = vpop.permute.xlu0 %4131
      %4133 = vrot.lane.b32.xlu0 %v2268, 127
      %v4134 = vpop.permute.xlu0 %4133
      %4135 = vrot.lane.b32.xlu0 %v2280, 127
      %v4136 = vpop.permute.xlu0 %4135
      %4137 = vrot.lane.b32.xlu0 %v2276, 127
      %v4138 = vpop.permute.xlu0 %4137
      %4139 = vrot.lane.b32.xlu0 %v2269, 127
      %v4140 = vpop.permute.xlu0 %4139
      %4141 = vrot.lane.b32.xlu0 %v2270, 127
      %v4142 = vpop.permute.xlu0 %4141
      %4143 = vrot.lane.b32.xlu0 %v2282, 127
      %v4144 = vpop.permute.xlu0 %4143
      %4145 = vrot.lane.b32.xlu0 %v2278, 127
      %v4146 = vpop.permute.xlu0 %4145
      %4147 = vrot.lane.b32.xlu0 %v2271, 127
      %v4148 = vpop.permute.xlu0 %4147
      %4149 = vrot.lane.b32.xlu0 %v2272, 127
      %v4150 = vpop.permute.xlu0 %4149
      %4151 = vrot.lane.b32.xlu0 %v2284, 127
      %v4152 = vpop.permute.xlu0 %4151
      %4153 = vrot.lane.b32.xlu0 %v4118, 127
      %v4154 = vpop.permute.xlu0 %4153
      %4155 = vrot.lane.b32.xlu0 %v4115, 127
      %v4156 = vpop.permute.xlu0 %4155
      %4157 = vrot.lane.b32.xlu0 %v4116, 127
      %v4158 = vpop.permute.xlu0 %4157
      %4159 = vrot.lane.b32.xlu0 %v4120, 127
      %v4160 = vpop.permute.xlu0 %4159
      %v4161 = vsel %vm908, %v4130, %v4132
      %v4162 = vsel %vm908, %v4132, %v4134
      %v4163 = vsel %vm908, %v4134, %v4136
      %v4164 = vsel %vm908, %v4138, %v4140
      %v4165 = vsel %vm908, %v4140, %v4142
      %v4166 = vsel %vm908, %v4142, %v4144
      %v4167 = vsel %vm908, %v4146, %v4148
      %v4168 = vsel %vm908, %v4148, %v4150
      %v4169 = vsel %vm908, %v4150, %v4152
      %v4170 = vsel %vm908, %v4154, %v4156
      %v4171 = vsel %vm908, %v4156, %v4158
      %v4172 = vsel %vm908, %v4158, %v4160
      %4173 = vrot.lane.b32.xlu0 %v2274, 126
      %v4174 = vpop.permute.xlu0 %4173
      %4175 = vrot.lane.b32.xlu0 %v2267, 126
      %v4176 = vpop.permute.xlu0 %4175
      %4177 = vrot.lane.b32.xlu0 %v2268, 126
      %v4178 = vpop.permute.xlu0 %4177
      %4179 = vrot.lane.b32.xlu0 %v2280, 126
      %v4180 = vpop.permute.xlu0 %4179
      %4181 = vrot.lane.b32.xlu0 %v2276, 126
      %v4182 = vpop.permute.xlu0 %4181
      %4183 = vrot.lane.b32.xlu0 %v2269, 126
      %v4184 = vpop.permute.xlu0 %4183
      %4185 = vrot.lane.b32.xlu0 %v2270, 126
      %v4186 = vpop.permute.xlu0 %4185
      %4187 = vrot.lane.b32.xlu0 %v2282, 126
      %v4188 = vpop.permute.xlu0 %4187
      %4189 = vrot.lane.b32.xlu0 %v2278, 126
      %v4190 = vpop.permute.xlu0 %4189
      %4191 = vrot.lane.b32.xlu0 %v2271, 126
      %v4192 = vpop.permute.xlu0 %4191
      %4193 = vrot.lane.b32.xlu0 %v2272, 126
      %v4194 = vpop.permute.xlu0 %4193
      %4195 = vrot.lane.b32.xlu0 %v2284, 126
      %v4196 = vpop.permute.xlu0 %4195
      %4197 = vrot.lane.b32.xlu0 %v4118, 126
      %v4198 = vpop.permute.xlu0 %4197
      %4199 = vrot.lane.b32.xlu0 %v4115, 126
      %v4200 = vpop.permute.xlu0 %4199
      %4201 = vrot.lane.b32.xlu0 %v4116, 126
      %v4202 = vpop.permute.xlu0 %4201
      %4203 = vrot.lane.b32.xlu0 %v4120, 126
      %v4204 = vpop.permute.xlu0 %4203
      %v4205 = vsel %vm953, %v4174, %v4176
      %v4206 = vsel %vm953, %v4176, %v4178
      %v4207 = vsel %vm953, %v4178, %v4180
      %v4208 = vsel %vm953, %v4182, %v4184
      %v4209 = vsel %vm953, %v4184, %v4186
      %v4210 = vsel %vm953, %v4186, %v4188
      %v4211 = vsel %vm953, %v4190, %v4192
      %v4212 = vsel %vm953, %v4192, %v4194
      %v4213 = vsel %vm953, %v4194, %v4196
      %v4214 = vsel %vm953, %v4198, %v4200
      %v4215 = vsel %vm953, %v4200, %v4202
      %v4216 = vsel %vm953, %v4202, %v4204
      %4217 = vrot.lane.b32.xlu0 %v2274, 106
      %v4218 = vpop.permute.xlu0 %4217
      %4219 = vrot.lane.b32.xlu0 %v2267, 106
      %v4220 = vpop.permute.xlu0 %4219
      %4221 = vrot.lane.b32.xlu0 %v2268, 106
      %v4222 = vpop.permute.xlu0 %4221
      %4223 = vrot.lane.b32.xlu0 %v2280, 106
      %v4224 = vpop.permute.xlu0 %4223
      %4225 = vrot.lane.b32.xlu0 %v2276, 106
      %v4226 = vpop.permute.xlu0 %4225
      %4227 = vrot.lane.b32.xlu0 %v2269, 106
      %v4228 = vpop.permute.xlu0 %4227
      %4229 = vrot.lane.b32.xlu0 %v2270, 106
      %v4230 = vpop.permute.xlu0 %4229
      %4231 = vrot.lane.b32.xlu0 %v2282, 106
      %v4232 = vpop.permute.xlu0 %4231
      %4233 = vrot.lane.b32.xlu0 %v2278, 106
      %v4234 = vpop.permute.xlu0 %4233
      %4235 = vrot.lane.b32.xlu0 %v2271, 106
      %v4236 = vpop.permute.xlu0 %4235
      %4237 = vrot.lane.b32.xlu0 %v2272, 106
      %v4238 = vpop.permute.xlu0 %4237
      %4239 = vrot.lane.b32.xlu0 %v2284, 106
      %v4240 = vpop.permute.xlu0 %4239
      %4241 = vrot.lane.b32.xlu0 %v4118, 106
      %v4242 = vpop.permute.xlu0 %4241
      %4243 = vrot.lane.b32.xlu0 %v4115, 106
      %v4244 = vpop.permute.xlu0 %4243
      %4245 = vrot.lane.b32.xlu0 %v4116, 106
      %v4246 = vpop.permute.xlu0 %4245
      %4247 = vrot.lane.b32.xlu0 %v4120, 106
      %v4248 = vpop.permute.xlu0 %4247
      %v4249 = vsel %vm998, %v4218, %v4220
      %v4250 = vsel %vm998, %v4220, %v4222
      %v4251 = vsel %vm998, %v4222, %v4224
      %v4252 = vsel %vm998, %v4226, %v4228
      %v4253 = vsel %vm998, %v4228, %v4230
      %v4254 = vsel %vm998, %v4230, %v4232
      %v4255 = vsel %vm998, %v4234, %v4236
      %v4256 = vsel %vm998, %v4236, %v4238
      %v4257 = vsel %vm998, %v4238, %v4240
      %v4258 = vsel %vm998, %v4242, %v4244
      %v4259 = vsel %vm998, %v4244, %v4246
      %v4260 = vsel %vm998, %v4246, %v4248
      %4261 = vrot.lane.b32.xlu0 %v2274, 105
      %v4262 = vpop.permute.xlu0 %4261
      %4263 = vrot.lane.b32.xlu0 %v2267, 105
      %v4264 = vpop.permute.xlu0 %4263
      %4265 = vrot.lane.b32.xlu0 %v2268, 105
      %v4266 = vpop.permute.xlu0 %4265
      %4267 = vrot.lane.b32.xlu0 %v2280, 105
      %v4268 = vpop.permute.xlu0 %4267
      %4269 = vrot.lane.b32.xlu0 %v2276, 105
      %v4270 = vpop.permute.xlu0 %4269
      %4271 = vrot.lane.b32.xlu0 %v2269, 105
      %v4272 = vpop.permute.xlu0 %4271
      %4273 = vrot.lane.b32.xlu0 %v2270, 105
      %v4274 = vpop.permute.xlu0 %4273
      %4275 = vrot.lane.b32.xlu0 %v2282, 105
      %v4276 = vpop.permute.xlu0 %4275
      %4277 = vrot.lane.b32.xlu0 %v2278, 105
      %v4278 = vpop.permute.xlu0 %4277
      %4279 = vrot.lane.b32.xlu0 %v2271, 105
      %v4280 = vpop.permute.xlu0 %4279
      %4281 = vrot.lane.b32.xlu0 %v2272, 105
      %v4282 = vpop.permute.xlu0 %4281
      %4283 = vrot.lane.b32.xlu0 %v2284, 105
      %v4284 = vpop.permute.xlu0 %4283
      %4285 = vrot.lane.b32.xlu0 %v4118, 105
      %v4286 = vpop.permute.xlu0 %4285
      %4287 = vrot.lane.b32.xlu0 %v4115, 105
      %v4288 = vpop.permute.xlu0 %4287
      %4289 = vrot.lane.b32.xlu0 %v4116, 105
      %v4290 = vpop.permute.xlu0 %4289
      %4291 = vrot.lane.b32.xlu0 %v4120, 105
      %v4292 = vpop.permute.xlu0 %4291
      %v4293 = vsel %vm1043, %v4262, %v4264
      %v4294 = vsel %vm1043, %v4264, %v4266
      %v4295 = vsel %vm1043, %v4266, %v4268
      %v4296 = vsel %vm1043, %v4270, %v4272
      %v4297 = vsel %vm1043, %v4272, %v4274
      %v4298 = vsel %vm1043, %v4274, %v4276
      %v4299 = vsel %vm1043, %v4278, %v4280
      %v4300 = vsel %vm1043, %v4280, %v4282
      %v4301 = vsel %vm1043, %v4282, %v4284
      %v4302 = vsel %vm1043, %v4286, %v4288
      %v4303 = vsel %vm1043, %v4288, %v4290
      %v4304 = vsel %vm1043, %v4290, %v4292
      %4305 = vrot.lane.b32.xlu0 %v2274, 104
      %v4306 = vpop.permute.xlu0 %4305
      %4307 = vrot.lane.b32.xlu0 %v2267, 104
      %v4308 = vpop.permute.xlu0 %4307
      %4309 = vrot.lane.b32.xlu0 %v2268, 104
      %v4310 = vpop.permute.xlu0 %4309
      %4311 = vrot.lane.b32.xlu0 %v2280, 104
      %v4312 = vpop.permute.xlu0 %4311
      %4313 = vrot.lane.b32.xlu0 %v2276, 104
      %v4314 = vpop.permute.xlu0 %4313
      %4315 = vrot.lane.b32.xlu0 %v2269, 104
      %v4316 = vpop.permute.xlu0 %4315
      %4317 = vrot.lane.b32.xlu0 %v2270, 104
      %v4318 = vpop.permute.xlu0 %4317
      %4319 = vrot.lane.b32.xlu0 %v2282, 104
      %v4320 = vpop.permute.xlu0 %4319
      %4321 = vrot.lane.b32.xlu0 %v2278, 104
      %v4322 = vpop.permute.xlu0 %4321
      %4323 = vrot.lane.b32.xlu0 %v2271, 104
      %v4324 = vpop.permute.xlu0 %4323
      %4325 = vrot.lane.b32.xlu0 %v2272, 104
      %v4326 = vpop.permute.xlu0 %4325
      %4327 = vrot.lane.b32.xlu0 %v2284, 104
      %v4328 = vpop.permute.xlu0 %4327
      %4329 = vrot.lane.b32.xlu0 %v4118, 104
      %v4330 = vpop.permute.xlu0 %4329
      %4331 = vrot.lane.b32.xlu0 %v4115, 104
      %v4332 = vpop.permute.xlu0 %4331
      %4333 = vrot.lane.b32.xlu0 %v4116, 104
      %v4334 = vpop.permute.xlu0 %4333
      %4335 = vrot.lane.b32.xlu0 %v4120, 104
      %v4336 = vpop.permute.xlu0 %4335
      %v4337 = vsel %vm1088, %v4306, %v4308
      %v4338 = vsel %vm1088, %v4308, %v4310
      %v4339 = vsel %vm1088, %v4310, %v4312
      %v4340 = vsel %vm1088, %v4314, %v4316
      %v4341 = vsel %vm1088, %v4316, %v4318
      %v4342 = vsel %vm1088, %v4318, %v4320
      %v4343 = vsel %vm1088, %v4322, %v4324
      %v4344 = vsel %vm1088, %v4324, %v4326
      %v4345 = vsel %vm1088, %v4326, %v4328
      %v4346 = vsel %vm1088, %v4330, %v4332
      %v4347 = vsel %vm1088, %v4332, %v4334
      %v4348 = vsel %vm1088, %v4334, %v4336
      %4349 = vrot.lane.b32.xlu0 %v2274, 84
      %v4350 = vpop.permute.xlu0 %4349
      %4351 = vrot.lane.b32.xlu0 %v2267, 84
      %v4352 = vpop.permute.xlu0 %4351
      %4353 = vrot.lane.b32.xlu0 %v2268, 84
      %v4354 = vpop.permute.xlu0 %4353
      %4355 = vrot.lane.b32.xlu0 %v2280, 84
      %v4356 = vpop.permute.xlu0 %4355
      %4357 = vrot.lane.b32.xlu0 %v2276, 84
      %v4358 = vpop.permute.xlu0 %4357
      %4359 = vrot.lane.b32.xlu0 %v2269, 84
      %v4360 = vpop.permute.xlu0 %4359
      %4361 = vrot.lane.b32.xlu0 %v2270, 84
      %v4362 = vpop.permute.xlu0 %4361
      %4363 = vrot.lane.b32.xlu0 %v2282, 84
      %v4364 = vpop.permute.xlu0 %4363
      %4365 = vrot.lane.b32.xlu0 %v2278, 84
      %v4366 = vpop.permute.xlu0 %4365
      %4367 = vrot.lane.b32.xlu0 %v2271, 84
      %v4368 = vpop.permute.xlu0 %4367
      %4369 = vrot.lane.b32.xlu0 %v2272, 84
      %v4370 = vpop.permute.xlu0 %4369
      %4371 = vrot.lane.b32.xlu0 %v2284, 84
      %v4372 = vpop.permute.xlu0 %4371
      %4373 = vrot.lane.b32.xlu0 %v4118, 84
      %v4374 = vpop.permute.xlu0 %4373
      %4375 = vrot.lane.b32.xlu0 %v4115, 84
      %v4376 = vpop.permute.xlu0 %4375
      %4377 = vrot.lane.b32.xlu0 %v4116, 84
      %v4378 = vpop.permute.xlu0 %4377
      %4379 = vrot.lane.b32.xlu0 %v4120, 84
      %v4380 = vpop.permute.xlu0 %4379
      %v4381 = vsel %vm1133, %v4350, %v4352
      %v4382 = vsel %vm1133, %v4352, %v4354
      %v4383 = vsel %vm1133, %v4354, %v4356
      %v4384 = vsel %vm1133, %v4358, %v4360
      %v4385 = vsel %vm1133, %v4360, %v4362
      %v4386 = vsel %vm1133, %v4362, %v4364
      %v4387 = vsel %vm1133, %v4366, %v4368
      %v4388 = vsel %vm1133, %v4368, %v4370
      %v4389 = vsel %vm1133, %v4370, %v4372
      %v4390 = vsel %vm1133, %v4374, %v4376
      %v4391 = vsel %vm1133, %v4376, %v4378
      %v4392 = vsel %vm1133, %v4378, %v4380
      %4393 = vrot.lane.b32.xlu0 %v2274, 83
      %v4394 = vpop.permute.xlu0 %4393
      %4395 = vrot.lane.b32.xlu0 %v2267, 83
      %v4396 = vpop.permute.xlu0 %4395
      %4397 = vrot.lane.b32.xlu0 %v2268, 83
      %v4398 = vpop.permute.xlu0 %4397
      %4399 = vrot.lane.b32.xlu0 %v2280, 83
      %v4400 = vpop.permute.xlu0 %4399
      %4401 = vrot.lane.b32.xlu0 %v2276, 83
      %v4402 = vpop.permute.xlu0 %4401
      %4403 = vrot.lane.b32.xlu0 %v2269, 83
      %v4404 = vpop.permute.xlu0 %4403
      %4405 = vrot.lane.b32.xlu0 %v2270, 83
      %v4406 = vpop.permute.xlu0 %4405
      %4407 = vrot.lane.b32.xlu0 %v2282, 83
      %v4408 = vpop.permute.xlu0 %4407
      %4409 = vrot.lane.b32.xlu0 %v2278, 83
      %v4410 = vpop.permute.xlu0 %4409
      %4411 = vrot.lane.b32.xlu0 %v2271, 83
      %v4412 = vpop.permute.xlu0 %4411
      %4413 = vrot.lane.b32.xlu0 %v2272, 83
      %v4414 = vpop.permute.xlu0 %4413
      %4415 = vrot.lane.b32.xlu0 %v2284, 83
      %v4416 = vpop.permute.xlu0 %4415
      %4417 = vrot.lane.b32.xlu0 %v4118, 83
      %v4418 = vpop.permute.xlu0 %4417
      %4419 = vrot.lane.b32.xlu0 %v4115, 83
      %v4420 = vpop.permute.xlu0 %4419
      %4421 = vrot.lane.b32.xlu0 %v4116, 83
      %v4422 = vpop.permute.xlu0 %4421
      %4423 = vrot.lane.b32.xlu0 %v4120, 83
      %v4424 = vpop.permute.xlu0 %4423
      %v4425 = vsel %vm1178, %v4394, %v4396
      %v4426 = vsel %vm1178, %v4396, %v4398
      %v4427 = vsel %vm1178, %v4398, %v4400
      %v4428 = vsel %vm1178, %v4402, %v4404
      %v4429 = vsel %vm1178, %v4404, %v4406
      %v4430 = vsel %vm1178, %v4406, %v4408
      %v4431 = vsel %vm1178, %v4410, %v4412
      %v4432 = vsel %vm1178, %v4412, %v4414
      %v4433 = vsel %vm1178, %v4414, %v4416
      %v4434 = vsel %vm1178, %v4418, %v4420
      %v4435 = vsel %vm1178, %v4420, %v4422
      %v4436 = vsel %vm1178, %v4422, %v4424
      %4437 = vrot.lane.b32.xlu0 %v2274, 82
      %v4438 = vpop.permute.xlu0 %4437
      %4439 = vrot.lane.b32.xlu0 %v2267, 82
      %v4440 = vpop.permute.xlu0 %4439
      %4441 = vrot.lane.b32.xlu0 %v2268, 82
      %v4442 = vpop.permute.xlu0 %4441
      %4443 = vrot.lane.b32.xlu0 %v2280, 82
      %v4444 = vpop.permute.xlu0 %4443
      %4445 = vrot.lane.b32.xlu0 %v2276, 82
      %v4446 = vpop.permute.xlu0 %4445
      %4447 = vrot.lane.b32.xlu0 %v2269, 82
      %v4448 = vpop.permute.xlu0 %4447
      %4449 = vrot.lane.b32.xlu0 %v2270, 82
      %v4450 = vpop.permute.xlu0 %4449
      %4451 = vrot.lane.b32.xlu0 %v2282, 82
      %v4452 = vpop.permute.xlu0 %4451
      %4453 = vrot.lane.b32.xlu0 %v2278, 82
      %v4454 = vpop.permute.xlu0 %4453
      %4455 = vrot.lane.b32.xlu0 %v2271, 82
      %v4456 = vpop.permute.xlu0 %4455
      %4457 = vrot.lane.b32.xlu0 %v2272, 82
      %v4458 = vpop.permute.xlu0 %4457
      %4459 = vrot.lane.b32.xlu0 %v2284, 82
      %v4460 = vpop.permute.xlu0 %4459
      %4461 = vrot.lane.b32.xlu0 %v4118, 82
      %v4462 = vpop.permute.xlu0 %4461
      %4463 = vrot.lane.b32.xlu0 %v4115, 82
      %v4464 = vpop.permute.xlu0 %4463
      %4465 = vrot.lane.b32.xlu0 %v4116, 82
      %v4466 = vpop.permute.xlu0 %4465
      %4467 = vrot.lane.b32.xlu0 %v4120, 82
      %v4468 = vpop.permute.xlu0 %4467
      %v4469 = vsel %vm1223, %v4438, %v4440
      %v4470 = vsel %vm1223, %v4440, %v4442
      %v4471 = vsel %vm1223, %v4442, %v4444
      %v4472 = vsel %vm1223, %v4446, %v4448
      %v4473 = vsel %vm1223, %v4448, %v4450
      %v4474 = vsel %vm1223, %v4450, %v4452
      %v4475 = vsel %vm1223, %v4454, %v4456
      %v4476 = vsel %vm1223, %v4456, %v4458
      %v4477 = vsel %vm1223, %v4458, %v4460
      %v4478 = vsel %vm1223, %v4462, %v4464
      %v4479 = vsel %vm1223, %v4464, %v4466
      %v4480 = vsel %vm1223, %v4466, %v4468
      %v4481 = vld [vmem:[%s11] sm:$0xff]
      %v4482 = vld [vmem:[%s11 + $0x8] sm:$0xff]
      %v4483 = vld [vmem:[%s11 + $0x10] sm:$0xf]
      %v4484 = vld [vmem:[%s11 + $0x14] sm:$0xff]
      %v4485 = vld [vmem:[%s11 + $0x1c] sm:$0xff]
      %v4486 = vld [vmem:[%s11 + $0x24] sm:$0xf]
      %v4487 = vld [vmem:[%s11 + $0x28] sm:$0xff]
      %v4488 = vld [vmem:[%s11 + $0x30] sm:$0xff]
      %v4489 = vld [vmem:[%s11 + $0x38] sm:$0xf]
      %v4490 = vld [vmem:[%s11 + $0x3c] sm:$0x77]
      %v4491 = vld [vmem:[%s11 + $0x44] sm:$0x77]
      %v4492 = vld [vmem:[%s11 + $0x4c] sm:$0x7]
      %v4493 = vld [vmem:[%s12] sm:$0xff]
      %v4494 = vld [vmem:[%s12 + $0x8] sm:$0xff]
      %v4495 = vld [vmem:[%s12 + $0x10] sm:$0xff]
      %v4496 = vld [vmem:[%s12 + $0x18] sm:$0x3f]
      %4498 = vset.pattern.permute.xlu0 0
      %4499 = vperm.xlu0 %4498, %v4493
      %v4500 = vpop.permute.xlu0 %4499
      %4503 = vset.pattern.permute.xlu0 0
      %4504 = vperm.xlu0 %4503, %v4494
      %v4505 = vpop.permute.xlu0 %4504
      %4508 = vset.pattern.permute.xlu0 0
      %4509 = vperm.xlu0 %4508, %v4495
      %v4510 = vpop.permute.xlu0 %4509
      %4513 = vset.pattern.permute.xlu0 0
      %4514 = vperm.xlu0 %4513, %v4496
      %v4515 = vpop.permute.xlu0 %4514
      %v4529 = vunpack.c.l.b16 %v4481
      %v4530 = vunpack.c.h.b16 %v4481
      %v4531 = vunpack.c.l.b16 %v4482
      %v4532 = vunpack.c.h.b16 %v4482
      %v4533 = vunpack.c.l.b16 %v4483
      %v4534 = vunpack.c.l.b16 %v4484
      %v4535 = vunpack.c.h.b16 %v4484
      %v4536 = vunpack.c.l.b16 %v4485
      %v4537 = vunpack.c.h.b16 %v4485
      %v4538 = vunpack.c.l.b16 %v4486
      %v4539 = vunpack.c.l.b16 %v4487
      %v4540 = vunpack.c.h.b16 %v4487
      %v4541 = vunpack.c.l.b16 %v4488
      %v4542 = vunpack.c.h.b16 %v4488
      %v4543 = vunpack.c.l.b16 %v4489
      %v4544 = vunpack.c.l.b16 %v4490
      %v4545 = vunpack.c.h.b16 %v4490
      %v4546 = vunpack.c.l.b16 %v4491
      %v4547 = vunpack.c.h.b16 %v4491
      %v4548 = vunpack.c.l.b16 %v4492
      %v4549 = vpack.c.b16 %v4534, %v4529
      %v4550 = vpack.c.b16 %v4535, %v4530
      %v4551 = vpack.c.b16 %v4536, %v4531
      %v4552 = vpack.c.b16 %v4537, %v4532
      %v4553 = vpack.c.b16 %v4538, %v4533
      %v4554 = vpack.c.b16 %v4544, %v4539
      %v4555 = vpack.c.b16 %v4545, %v4540
      %v4556 = vpack.c.b16 %v4546, %v4541
      %v4557 = vpack.c.b16 %v4547, %v4542
      %v4558 = vpack.c.b16 %v4548, %v4543
      %4567 = vrot.lane.b32.xlu0 %v4161, 82
      %v4568 = vpop.permute.xlu0 %4567
      %4569 = vrot.lane.b32.xlu0 %v4162, 82
      %v4570 = vpop.permute.xlu0 %4569
      %4571 = vrot.lane.b32.xlu0 %v4163, 82
      %v4572 = vpop.permute.xlu0 %4571
      %4573 = vrot.lane.b32.xlu0 %v4136, 82
      %v4574 = vpop.permute.xlu0 %4573
      %4575 = vrot.lane.b32.xlu0 %v4164, 82
      %v4576 = vpop.permute.xlu0 %4575
      %4577 = vrot.lane.b32.xlu0 %v4165, 82
      %v4578 = vpop.permute.xlu0 %4577
      %4579 = vrot.lane.b32.xlu0 %v4166, 82
      %v4580 = vpop.permute.xlu0 %4579
      %4581 = vrot.lane.b32.xlu0 %v4144, 82
      %v4582 = vpop.permute.xlu0 %4581
      %4583 = vrot.lane.b32.xlu0 %v4167, 82
      %v4584 = vpop.permute.xlu0 %4583
      %4585 = vrot.lane.b32.xlu0 %v4168, 82
      %v4586 = vpop.permute.xlu0 %4585
      %4587 = vrot.lane.b32.xlu0 %v4169, 82
      %v4588 = vpop.permute.xlu0 %4587
      %4589 = vrot.lane.b32.xlu0 %v4152, 82
      %v4590 = vpop.permute.xlu0 %4589
      %4591 = vrot.lane.b32.xlu0 %v4170, 82
      %v4592 = vpop.permute.xlu0 %4591
      %4593 = vrot.lane.b32.xlu0 %v4171, 82
      %v4594 = vpop.permute.xlu0 %4593
      %4595 = vrot.lane.b32.xlu0 %v4172, 82
      %v4596 = vpop.permute.xlu0 %4595
      %4597 = vrot.lane.b32.xlu0 %v4160, 82
      %v4598 = vpop.permute.xlu0 %4597
      %4599 = vrot.lane.b32.xlu0 %v4205, 82
      %v4600 = vpop.permute.xlu0 %4599
      %4601 = vrot.lane.b32.xlu0 %v4206, 82
      %v4602 = vpop.permute.xlu0 %4601
      %4603 = vrot.lane.b32.xlu0 %v4207, 82
      %v4604 = vpop.permute.xlu0 %4603
      %4605 = vrot.lane.b32.xlu0 %v4180, 82
      %v4606 = vpop.permute.xlu0 %4605
      %4607 = vrot.lane.b32.xlu0 %v4208, 82
      %v4608 = vpop.permute.xlu0 %4607
      %4609 = vrot.lane.b32.xlu0 %v4209, 82
      %v4610 = vpop.permute.xlu0 %4609
      %4611 = vrot.lane.b32.xlu0 %v4210, 82
      %v4612 = vpop.permute.xlu0 %4611
      %4613 = vrot.lane.b32.xlu0 %v4188, 82
      %v4614 = vpop.permute.xlu0 %4613
      %4615 = vrot.lane.b32.xlu0 %v4211, 82
      %v4616 = vpop.permute.xlu0 %4615
      %4617 = vrot.lane.b32.xlu0 %v4212, 82
      %v4618 = vpop.permute.xlu0 %4617
      %4619 = vrot.lane.b32.xlu0 %v4213, 82
      %v4620 = vpop.permute.xlu0 %4619
      %4621 = vrot.lane.b32.xlu0 %v4196, 82
      %v4622 = vpop.permute.xlu0 %4621
      %4623 = vrot.lane.b32.xlu0 %v4214, 82
      %v4624 = vpop.permute.xlu0 %4623
      %4625 = vrot.lane.b32.xlu0 %v4215, 82
      %v4626 = vpop.permute.xlu0 %4625
      %4627 = vrot.lane.b32.xlu0 %v4216, 82
      %v4628 = vpop.permute.xlu0 %4627
      %4629 = vrot.lane.b32.xlu0 %v4204, 82
      %v4630 = vpop.permute.xlu0 %4629
      %4631 = vrot.lane.b32.xlu0 %v4249, 82
      %v4632 = vpop.permute.xlu0 %4631
      %4633 = vrot.lane.b32.xlu0 %v4250, 82
      %v4634 = vpop.permute.xlu0 %4633
      %4635 = vrot.lane.b32.xlu0 %v4251, 82
      %v4636 = vpop.permute.xlu0 %4635
      %4637 = vrot.lane.b32.xlu0 %v4224, 82
      %v4638 = vpop.permute.xlu0 %4637
      %4639 = vrot.lane.b32.xlu0 %v4252, 82
      %v4640 = vpop.permute.xlu0 %4639
      %4641 = vrot.lane.b32.xlu0 %v4253, 82
      %v4642 = vpop.permute.xlu0 %4641
      %4643 = vrot.lane.b32.xlu0 %v4254, 82
      %v4644 = vpop.permute.xlu0 %4643
      %4645 = vrot.lane.b32.xlu0 %v4232, 82
      %v4646 = vpop.permute.xlu0 %4645
      %4647 = vrot.lane.b32.xlu0 %v4255, 82
      %v4648 = vpop.permute.xlu0 %4647
      %4649 = vrot.lane.b32.xlu0 %v4256, 82
      %v4650 = vpop.permute.xlu0 %4649
      %4651 = vrot.lane.b32.xlu0 %v4257, 82
      %v4652 = vpop.permute.xlu0 %4651
      %4653 = vrot.lane.b32.xlu0 %v4240, 82
      %v4654 = vpop.permute.xlu0 %4653
      %4655 = vrot.lane.b32.xlu0 %v4258, 82
      %v4656 = vpop.permute.xlu0 %4655
      %4657 = vrot.lane.b32.xlu0 %v4259, 82
      %v4658 = vpop.permute.xlu0 %4657
      %4659 = vrot.lane.b32.xlu0 %v4260, 82
      %v4660 = vpop.permute.xlu0 %4659
      %4661 = vrot.lane.b32.xlu0 %v4248, 82
      %v4662 = vpop.permute.xlu0 %4661
      %4663 = vrot.lane.b32.xlu0 %v4293, 82
      %v4664 = vpop.permute.xlu0 %4663
      %4665 = vrot.lane.b32.xlu0 %v4294, 82
      %v4666 = vpop.permute.xlu0 %4665
      %4667 = vrot.lane.b32.xlu0 %v4295, 82
      %v4668 = vpop.permute.xlu0 %4667
      %4669 = vrot.lane.b32.xlu0 %v4268, 82
      %v4670 = vpop.permute.xlu0 %4669
      %4671 = vrot.lane.b32.xlu0 %v4296, 82
      %v4672 = vpop.permute.xlu0 %4671
      %4673 = vrot.lane.b32.xlu0 %v4297, 82
      %v4674 = vpop.permute.xlu0 %4673
      %4675 = vrot.lane.b32.xlu0 %v4298, 82
      %v4676 = vpop.permute.xlu0 %4675
      %4677 = vrot.lane.b32.xlu0 %v4276, 82
      %v4678 = vpop.permute.xlu0 %4677
      %4679 = vrot.lane.b32.xlu0 %v4299, 82
      %v4680 = vpop.permute.xlu0 %4679
      %4681 = vrot.lane.b32.xlu0 %v4300, 82
      %v4682 = vpop.permute.xlu0 %4681
      %4683 = vrot.lane.b32.xlu0 %v4301, 82
      %v4684 = vpop.permute.xlu0 %4683
      %4685 = vrot.lane.b32.xlu0 %v4284, 82
      %v4686 = vpop.permute.xlu0 %4685
      %4687 = vrot.lane.b32.xlu0 %v4302, 82
      %v4688 = vpop.permute.xlu0 %4687
      %4689 = vrot.lane.b32.xlu0 %v4303, 82
      %v4690 = vpop.permute.xlu0 %4689
      %4691 = vrot.lane.b32.xlu0 %v4304, 82
      %v4692 = vpop.permute.xlu0 %4691
      %4693 = vrot.lane.b32.xlu0 %v4292, 82
      %v4694 = vpop.permute.xlu0 %4693
      %4695 = vrot.lane.b32.xlu0 %v4337, 82
      %v4696 = vpop.permute.xlu0 %4695
      %4697 = vrot.lane.b32.xlu0 %v4338, 82
      %v4698 = vpop.permute.xlu0 %4697
      %4699 = vrot.lane.b32.xlu0 %v4339, 82
      %v4700 = vpop.permute.xlu0 %4699
      %4701 = vrot.lane.b32.xlu0 %v4312, 82
      %v4702 = vpop.permute.xlu0 %4701
      %4703 = vrot.lane.b32.xlu0 %v4340, 82
      %v4704 = vpop.permute.xlu0 %4703
      %4705 = vrot.lane.b32.xlu0 %v4341, 82
      %v4706 = vpop.permute.xlu0 %4705
      %4707 = vrot.lane.b32.xlu0 %v4342, 82
      %v4708 = vpop.permute.xlu0 %4707
      %4709 = vrot.lane.b32.xlu0 %v4320, 82
      %v4710 = vpop.permute.xlu0 %4709
      %4711 = vrot.lane.b32.xlu0 %v4343, 82
      %v4712 = vpop.permute.xlu0 %4711
      %4713 = vrot.lane.b32.xlu0 %v4344, 82
      %v4714 = vpop.permute.xlu0 %4713
      %4715 = vrot.lane.b32.xlu0 %v4345, 82
      %v4716 = vpop.permute.xlu0 %4715
      %4717 = vrot.lane.b32.xlu0 %v4328, 82
      %v4718 = vpop.permute.xlu0 %4717
      %4719 = vrot.lane.b32.xlu0 %v4346, 82
      %v4720 = vpop.permute.xlu0 %4719
      %4721 = vrot.lane.b32.xlu0 %v4347, 82
      %v4722 = vpop.permute.xlu0 %4721
      %4723 = vrot.lane.b32.xlu0 %v4348, 82
      %v4724 = vpop.permute.xlu0 %4723
      %4725 = vrot.lane.b32.xlu0 %v4336, 82
      %v4726 = vpop.permute.xlu0 %4725
      %4727 = vrot.lane.b32.xlu0 %v4381, 82
      %v4728 = vpop.permute.xlu0 %4727
      %4729 = vrot.lane.b32.xlu0 %v4382, 82
      %v4730 = vpop.permute.xlu0 %4729
      %4731 = vrot.lane.b32.xlu0 %v4383, 82
      %v4732 = vpop.permute.xlu0 %4731
      %4733 = vrot.lane.b32.xlu0 %v4356, 82
      %v4734 = vpop.permute.xlu0 %4733
      %4735 = vrot.lane.b32.xlu0 %v4384, 82
      %v4736 = vpop.permute.xlu0 %4735
      %4737 = vrot.lane.b32.xlu0 %v4385, 82
      %v4738 = vpop.permute.xlu0 %4737
      %4739 = vrot.lane.b32.xlu0 %v4386, 82
      %v4740 = vpop.permute.xlu0 %4739
      %4741 = vrot.lane.b32.xlu0 %v4364, 82
      %v4742 = vpop.permute.xlu0 %4741
      %4743 = vrot.lane.b32.xlu0 %v4387, 82
      %v4744 = vpop.permute.xlu0 %4743
      %4745 = vrot.lane.b32.xlu0 %v4388, 82
      %v4746 = vpop.permute.xlu0 %4745
      %4747 = vrot.lane.b32.xlu0 %v4389, 82
      %v4748 = vpop.permute.xlu0 %4747
      %4749 = vrot.lane.b32.xlu0 %v4372, 82
      %v4750 = vpop.permute.xlu0 %4749
      %4751 = vrot.lane.b32.xlu0 %v4390, 82
      %v4752 = vpop.permute.xlu0 %4751
      %4753 = vrot.lane.b32.xlu0 %v4391, 82
      %v4754 = vpop.permute.xlu0 %4753
      %4755 = vrot.lane.b32.xlu0 %v4392, 82
      %v4756 = vpop.permute.xlu0 %4755
      %4757 = vrot.lane.b32.xlu0 %v4380, 82
      %v4758 = vpop.permute.xlu0 %4757
      %4759 = vrot.lane.b32.xlu0 %v4425, 82
      %v4760 = vpop.permute.xlu0 %4759
      %4761 = vrot.lane.b32.xlu0 %v4426, 82
      %v4762 = vpop.permute.xlu0 %4761
      %4763 = vrot.lane.b32.xlu0 %v4427, 82
      %v4764 = vpop.permute.xlu0 %4763
      %4765 = vrot.lane.b32.xlu0 %v4400, 82
      %v4766 = vpop.permute.xlu0 %4765
      %4767 = vrot.lane.b32.xlu0 %v4428, 82
      %v4768 = vpop.permute.xlu0 %4767
      %4769 = vrot.lane.b32.xlu0 %v4429, 82
      %v4770 = vpop.permute.xlu0 %4769
      %4771 = vrot.lane.b32.xlu0 %v4430, 82
      %v4772 = vpop.permute.xlu0 %4771
      %4773 = vrot.lane.b32.xlu0 %v4408, 82
      %v4774 = vpop.permute.xlu0 %4773
      %4775 = vrot.lane.b32.xlu0 %v4431, 82
      %v4776 = vpop.permute.xlu0 %4775
      %4777 = vrot.lane.b32.xlu0 %v4432, 82
      %v4778 = vpop.permute.xlu0 %4777
      %4779 = vrot.lane.b32.xlu0 %v4433, 82
      %v4780 = vpop.permute.xlu0 %4779
      %4781 = vrot.lane.b32.xlu0 %v4416, 82
      %v4782 = vpop.permute.xlu0 %4781
      %4783 = vrot.lane.b32.xlu0 %v4434, 82
      %v4784 = vpop.permute.xlu0 %4783
      %4785 = vrot.lane.b32.xlu0 %v4435, 82
      %v4786 = vpop.permute.xlu0 %4785
      %4787 = vrot.lane.b32.xlu0 %v4436, 82
      %v4788 = vpop.permute.xlu0 %4787
      %4789 = vrot.lane.b32.xlu0 %v4424, 82
      %v4790 = vpop.permute.xlu0 %4789
      %4791 = vrot.lane.b32.xlu0 %v4469, 82
      %v4792 = vpop.permute.xlu0 %4791
      %4793 = vrot.lane.b32.xlu0 %v4470, 82
      %v4794 = vpop.permute.xlu0 %4793
      %4795 = vrot.lane.b32.xlu0 %v4471, 82
      %v4796 = vpop.permute.xlu0 %4795
      %4797 = vrot.lane.b32.xlu0 %v4444, 82
      %v4798 = vpop.permute.xlu0 %4797
      %4799 = vrot.lane.b32.xlu0 %v4472, 82
      %v4800 = vpop.permute.xlu0 %4799
      %4801 = vrot.lane.b32.xlu0 %v4473, 82
      %v4802 = vpop.permute.xlu0 %4801
      %4803 = vrot.lane.b32.xlu0 %v4474, 82
      %v4804 = vpop.permute.xlu0 %4803
      %4805 = vrot.lane.b32.xlu0 %v4452, 82
      %v4806 = vpop.permute.xlu0 %4805
      %4807 = vrot.lane.b32.xlu0 %v4475, 82
      %v4808 = vpop.permute.xlu0 %4807
      %4809 = vrot.lane.b32.xlu0 %v4476, 82
      %v4810 = vpop.permute.xlu0 %4809
      %4811 = vrot.lane.b32.xlu0 %v4477, 82
      %v4812 = vpop.permute.xlu0 %4811
      %4813 = vrot.lane.b32.xlu0 %v4460, 82
      %v4814 = vpop.permute.xlu0 %4813
      %4815 = vrot.lane.b32.xlu0 %v4478, 82
      %v4816 = vpop.permute.xlu0 %4815
      %4817 = vrot.lane.b32.xlu0 %v4479, 82
      %v4818 = vpop.permute.xlu0 %4817
      %4819 = vrot.lane.b32.xlu0 %v4480, 82
      %v4820 = vpop.permute.xlu0 %4819
      %4821 = vrot.lane.b32.xlu0 %v4468, 82
      %v4822 = vpop.permute.xlu0 %4821
      %v4823 = vsel %vm1223, %v4568, %v4570
      %v4824 = vsel %vm1223, %v4570, %v4572
      %v4825 = vsel %vm1223, %v4572, %v4574
      %v4826 = vsel %vm1223, %v4576, %v4578
      %v4827 = vsel %vm1223, %v4578, %v4580
      %v4828 = vsel %vm1223, %v4580, %v4582
      %v4829 = vsel %vm1223, %v4584, %v4586
      %v4830 = vsel %vm1223, %v4586, %v4588
      %v4831 = vsel %vm1223, %v4588, %v4590
      %v4832 = vsel %vm1223, %v4592, %v4594
      %v4833 = vsel %vm1223, %v4594, %v4596
      %v4834 = vsel %vm1223, %v4596, %v4598
      %v4835 = vsel %vm1223, %v4600, %v4602
      %v4836 = vsel %vm1223, %v4602, %v4604
      %v4837 = vsel %vm1223, %v4604, %v4606
      %v4838 = vsel %vm1223, %v4608, %v4610
      %v4839 = vsel %vm1223, %v4610, %v4612
      %v4840 = vsel %vm1223, %v4612, %v4614
      %v4841 = vsel %vm1223, %v4616, %v4618
      %v4842 = vsel %vm1223, %v4618, %v4620
      %v4843 = vsel %vm1223, %v4620, %v4622
      %v4844 = vsel %vm1223, %v4624, %v4626
      %v4845 = vsel %vm1223, %v4626, %v4628
      %v4846 = vsel %vm1223, %v4628, %v4630
      %v4847 = vsel %vm1223, %v4632, %v4634
      %v4848 = vsel %vm1223, %v4634, %v4636
      %v4849 = vsel %vm1223, %v4636, %v4638
      %v4850 = vsel %vm1223, %v4640, %v4642
      %v4851 = vsel %vm1223, %v4642, %v4644
      %v4852 = vsel %vm1223, %v4644, %v4646
      %v4853 = vsel %vm1223, %v4648, %v4650
      %v4854 = vsel %vm1223, %v4650, %v4652
      %v4855 = vsel %vm1223, %v4652, %v4654
      %v4856 = vsel %vm1223, %v4656, %v4658
      %v4857 = vsel %vm1223, %v4658, %v4660
      %v4858 = vsel %vm1223, %v4660, %v4662
      %v4859 = vsel %vm1223, %v4664, %v4666
      %v4860 = vsel %vm1223, %v4666, %v4668
      %v4861 = vsel %vm1223, %v4668, %v4670
      %v4862 = vsel %vm1223, %v4672, %v4674
      %v4863 = vsel %vm1223, %v4674, %v4676
      %v4864 = vsel %vm1223, %v4676, %v4678
      %v4865 = vsel %vm1223, %v4680, %v4682
      %v4866 = vsel %vm1223, %v4682, %v4684
      %v4867 = vsel %vm1223, %v4684, %v4686
      %v4868 = vsel %vm1223, %v4688, %v4690
      %v4869 = vsel %vm1223, %v4690, %v4692
      %v4870 = vsel %vm1223, %v4692, %v4694
      %v4871 = vsel %vm1223, %v4696, %v4698
      %v4872 = vsel %vm1223, %v4698, %v4700
      %v4873 = vsel %vm1223, %v4700, %v4702
      %v4874 = vsel %vm1223, %v4704, %v4706
      %v4875 = vsel %vm1223, %v4706, %v4708
      %v4876 = vsel %vm1223, %v4708, %v4710
      %v4877 = vsel %vm1223, %v4712, %v4714
      %v4878 = vsel %vm1223, %v4714, %v4716
      %v4879 = vsel %vm1223, %v4716, %v4718
      %v4880 = vsel %vm1223, %v4720, %v4722
      %v4881 = vsel %vm1223, %v4722, %v4724
      %v4882 = vsel %vm1223, %v4724, %v4726
      %v4883 = vsel %vm1223, %v4728, %v4730
      %v4884 = vsel %vm1223, %v4730, %v4732
      %v4885 = vsel %vm1223, %v4732, %v4734
      %v4886 = vsel %vm1223, %v4736, %v4738
      %v4887 = vsel %vm1223, %v4738, %v4740
      %v4888 = vsel %vm1223, %v4740, %v4742
      %v4889 = vsel %vm1223, %v4744, %v4746
      %v4890 = vsel %vm1223, %v4746, %v4748
      %v4891 = vsel %vm1223, %v4748, %v4750
      %v4892 = vsel %vm1223, %v4752, %v4754
      %v4893 = vsel %vm1223, %v4754, %v4756
      %v4894 = vsel %vm1223, %v4756, %v4758
      %v4895 = vsel %vm1223, %v4760, %v4762
      %v4896 = vsel %vm1223, %v4762, %v4764
      %v4897 = vsel %vm1223, %v4764, %v4766
      %v4898 = vsel %vm1223, %v4768, %v4770
      %v4899 = vsel %vm1223, %v4770, %v4772
      %v4900 = vsel %vm1223, %v4772, %v4774
      %v4901 = vsel %vm1223, %v4776, %v4778
      %v4902 = vsel %vm1223, %v4778, %v4780
      %v4903 = vsel %vm1223, %v4780, %v4782
      %v4904 = vsel %vm1223, %v4784, %v4786
      %v4905 = vsel %vm1223, %v4786, %v4788
      %v4906 = vsel %vm1223, %v4788, %v4790
      %v4907 = vsel %vm1223, %v4792, %v4794
      %v4908 = vsel %vm1223, %v4794, %v4796
      %v4909 = vsel %vm1223, %v4796, %v4798
      %v4910 = vsel %vm1223, %v4800, %v4802
      %v4911 = vsel %vm1223, %v4802, %v4804
      %v4912 = vsel %vm1223, %v4804, %v4806
      %v4913 = vsel %vm1223, %v4808, %v4810
      %v4914 = vsel %vm1223, %v4810, %v4812
      %v4915 = vsel %vm1223, %v4812, %v4814
      %v4916 = vsel %vm1223, %v4816, %v4818
      %v4917 = vsel %vm1223, %v4818, %v4820
      %v4918 = vsel %vm1223, %v4820, %v4822
      %v5028 = vsel %vm1825, %v4553, 0
      %v5031 = vsel %vm1825, %v4558, 0
      %5033 = vmatprep.subr.bf16.mxu0 %v4833
      %5034 = vmatpush1.bf16.msra.mxu0 %v4832
      %5035 = vmatprep.subr.bf16.mxu0 %v4830
      %5036 = vmatpush1.bf16.msra.mxu0 %v4829
      %5037 = vmatprep.subr.bf16.mxu0 %v4827
      %5038 = vmatpush1.bf16.msra.mxu0 %v4826
      %5039 = vmatprep.subr.bf16.mxu0 %v4824
      %5040 = vmatpush1.bf16.msra.mxu0 %v4823
      %5041 = vmatprep.subr.bf16.mxu0 %v4479
      %5042 = vmatpush1.bf16.msra.mxu0 %v4478
      %5043 = vmatprep.subr.bf16.mxu0 %v4476
      %5044 = vmatpush1.bf16.msra.mxu0 %v4475
      %5045 = vmatprep.subr.bf16.mxu0 %v4473
      %5046 = vmatpush1.bf16.msra.mxu0 %v4472
      %5047 = vmatprep.subr.bf16.mxu0 %v4470
      %5048 = vmatpush1.bf16.msra.mxu0 %v4469
      %5049 = vmatprep.subr.bf16.mxu0 %v4857
      %5050 = vmatpush2.bf16.msra.mxu0 %v4856
      %5051 = vmatprep.subr.bf16.mxu0 %v4854
      %5052 = vmatpush2.bf16.msra.mxu0 %v4853
      %5053 = vmatprep.subr.bf16.mxu0 %v4851
      %5054 = vmatpush2.bf16.msra.mxu0 %v4850
      %5055 = vmatprep.subr.bf16.mxu0 %v4848
      %5056 = vmatpush2.bf16.msra.mxu0 %v4847
      %5057 = vmatprep.subr.bf16.mxu0 %v4845
      %5058 = vmatpush2.bf16.msra.mxu0 %v4844
      %5059 = vmatprep.subr.bf16.mxu0 %v4842
      %5060 = vmatpush2.bf16.msra.mxu0 %v4841
      %5061 = vmatprep.subr.bf16.mxu0 %v4839
      %5062 = vmatpush2.bf16.msra.mxu0 %v4838
      %5063 = vmatprep.subr.bf16.mxu0 %v4836
      %5064 = vmatpush2.bf16.msra.mxu0 %v4835
      %5065 = vmatprep.mubr.bf16.mxu0 %v4550
      %5066 = vmatmul.mubr.bf16.gmra.mxu0 %v4549
      %v5067 = vpop.f32.mrf.mxu0
      %v5068 = vadd.f32 %v4500, %v5067
      %v5069 = vpop.f32.mrf.mxu0
      %v5070 = vadd.f32 %v4500, %v5069
      %v5071 = vpop.f32.mrf.mxu0
      %v5072 = vadd.f32 %v4505, %v5071
      %v5073 = vpop.f32.mrf.mxu0
      %v5074 = vadd.f32 %v4505, %v5073
      %5075 = vmatprep.mubr.bf16.mxu0 %v4555
      %5076 = vmatmul.mubr.bf16.gmra.mxu0 %v4554
      %v5077 = vpop.f32.mrf.mxu0
      %v5078 = vadd.f32 %v4510, %v5077
      %v5079 = vpop.f32.mrf.mxu0
      %v5080 = vadd.f32 %v4510, %v5079
      %v5081 = vpop.f32.mrf.mxu0
      %v5082 = vadd.f32 %v4515, %v5081
      %v5083 = vpop.f32.mrf.mxu0
      %v5084 = vadd.f32 %v4515, %v5083
      %5085 = vdwg.mxu0
      %5086 = vmatprep.subr.bf16.mxu0 %v4881
      %5087 = vmatpush1.bf16.msra.mxu0 %v4880
      %5088 = vmatprep.subr.bf16.mxu0 %v4878
      %5089 = vmatpush1.bf16.msra.mxu0 %v4877
      %5090 = vmatprep.subr.bf16.mxu0 %v4875
      %5091 = vmatpush1.bf16.msra.mxu0 %v4874
      %5092 = vmatprep.subr.bf16.mxu0 %v4872
      %5093 = vmatpush1.bf16.msra.mxu0 %v4871
      %5094 = vmatprep.subr.bf16.mxu0 %v4869
      %5095 = vmatpush1.bf16.msra.mxu0 %v4868
      %5096 = vmatprep.subr.bf16.mxu0 %v4866
      %5097 = vmatpush1.bf16.msra.mxu0 %v4865
      %5098 = vmatprep.subr.bf16.mxu0 %v4863
      %5099 = vmatpush1.bf16.msra.mxu0 %v4862
      %5100 = vmatprep.subr.bf16.mxu0 %v4860
      %5101 = vmatpush1.bf16.msra.mxu0 %v4859
      %5102 = vmatprep.subr.bf16.mxu0 %v4905
      %5103 = vmatpush2.bf16.msra.mxu0 %v4904
      %5104 = vmatprep.subr.bf16.mxu0 %v4902
      %5105 = vmatpush2.bf16.msra.mxu0 %v4901
      %5106 = vmatprep.subr.bf16.mxu0 %v4899
      %5107 = vmatpush2.bf16.msra.mxu0 %v4898
      %5108 = vmatprep.subr.bf16.mxu0 %v4896
      %5109 = vmatpush2.bf16.msra.mxu0 %v4895
      %5110 = vmatprep.subr.bf16.mxu0 %v4893
      %5111 = vmatpush2.bf16.msra.mxu0 %v4892
      %5112 = vmatprep.subr.bf16.mxu0 %v4890
      %5113 = vmatpush2.bf16.msra.mxu0 %v4889
      %5114 = vmatprep.subr.bf16.mxu0 %v4887
      %5115 = vmatpush2.bf16.msra.mxu0 %v4886
      %5116 = vmatprep.subr.bf16.mxu0 %v4884
      %5117 = vmatpush2.bf16.msra.mxu0 %v4883
      %5118 = vmatprep.mubr.bf16.mxu0 %v4552
      %5119 = vmatmul.mubr.bf16.gmra.mxu0 %v4551
      %v5120 = vpop.f32.mrf.mxu0
      %v5121 = vadd.f32 %v5068, %v5120
      %v5122 = vpop.f32.mrf.mxu0
      %v5123 = vadd.f32 %v5070, %v5122
      %v5124 = vpop.f32.mrf.mxu0
      %v5125 = vadd.f32 %v5072, %v5124
      %v5126 = vpop.f32.mrf.mxu0
      %v5127 = vadd.f32 %v5074, %v5126
      %5128 = vmatprep.mubr.bf16.mxu0 %v4557
      %5129 = vmatmul.mubr.bf16.gmra.mxu0 %v4556
      %v5130 = vpop.f32.mrf.mxu0
      %v5131 = vadd.f32 %v5078, %v5130
      %v5132 = vpop.f32.mrf.mxu0
      %v5133 = vadd.f32 %v5080, %v5132
      %v5134 = vpop.f32.mrf.mxu0
      %v5135 = vadd.f32 %v5082, %v5134
      %v5136 = vpop.f32.mrf.mxu0
      %v5137 = vadd.f32 %v5084, %v5136
      %5138 = vdwg.mxu0
      %5139 = vmatprep.subr.bf16.mxu0 0
      %5140 = vmatpush1.bf16.msra.mxu0 0
      %5141 = vmatprep.subr.bf16.mxu0 0
      %5142 = vmatpush1.bf16.msra.mxu0 0
      %5143 = vmatprep.subr.bf16.mxu0 0
      %5144 = vmatpush1.bf16.msra.mxu0 0
      %5145 = vmatprep.subr.bf16.mxu0 0
      %5146 = vmatpush1.bf16.msra.mxu0 0
      %5147 = vmatprep.subr.bf16.mxu0 %v4917
      %5148 = vmatpush1.bf16.msra.mxu0 %v4916
      %5149 = vmatprep.subr.bf16.mxu0 %v4914
      %5150 = vmatpush1.bf16.msra.mxu0 %v4913
      %5151 = vmatprep.subr.bf16.mxu0 %v4911
      %5152 = vmatpush1.bf16.msra.mxu0 %v4910
      %5153 = vmatprep.subr.bf16.mxu0 %v4908
      %5154 = vmatpush1.bf16.msra.mxu0 %v4907
      %5155 = vmatprep.subr.bf16.mxu0 0
      %5156 = vmatpush2.bf16.msra.mxu0 0
      %5157 = vmatprep.subr.bf16.mxu0 0
      %5158 = vmatpush2.bf16.msra.mxu0 0
      %5159 = vmatprep.subr.bf16.mxu0 0
      %5160 = vmatpush2.bf16.msra.mxu0 0
      %5161 = vmatprep.subr.bf16.mxu0 0
      %5162 = vmatpush2.bf16.msra.mxu0 0
      %5163 = vmatprep.subr.bf16.mxu0 0
      %5164 = vmatpush2.bf16.msra.mxu0 0
      %5165 = vmatprep.subr.bf16.mxu0 0
      %5166 = vmatpush2.bf16.msra.mxu0 0
      %5167 = vmatprep.subr.bf16.mxu0 0
      %5168 = vmatpush2.bf16.msra.mxu0 0
      %5169 = vmatprep.subr.bf16.mxu0 0
      %5170 = vmatpush2.bf16.msra.mxu0 0
      %5171 = vmatprep.mubr.bf16.mxu0 0
      %5172 = vmatmul.mubr.bf16.gmra.mxu0 %v5028
      %v5173 = vpop.f32.mrf.mxu0
      %v5174 = vadd.f32 %v5121, %v5173
      %v5175 = vpop.f32.mrf.mxu0
      %v5176 = vadd.f32 %v5123, %v5175
      %v5177 = vpop.f32.mrf.mxu0
      %v5178 = vadd.f32 %v5125, %v5177
      %v5179 = vpop.f32.mrf.mxu0
      %v5180 = vadd.f32 %v5127, %v5179
      %5181 = vmatprep.mubr.bf16.mxu0 0
      %5182 = vmatmul.mubr.bf16.gmra.mxu0 %v5031
      %v5183 = vpop.f32.mrf.mxu0
      %v5184 = vadd.f32 %v5131, %v5183
      %v5185 = vpop.f32.mrf.mxu0
      %v5186 = vadd.f32 %v5133, %v5185
      %v5187 = vpop.f32.mrf.mxu0
      %v5188 = vadd.f32 %v5135, %v5187
      %v5189 = vpop.f32.mrf.mxu0
      %v5190 = vadd.f32 %v5137, %v5189
      %5191 = vdwg.mxu0
      %5192 = vmatprep.subr.bf16.mxu0 0
      %5193 = vmatpush1.bf16.msra.mxu0 %v4834
      %5194 = vmatprep.subr.bf16.mxu0 0
      %5195 = vmatpush1.bf16.msra.mxu0 %v4831
      %5196 = vmatprep.subr.bf16.mxu0 0
      %5197 = vmatpush1.bf16.msra.mxu0 %v4828
      %5198 = vmatprep.subr.bf16.mxu0 0
      %5199 = vmatpush1.bf16.msra.mxu0 %v4825
      %5200 = vmatprep.subr.bf16.mxu0 0
      %5201 = vmatpush1.bf16.msra.mxu0 %v4480
      %5202 = vmatprep.subr.bf16.mxu0 0
      %5203 = vmatpush1.bf16.msra.mxu0 %v4477
      %5204 = vmatprep.subr.bf16.mxu0 0
      %5205 = vmatpush1.bf16.msra.mxu0 %v4474
      %5206 = vmatprep.subr.bf16.mxu0 0
      %5207 = vmatpush1.bf16.msra.mxu0 %v4471
      %5208 = vmatprep.subr.bf16.mxu0 0
      %5209 = vmatpush2.bf16.msra.mxu0 %v4858
      %5210 = vmatprep.subr.bf16.mxu0 0
      %5211 = vmatpush2.bf16.msra.mxu0 %v4855
      %5212 = vmatprep.subr.bf16.mxu0 0
      %5213 = vmatpush2.bf16.msra.mxu0 %v4852
      %5214 = vmatprep.subr.bf16.mxu0 0
      %5215 = vmatpush2.bf16.msra.mxu0 %v4849
      %5216 = vmatprep.subr.bf16.mxu0 0
      %5217 = vmatpush2.bf16.msra.mxu0 %v4846
      %5218 = vmatprep.subr.bf16.mxu0 0
      %5219 = vmatpush2.bf16.msra.mxu0 %v4843
      %5220 = vmatprep.subr.bf16.mxu0 0
      %5221 = vmatpush2.bf16.msra.mxu0 %v4840
      %5222 = vmatprep.subr.bf16.mxu0 0
      %5223 = vmatpush2.bf16.msra.mxu0 %v4837
      %5224 = vmatprep.mubr.bf16.mxu0 %v4550
      %5225 = vmatmul.mubr.bf16.gmra.mxu0 %v4549
      %v5226 = vpop.f32.mrf.mxu0
      %v5227 = vadd.f32 %v4500, %v5226
      %v5228 = vpop.f32.mrf.mxu0
      %v5229 = vpop.f32.mrf.mxu0
      %v5230 = vadd.f32 %v4505, %v5229
      %v5231 = vpop.f32.mrf.mxu0
      %5232 = vmatprep.mubr.bf16.mxu0 %v4555
      %5233 = vmatmul.mubr.bf16.gmra.mxu0 %v4554
      %v5234 = vpop.f32.mrf.mxu0
      %v5235 = vadd.f32 %v4510, %v5234
      %v5236 = vpop.f32.mrf.mxu0
      %v5237 = vpop.f32.mrf.mxu0
      %v5238 = vadd.f32 %v4515, %v5237
      %v5239 = vpop.f32.mrf.mxu0
      %5240 = vdwg.mxu0
      %5241 = vmatprep.subr.bf16.mxu0 0
      %5242 = vmatpush1.bf16.msra.mxu0 %v4882
      %5243 = vmatprep.subr.bf16.mxu0 0
      %5244 = vmatpush1.bf16.msra.mxu0 %v4879
      %5245 = vmatprep.subr.bf16.mxu0 0
      %5246 = vmatpush1.bf16.msra.mxu0 %v4876
      %5247 = vmatprep.subr.bf16.mxu0 0
      %5248 = vmatpush1.bf16.msra.mxu0 %v4873
      %5249 = vmatprep.subr.bf16.mxu0 0
      %5250 = vmatpush1.bf16.msra.mxu0 %v4870
      %5251 = vmatprep.subr.bf16.mxu0 0
      %5252 = vmatpush1.bf16.msra.mxu0 %v4867
      %5253 = vmatprep.subr.bf16.mxu0 0
      %5254 = vmatpush1.bf16.msra.mxu0 %v4864
      %5255 = vmatprep.subr.bf16.mxu0 0
      %5256 = vmatpush1.bf16.msra.mxu0 %v4861
      %5257 = vmatprep.subr.bf16.mxu0 0
      %5258 = vmatpush2.bf16.msra.mxu0 %v4906
      %5259 = vmatprep.subr.bf16.mxu0 0
      %5260 = vmatpush2.bf16.msra.mxu0 %v4903
      %5261 = vmatprep.subr.bf16.mxu0 0
      %5262 = vmatpush2.bf16.msra.mxu0 %v4900
      %5263 = vmatprep.subr.bf16.mxu0 0
      %5264 = vmatpush2.bf16.msra.mxu0 %v4897
      %5265 = vmatprep.subr.bf16.mxu0 0
      %5266 = vmatpush2.bf16.msra.mxu0 %v4894
      %5267 = vmatprep.subr.bf16.mxu0 0
      %5268 = vmatpush2.bf16.msra.mxu0 %v4891
      %5269 = vmatprep.subr.bf16.mxu0 0
      %5270 = vmatpush2.bf16.msra.mxu0 %v4888
      %5271 = vmatprep.subr.bf16.mxu0 0
      %5272 = vmatpush2.bf16.msra.mxu0 %v4885
      %5273 = vmatprep.mubr.bf16.mxu0 %v4552
      %5274 = vmatmul.mubr.bf16.gmra.mxu0 %v4551
      %v5275 = vpop.f32.mrf.mxu0
      %v5276 = vadd.f32 %v5227, %v5275
      %v5277 = vpop.f32.mrf.mxu0
      %v5278 = vpop.f32.mrf.mxu0
      %v5279 = vadd.f32 %v5230, %v5278
      %v5280 = vpop.f32.mrf.mxu0
      %5281 = vmatprep.mubr.bf16.mxu0 %v4557
      %5282 = vmatmul.mubr.bf16.gmra.mxu0 %v4556
      %v5283 = vpop.f32.mrf.mxu0
      %v5284 = vadd.f32 %v5235, %v5283
      %v5285 = vpop.f32.mrf.mxu0
      %v5286 = vpop.f32.mrf.mxu0
      %v5287 = vadd.f32 %v5238, %v5286
      %v5288 = vpop.f32.mrf.mxu0
      %5289 = vdwg.mxu0
      %5290 = vmatprep.subr.bf16.mxu0 0
      %5291 = vmatpush1.bf16.msra.mxu0 0
      %5292 = vmatprep.subr.bf16.mxu0 0
      %5293 = vmatpush1.bf16.msra.mxu0 0
      %5294 = vmatprep.subr.bf16.mxu0 0
      %5295 = vmatpush1.bf16.msra.mxu0 0
      %5296 = vmatprep.subr.bf16.mxu0 0
      %5297 = vmatpush1.bf16.msra.mxu0 0
      %5298 = vmatprep.subr.bf16.mxu0 0
      %5299 = vmatpush1.bf16.msra.mxu0 %v4918
      %5300 = vmatprep.subr.bf16.mxu0 0
      %5301 = vmatpush1.bf16.msra.mxu0 %v4915
      %5302 = vmatprep.subr.bf16.mxu0 0
      %5303 = vmatpush1.bf16.msra.mxu0 %v4912
      %5304 = vmatprep.subr.bf16.mxu0 0
      %5305 = vmatpush1.bf16.msra.mxu0 %v4909
      %5306 = vmatprep.subr.bf16.mxu0 0
      %5307 = vmatpush2.bf16.msra.mxu0 0
      %5308 = vmatprep.subr.bf16.mxu0 0
      %5309 = vmatpush2.bf16.msra.mxu0 0
      %5310 = vmatprep.subr.bf16.mxu0 0
      %5311 = vmatpush2.bf16.msra.mxu0 0
      %5312 = vmatprep.subr.bf16.mxu0 0
      %5313 = vmatpush2.bf16.msra.mxu0 0
      %5314 = vmatprep.subr.bf16.mxu0 0
      %5315 = vmatpush2.bf16.msra.mxu0 0
      %5316 = vmatprep.subr.bf16.mxu0 0
      %5317 = vmatpush2.bf16.msra.mxu0 0
      %5318 = vmatprep.subr.bf16.mxu0 0
      %5319 = vmatpush2.bf16.msra.mxu0 0
      %5320 = vmatprep.subr.bf16.mxu0 0
      %5321 = vmatpush2.bf16.msra.mxu0 0
      %5322 = vmatprep.mubr.bf16.mxu0 0
      %5323 = vmatmul.mubr.bf16.gmra.mxu0 %v5028
      %v5324 = vpop.f32.mrf.mxu0
      %v5325 = vadd.f32 %v5276, %v5324
      %v5326 = vpop.f32.mrf.mxu0
      %v5327 = vpop.f32.mrf.mxu0
      %v5328 = vadd.f32 %v5279, %v5327
      %v5329 = vpop.f32.mrf.mxu0
      %5330 = vmatprep.mubr.bf16.mxu0 0
      %5331 = vmatmul.mubr.bf16.gmra.mxu0 %v5031
      %v5332 = vpop.f32.mrf.mxu0
      %v5333 = vadd.f32 %v5284, %v5332
      %v5334 = vpop.f32.mrf.mxu0
      %v5335 = vpop.f32.mrf.mxu0
      %v5336 = vadd.f32 %v5287, %v5335
      %v5337 = vpop.f32.mrf.mxu0
      %5338 = vdwg.mxu0
      %v5339 = vmax.f32 %v5174, 0.0
      %v5340 = vmax.f32 %v5176, 0.0
      %v5341 = vmax.f32 %v5325, 0.0
      %v5342 = vmax.f32 %v5178, 0.0
      %v5343 = vmax.f32 %v5180, 0.0
      %v5344 = vmax.f32 %v5328, 0.0
      %v5345 = vmax.f32 %v5184, 0.0
      %v5346 = vmax.f32 %v5186, 0.0
      %v5347 = vmax.f32 %v5333, 0.0
      %v5348 = vmax.f32 %v5188, 0.0
      %v5349 = vmax.f32 %v5190, 0.0
      %v5350 = vmax.f32 %v5336, 0.0
      %5363 = vrot.lane.b32.xlu0 %v5339, 69
      %v5364 = vpop.permute.xlu0 %5363
      %5365 = vrot.lane.b32.xlu0 %v5340, 69
      %v5366 = vpop.permute.xlu0 %5365
      %5367 = vrot.lane.b32.xlu0 %v5341, 69
      %v5368 = vpop.permute.xlu0 %5367
      %5369 = vrot.lane.b32.xlu0 %v5342, 69
      %v5370 = vpop.permute.xlu0 %5369
      %5371 = vrot.lane.b32.xlu0 %v5343, 69
      %v5372 = vpop.permute.xlu0 %5371
      %5373 = vrot.lane.b32.xlu0 %v5344, 69
      %v5374 = vpop.permute.xlu0 %5373
      %5375 = vrot.lane.b32.xlu0 %v5345, 69
      %v5376 = vpop.permute.xlu0 %5375
      %5377 = vrot.lane.b32.xlu0 %v5346, 69
      %v5378 = vpop.permute.xlu0 %5377
      %5379 = vrot.lane.b32.xlu0 %v5347, 69
      %v5380 = vpop.permute.xlu0 %5379
      %5381 = vrot.lane.b32.xlu0 %v5348, 69
      %v5382 = vpop.permute.xlu0 %5381
      %5383 = vrot.lane.b32.xlu0 %v5349, 69
      %v5384 = vpop.permute.xlu0 %5383
      %5385 = vrot.lane.b32.xlu0 %v5350, 69
      %v5386 = vpop.permute.xlu0 %5385
      %v5387 = vsel %vm849, %v5364, %v5366
      %v5388 = vsel %vm849, %v5366, %v5368
      %v5389 = vsel %vm849, %v5370, %v5372
      %v5390 = vsel %vm849, %v5372, %v5374
      %v5391 = vsel %vm849, %v5376, %v5378
      %v5392 = vsel %vm849, %v5378, %v5380
      %v5393 = vsel %vm849, %v5382, %v5384
      %v5394 = vsel %vm849, %v5384, %v5386
      %vm5411 = vcmask 1048104
      %5412 = vst.msk [vmem:[%s460] sm:$0xff] %vm5411, %v5364
      %5413 = vst [vmem:[%s460 + $0x8] sm:$0xff] %v5387
      %5414 = vst [vmem:[%s460 + $0x10] sm:$0xff] %v5388
      %5415 = vst.msk [vmem:[%s460 + $0x18] sm:$0xff] %vm859, %v5368
      %5416 = vst.msk [vmem:[%s460 + $0x20] sm:$0xff] %vm5411, %v5370
      %5417 = vst [vmem:[%s460 + $0x28] sm:$0xff] %v5389
      %5418 = vst [vmem:[%s460 + $0x30] sm:$0xff] %v5390
      %5419 = vst.msk [vmem:[%s460 + $0x38] sm:$0xff] %vm859, %v5374
      %5420 = vst.msk [vmem:[%s460 + $0x40] sm:$0xff] %vm5411, %v5376
      %5421 = vst [vmem:[%s460 + $0x48] sm:$0xff] %v5391
      %5422 = vst [vmem:[%s460 + $0x50] sm:$0xff] %v5392
      %5423 = vst.msk [vmem:[%s460 + $0x58] sm:$0xff] %vm859, %v5380
      %vm5424 = vcmask 1046056
      %5425 = vst.msk [vmem:[%s460 + $0x60] sm:$0x3f] %vm5424, %v5382
      %5426 = vst [vmem:[%s460 + $0x68] sm:$0x3f] %v5393
      %5427 = vst [vmem:[%s460 + $0x70] sm:$0x3f] %v5394
      %vm5428 = vcmask 300032
      %5429 = vst.msk [vmem:[%s460 + $0x78] sm:$0x3f] %vm5428, %v5386
      %v5430 = vrot.slane %v465, 2
      %v5431 = vrot.slane %v466, 2
      %v5432 = vrot.slane %v467, 2
      %v5433 = vrot.slane %v468, 2
      %vm5438 = vcmask 1048110
      %5439 = vst.msk [vmem:[%s460 + $0x60] sm:$0xc0] %vm5438, %v5430
      %5440 = vst [vmem:[%s460 + $0x68] sm:$0xc0] %v5431
      %5441 = vst [vmem:[%s460 + $0x70] sm:$0xc0] %v5432
      %vm5442 = vcmask 302086
      %5443 = vst.msk [vmem:[%s460 + $0x78] sm:$0xc0] %vm5442, %v5433
      %p5444 = scmp.lt.s32.totalorder %s24, 1
      %s5445 = scalar_select %p5444, %s24, 1
      %s5446 = smul.addr %s5445, 16
      %s5447 = smul.addr %s5446, 8
      %s5448 = scalar_lea.vmem %s13, %s5447
      // Predicated region
      $region73: #{basic_motion_encoder.1} parent=71 // pred_check
        %p5449 = pneg %p325
      $region74: #{basic_motion_encoder.1} parent=71 // pred_check_branch
        %5451 = sbr.rel (%p5449) target = $region76
      $region75: #{basic_motion_encoder.1} parent=71 // pred_region
        _
      $region76: #{basic_motion_encoder.1} parent=71 // pred_fallthru
        _
    $region72: #{basic_motion_encoder.1} parent=5 // pred_fallthru
      _
    %p5452 = scmp.le.s32.totalorder 2, %s19
    // Predicated region
    $region77: #{basic_motion_encoder.1} parent=5 // pred_check
      %p5453 = pneg %p5452
    $region78: #{basic_motion_encoder.1} parent=5 // pred_check_branch
      %5455 = sbr.rel (%p5453) target = $region80
    $region79: #{basic_motion_encoder.1} parent=5 // pred_region
      %s5456 = ssub.s32 %s19, 2
      // Predicated region
      $region81: #{basic_motion_encoder.1} parent=79 // pred_check
        %p5457 = pneg %p331
      $region82: #{basic_motion_encoder.1} parent=79 // pred_check_branch
        %5459 = sbr.rel (%p5457) target = $region84
      $region83: #{basic_motion_encoder.1} parent=79 // pred_region
        %p5460 = scmp.lt.s32.totalorder %s25, 1
        %s5461 = scalar_select %p5460, %s25, 1
        %s5462 = smul.addr %s5461, 16
        %s5463 = smul.addr %s5462, 8
        %s5464 = scalar_lea.vmem %s13, %s5463
      $region84: #{basic_motion_encoder.1} parent=79 // pred_fallthru
        _
    $region80: #{basic_motion_encoder.1} parent=5 // pred_fallthru
      _
  $region6: #{basic_motion_encoder.1} parent=0 // loop_footer
    %s23 = sadd.s32 1, %s19
  $region7: #{basic_motion_encoder.1} parent=0 // loop_footer_branch
    %18 = sbr.rel target = $region3
  $region8: #{basic_motion_encoder.1} parent=0 // loop_exit
    _

</llo_original>
